<compile_context>
chip_gen: v7x
topology: tpu7x:2x2x1
jax: 0.10.0
libtpu: 0.0.40
codegen_flags: <defaults>
</compile_context>

<pallas_src>
import functools

import jax
import jax.numpy as jnp
from jax import lax
from jax.experimental import pallas as pl
from jax.experimental.pallas import tpu as pltpu


# Conservative scoped-VMEM limit: fits v7x (64 MiB/TC) with headroom, far below
# v5e/v6e's 128 MiB.
_VMEM_LIMIT = 40 * 1024 * 1024


def _pick_tile(dim, prefs):
    """Largest preferred tile that divides `dim`, else the full dim."""
    for p in prefs:
        if dim % p == 0:
            return p
    return dim


# ---------------------------------------------------------------------------
# kernel 1: fused tiled Linear (+ optional train-mode BatchNorm + ReLU)
# ---------------------------------------------------------------------------
def _linear_kernel(x_ref, w_ref, *refs, bn, relu, with_mean):
    # refs = (*param_refs, o_ref[, mu_ref], acc_ref)
    #   param_refs = (b_ref,) if not bn else (g_ref, beta_ref)
    n_params = 2 if bn else 1
    params = refs[:n_params]
    o_ref = refs[n_params]
    mu_ref = refs[n_params + 1] if with_mean else None
    acc_ref = refs[-1]

    k = pl.program_id(1)

    @pl.when(k == 0)
    def _():
        acc_ref[...] = jnp.zeros_like(acc_ref)

    # bf16 operands, f32 accumulation on the MXU.
    acc_ref[...] += jnp.dot(x_ref[...], w_ref[...],
                            preferred_element_type=jnp.float32)

    @pl.when(k == pl.num_programs(1) - 1)
    def _():
        y = acc_ref[...]
        if bn:
            g_ref, beta_ref = params
            # Train-mode BatchNorm1d (biased variance, eps=1e-5) over the full
            # resident batch.  The Linear bias is skipped: BN's mean
            # subtraction cancels it exactly.
            mu = jnp.mean(y, axis=0, keepdims=True)
            var = jnp.mean((y - mu) ** 2, axis=0, keepdims=True)
            y = (y - mu) * lax.rsqrt(var + 1e-5)
            y = y * g_ref[...] + beta_ref[...]
        else:
            (b_ref,) = params
            y = y + b_ref[...]
        if relu:
            y = jnp.maximum(y, 0.0)
        z = y.astype(o_ref.dtype)
        o_ref[...] = z
        if with_mean:
            # Per-feature batch mean of the stored activations (f32), consumed
            # by the loss kernel's rank-1 centering correction.
            mu_ref[...] = jnp.mean(z.astype(jnp.float32), axis=0, keepdims=True)


def linear(x, w, params, *, bn, relu, with_mean=False, out_dtype=jnp.bfloat16):
    """y = act(BN?(x @ w [+ b]));  grid = (N/tn, K/tk), full batch resident."""
    B, K = x.shape
    Kw, N = w.shape
    assert K == Kw
    tk = _pick_tile(K, (256, 128))
    tn = _pick_tile(N, (256, 128))
    num_n = N // tn
    num_k = K // tk

    in_specs = [
        pl.BlockSpec((B, tk), lambda j, k: (0, k)),     # activations
        pl.BlockSpec((tk, tn), lambda j, k: (k, j)),    # weights
    ]
    in_specs += [pl.BlockSpec((1, tn), lambda j, k: (0, j)) for _ in params]

    out_shape = [jax.ShapeDtypeStruct((B, N), out_dtype)]
    out_specs = [pl.BlockSpec((B, tn), lambda j, k: (0, j))]
    if with_mean:
        out_shape.append(jax.ShapeDtypeStruct((1, N), jnp.float32))
        out_specs.append(pl.BlockSpec((1, tn), lambda j, k: (0, j)))

    kernel = functools.partial(_linear_kernel, bn=bn, relu=relu,
                               with_mean=with_mean)

    itemsize = x.dtype.itemsize
    flops = 2 * B * K * N
    bytes_accessed = (num_n * B * K * itemsize + K * N * w.dtype.itemsize
                      + B * N * jnp.dtype(out_dtype).itemsize)

    outs = pl.pallas_call(
        kernel,
        grid=(num_n, num_k),
        in_specs=in_specs,
        out_specs=out_specs,
        out_shape=out_shape,
        scratch_shapes=[pltpu.VMEM((B, tn), jnp.float32)],
        compiler_params=pltpu.CompilerParams(
            dimension_semantics=("parallel", "arbitrary"),
            vmem_limit_bytes=_VMEM_LIMIT,
        ),
        cost_estimate=pl.CostEstimate(flops=flops, transcendentals=0,
                                      bytes_accessed=bytes_accessed),
    )(x, w, *params)
    if with_mean:
        return outs[0], outs[1]
    return outs[0]


# ---------------------------------------------------------------------------
# kernel 2: the SSLEY loss (tiled grams, rank-1 centering, trace identities)
# ---------------------------------------------------------------------------
def _ssley_loss_kernel(xiT_ref, xj_ref, yiT_ref, yj_ref,
                       mxc_ref, myc_ref, mxr_ref, myr_ref,
                       o_ref, v_acc, loss_acc, *, n):
    j = pl.program_id(1)
    k = pl.program_id(2)
    nj = pl.num_programs(1)
    nk = pl.num_programs(2)
    inv = 1.0 / (n - 1.0)

    @pl.when((j == 0) & (k == 0))
    def _():
        loss_acc[...] = jnp.zeros_like(loss_acc)

    @pl.when(k == 0)
    def _():
        v_acc[...] = jnp.zeros_like(v_acc)

    xiT = xiT_ref[...]     # [tm, tb] bf16 (pre-transposed "i"-side operand)
    xj = xj_ref[...]       # [tb, tn] bf16
    yiT = yiT_ref[...]
    yj = yj_ref[...]

    # Raw (uncentered) grams, contracted over the batch tile on the MXU.
    v_acc[...] += (jnp.dot(xiT, xj, preferred_element_type=jnp.float32)
                   + jnp.dot(yiT, yj, preferred_element_type=jnp.float32))

    # -2*trace(C) = -4/(n-1) * sum((x-mu_x)*(y-mu_y)); raw part, once per (i,k).
    @pl.when(j == 0)
    def _():
        loss_acc[...] += (-4.0 * inv) * jnp.sum(
            xiT.astype(jnp.float32) * yiT.astype(jnp.float32), keepdims=True)

    @pl.when(k == nk - 1)
    def _():
        mxc = mxc_ref[...]   # [tm, 1] f32 (mu_x, "i" block, column layout)
        myc = myc_ref[...]
        mxr = mxr_ref[...]   # [1, tn] f32 (mu_x, "j" block, row layout)
        myr = myr_ref[...]
        # Rank-1 centering correction: (x-mu)^T (x-mu) = x^T x - n * mu mu^T.
        outer = mxc * mxr + myc * myr
        v_tile = (v_acc[...] - n * outer) * inv
        # trace(V @ V) = ||V||_F^2 since V is symmetric.
        loss_acc[...] += jnp.sum(v_tile * v_tile, keepdims=True)

    @pl.when((j == 0) & (k == nk - 1))
    def _():
        # Centering correction of the cross term: sum(x*y) - n*sum(mu_x*mu_y).
        loss_acc[...] += (4.0 * inv * n) * jnp.sum(mxc_ref[...] * myc_ref[...],
                                                   keepdims=True)

    @pl.when((j == nj - 1) & (k == nk - 1))
    def _():
        # Lane-dense (8,128) output block per "i"; one representative per block
        # is summed on the host side.
        o_ref[...] = jnp.broadcast_to(loss_acc[...], o_ref.shape)


def ssley_loss(zx, zy, mu_x, mu_y, batch_size):
    B, D = zx.shape
    assert batch_size >= 2, "SSLEY loss divides by (batch_size - 1)"

    tm = _pick_tile(D, (256, 128))
    tn = tm
    # Batch tile: the transposed operands put the batch on the lane axis, so it
    # must be 128-aligned or the full batch.
    tb = _pick_tile(B, (256, 128))
    ni = D // tm
    nj = D // tn
    nk = B // tb

    # Pre-transposed copies so every in-kernel matmul is the canonical
    # (tm, tb) @ (tb, tn) form (no per-step operand transposes inside Mosaic).
    zxT = zx.T
    zyT = zy.T
    mu_x = mu_x.astype(jnp.float32)
    mu_y = mu_y.astype(jnp.float32)
    mu_x_col = mu_x.reshape(D, 1)
    mu_y_col = mu_y.reshape(D, 1)
    mu_x_row = mu_x.reshape(1, D)
    mu_y_row = mu_y.reshape(1, D)

    kernel = functools.partial(_ssley_loss_kernel, n=float(batch_size))

    itemsize = zx.dtype.itemsize
    flops = 4 * B * D * D                       # two batch-contracted grams
    bytes_accessed = 2 * (ni + nj) * B * D * itemsize

    out = pl.pallas_call(
        kernel,
        grid=(ni, nj, nk),
        in_specs=[
            pl.BlockSpec((tm, tb), lambda i, j, k: (i, k)),   # x^T, "i" block
            pl.BlockSpec((tb, tn), lambda i, j, k: (k, j)),   # x,   "j" block
            pl.BlockSpec((tm, tb), lambda i, j, k: (i, k)),   # y^T, "i" block
            pl.BlockSpec((tb, tn), lambda i, j, k: (k, j)),   # y,   "j" block
            pl.BlockSpec((tm, 1), lambda i, j, k: (i, 0)),    # mu_x col
            pl.BlockSpec((tm, 1), lambda i, j, k: (i, 0)),    # mu_y col
            pl.BlockSpec((1, tn), lambda i, j, k: (0, j)),    # mu_x row
            pl.BlockSpec((1, tn), lambda i, j, k: (0, j)),    # mu_y row
        ],
        out_specs=pl.BlockSpec((8, 128), lambda i, j, k: (i, 0)),
        out_shape=jax.ShapeDtypeStruct((ni * 8, 128), jnp.float32),
        scratch_shapes=[
            pltpu.VMEM((tm, tn), jnp.float32),   # V-tile accumulator
            pltpu.VMEM((1, 1), jnp.float32),     # per-i loss accumulator
        ],
        compiler_params=pltpu.CompilerParams(
            dimension_semantics=("parallel", "arbitrary", "arbitrary"),
            vmem_limit_bytes=_VMEM_LIMIT,
        ),
        cost_estimate=pl.CostEstimate(flops=flops, transcendentals=0,
                                      bytes_accessed=bytes_accessed),
    )(zxT, zx, zyT, zy, mu_x_col, mu_y_col, mu_x_row, mu_y_row)

    # Each (8,128) row block carries one per-i partial (broadcast); pick one
    # representative per block and sum.
    return jnp.sum(out[0::8, 0])


# ---------------------------------------------------------------------------
# parameters (deterministic, in-script) and full forward
# ---------------------------------------------------------------------------
def init_params(key, in_ch, embedding, mlp_dims):
    params = {}
    k_embed, key = jax.random.split(key)
    params["embed_w"] = (jax.random.normal(k_embed, (in_ch, embedding), jnp.float32)
                         * (1.0 / jnp.sqrt(in_ch))).astype(jnp.bfloat16)
    params["embed_b"] = jnp.zeros((1, embedding), jnp.float32)

    proj = []
    dims = [embedding] + list(mlp_dims)
    n_layers = len(mlp_dims)
    for i in range(n_layers):
        k_w, key = jax.random.split(key)
        din, dout = dims[i], dims[i + 1]
        layer = {"w": (jax.random.normal(k_w, (din, dout), jnp.float32)
                       * (1.0 / jnp.sqrt(din))).astype(jnp.bfloat16)}
        if i < n_layers - 1:
            layer["g"] = jnp.ones((1, dout), jnp.float32)
            layer["beta"] = jnp.zeros((1, dout), jnp.float32)
        else:
            layer["b"] = jnp.zeros((1, dout), jnp.float32)
        proj.append(layer)
    params["proj"] = proj
    return params


def encode(params, img):
    # TODO(synk): the ResNet backbone (args.arch) is not defined in the
    # reference snippet; stand-in = global average pool (tiny mem-bound op,
    # left to plain XLA per perf review) + a Pallas linear embedding.
    feat = jnp.mean(img, axis=(2, 3)).astype(jnp.bfloat16)            # [B, C]
    h = linear(feat, params["embed_w"], (params["embed_b"],),
               bn=False, relu=False)                                   # [B, E]
    n_layers = len(params["proj"])
    mu = None
    for i, layer in enumerate(params["proj"]):
        if i < n_layers - 1:
            h = linear(h, layer["w"], (layer["g"], layer["beta"]),
                       bn=True, relu=True)
        else:
            # Last projector layer also emits the per-feature batch mean used
            # by the loss kernel's centering correction.
            h, mu = linear(h, layer["w"], (layer["b"],),
                           bn=False, relu=False, with_mean=True)
    return h, mu


def ssley_forward(params, x_img, y_img, batch_size):
    zx, mu_x = encode(params, x_img)
    zy, mu_y = encode(params, y_img)
    # TODO(synk): FullGatherLayer is a distributed all-gather; identity on a
    # single device, so the concat is a no-op here.
    return ssley_loss(zx, zy, mu_x, mu_y, batch_size)


def _reference_check(params, x_img, y_img, batch_size):
    """Plain-XLA SSLEY loss on the same Pallas-produced projector features."""
    zx, _ = encode(params, x_img)
    zy, _ = encode(params, y_img)
    xf = zx.astype(jnp.float32)
    yf = zy.astype(jnp.float32)
    xc = xf - jnp.mean(xf, axis=0)
    yc = yf - jnp.mean(yf, axis=0)
    C = 2.0 * (xc.T @ yc) / (batch_size - 1)
    V = (xc.T @ xc + yc.T @ yc) / (batch_size - 1)
    return -2.0 * jnp.trace(C) + jnp.trace(V @ V)


# ---------------------------------------------------------------------------
# main
# ---------------------------------------------------------------------------
if __name__ == "__main__":
    # args stand-in: arch -> tiny backbone, mlp="512-512-512", batch_size=16
    # (sizes chosen so every kernel exercises a real multi-block grid).
    B, C, H, W = 16, 4, 16, 16
    mlp = "512-512-512"
    mlp_dims = [int(d) for d in mlp.split("-")]
    embedding = 512
    batch_size = B

    key = jax.random.PRNGKey(0)
    k_params, k_x, k_y = jax.random.split(key, 3)

    params = init_params(k_params, C, embedding, mlp_dims)
    x = jax.random.normal(k_x, (B, C, H, W), jnp.float32)
    y = jax.random.normal(k_y, (B, C, H, W), jnp.float32)

    fwd = jax.jit(functools.partial(ssley_forward, batch_size=batch_size))
    loss = jax.block_until_ready(fwd(params, x, y))

    # Numerical self-check of the fused loss math (trace identities + rank-1
    # centering + tiling) against plain XLA on the same features.
    check = jax.jit(functools.partial(_reference_check, batch_size=batch_size))
    ref = jax.block_until_ready(check(params, x, y))

    assert loss.shape == ()
    assert bool(jnp.isfinite(loss))
    assert abs(float(loss) - float(ref)) <= 5e-2 * abs(float(ref)) + 1.0, \
        (float(loss), float(ref))
    print("KERNEL_OK")
</pallas_src>

<mosaic_0001>
module attributes {stable_mosaic.version = 11 : i64} {
  func.func @_linear_kernel(%arg0: i32, %arg1: i32, %arg2: memref<16x4xbf16, #tpu.memory_space<vmem>>, %arg3: memref<4x256xbf16, #tpu.memory_space<vmem>>, %arg4: memref<1x256xf32, #tpu.memory_space<vmem>>, %arg5: memref<16x256xbf16, #tpu.memory_space<vmem>>, %arg6: memref<16x256xf32, #tpu.memory_space<vmem>>) attributes {dimension_semantics = [#tpu.dimension_semantics<parallel>, #tpu.dimension_semantics<arbitrary>], iteration_bounds = array<i64: 2, 1>, scalar_prefetch = 0 : i64, scratch_operands = 1 : i64, tpu.core_type = #tpu.core_type<tc>, window_params = [{transform_indices = @transform_0, window_bounds = array<i64: 16, 4>}, {transform_indices = @transform_1, window_bounds = array<i64: 4, 256>}, {transform_indices = @transform_2, window_bounds = array<i64: 1, 256>}, {transform_indices = @transform_3, window_bounds = array<i64: 16, 256>}]} {
    %c0_i32 = arith.constant 0 : i32
    %0 = arith.cmpi eq, %arg1, %c0_i32 : i32
    %1 = arith.extui %0 : i1 to i32
    %c0_i32_0 = arith.constant 0 : i32
    %2 = arith.cmpi ne, %1, %c0_i32_0 : i32
    scf.if %2 {
      %cst_10 = arith.constant 0.000000e+00 : f32
      %12 = vector.broadcast %cst_10 : f32 to vector<16x256xf32>
      %c0_11 = arith.constant 0 : index
      %c0_12 = arith.constant 0 : index
      %13 = vector.load %arg6[%c0_11, %c0_12] : memref<16x256xf32, #tpu.memory_space<vmem>>, vector<16x256xf32>
      tpu.vector_store %arg6[%c0_11, %c0_12], %12 {strides = array<i32>} : memref<16x256xf32, #tpu.memory_space<vmem>>, vector<16x256xf32>,
    } else {
    }
    %c0 = arith.constant 0 : index
    %c0_1 = arith.constant 0 : index
    %3 = vector.load %arg6[%c0, %c0_1] : memref<16x256xf32, #tpu.memory_space<vmem>>, vector<16x256xf32>
    %c0_2 = arith.constant 0 : index
    %c0_3 = arith.constant 0 : index
    %4 = vector.load %arg2[%c0_2, %c0_3] : memref<16x4xbf16, #tpu.memory_space<vmem>>, vector<16x4xbf16>
    %c0_4 = arith.constant 0 : index
    %c0_5 = arith.constant 0 : index
    %5 = vector.load %arg3[%c0_4, %c0_5] : memref<4x256xbf16, #tpu.memory_space<vmem>>, vector<4x256xbf16>
    %cst = arith.constant dense<0.000000e+00> : vector<16x256xf32>
    %6 = tpu.matmul %4, %5, %cst {dimension_numbers = #tpu.dot_dimension_numbers<[1], [0], [0], [1], [0, 0, 1, 1], [], []>} : vector<16x4xbf16>, vector<4x256xbf16>, vector<16x256xf32> -> vector<16x256xf32>
    %7 = arith.addf %3, %6 : vector<16x256xf32>
    %c0_6 = arith.constant 0 : index
    %c0_7 = arith.constant 0 : index
    %8 = vector.load %arg6[%c0_6, %c0_7] : memref<16x256xf32, #tpu.memory_space<vmem>>, vector<16x256xf32>
    tpu.vector_store %arg6[%c0_6, %c0_7], %7 {strides = array<i32>} : memref<16x256xf32, #tpu.memory_space<vmem>>, vector<16x256xf32>,
    %c0_i32_8 = arith.constant 0 : i32
    %9 = arith.cmpi eq, %arg1, %c0_i32_8 : i32
    %10 = arith.extui %9 : i1 to i32
    %c0_i32_9 = arith.constant 0 : i32
    %11 = arith.cmpi ne, %10, %c0_i32_9 : i32
    scf.if %11 {
      %c0_10 = arith.constant 0 : index
      %c0_11 = arith.constant 0 : index
      %12 = vector.load %arg6[%c0_10, %c0_11] : memref<16x256xf32, #tpu.memory_space<vmem>>, vector<16x256xf32>
      %c0_12 = arith.constant 0 : index
      %c0_13 = arith.constant 0 : index
      %13 = vector.load %arg4[%c0_12, %c0_13] : memref<1x256xf32, #tpu.memory_space<vmem>>, vector<1x256xf32>
      %14 = vector.broadcast %13 : vector<1x256xf32> to vector<16x256xf32>
      %15 = arith.addf %12, %14 : vector<16x256xf32>
      %16 = arith.truncf %15 : vector<16x256xf32> to vector<16x256xbf16>
      %c0_14 = arith.constant 0 : index
      %c0_15 = arith.constant 0 : index
      %17 = vector.load %arg5[%c0_14, %c0_15] : memref<16x256xbf16, #tpu.memory_space<vmem>>, vector<16x256xbf16>
      tpu.vector_store %arg5[%c0_14, %c0_15], %16 {strides = array<i32>} : memref<16x256xbf16, #tpu.memory_space<vmem>>, vector<16x256xbf16>,
    } else {
    }
    return
  }
  func.func @transform_0(%arg0: i32, %arg1: i32) -> (i32, i32) {
    %c0_i32 = arith.constant 0 : i32
    %c0_i32_0 = arith.constant 0 : i32
    return %c0_i32, %arg1 : i32, i32
  }
  func.func @transform_1(%arg0: i32, %arg1: i32) -> (i32, i32) {
    %c0_i32 = arith.constant 0 : i32
    return %arg1, %arg0 : i32, i32
  }
  func.func @transform_2(%arg0: i32, %arg1: i32) -> (i32, i32) {
    %c0_i32 = arith.constant 0 : i32
    %c0_i32_0 = arith.constant 0 : i32
    return %c0_i32, %arg0 : i32, i32
  }
  func.func @transform_3(%arg0: i32, %arg1: i32) -> (i32, i32) {
    %c0_i32 = arith.constant 0 : i32
    %c0_i32_0 = arith.constant 0 : i32
    return %c0_i32, %arg0 : i32, i32
  }
}

module attributes {stable_mosaic.version = 11 : i64} {
  func.func @_linear_kernel(%arg0: i32, %arg1: i32, %arg2: memref<16x256xbf16, #tpu.memory_space<vmem>>, %arg3: memref<256x256xbf16, #tpu.memory_space<vmem>>, %arg4: memref<1x256xf32, #tpu.memory_space<vmem>>, %arg5: memref<1x256xf32, #tpu.memory_space<vmem>>, %arg6: memref<16x256xbf16, #tpu.memory_space<vmem>>, %arg7: memref<16x256xf32, #tpu.memory_space<vmem>>) attributes {dimension_semantics = [#tpu.dimension_semantics<parallel>, #tpu.dimension_semantics<arbitrary>], iteration_bounds = array<i64: 2, 2>, scalar_prefetch = 0 : i64, scratch_operands = 1 : i64, tpu.core_type = #tpu.core_type<tc>, window_params = [{transform_indices = @transform_0, window_bounds = array<i64: 16, 256>}, {transform_indices = @transform_1, window_bounds = array<i64: 256, 256>}, {transform_indices = @transform_2, window_bounds = array<i64: 1, 256>}, {transform_indices = @transform_3, window_bounds = array<i64: 1, 256>}, {transform_indices = @transform_4, window_bounds = array<i64: 16, 256>}]} {
    %c0_i32 = arith.constant 0 : i32
    %0 = arith.cmpi eq, %arg1, %c0_i32 : i32
    %1 = arith.extui %0 : i1 to i32
    %c0_i32_0 = arith.constant 0 : i32
    %2 = arith.cmpi ne, %1, %c0_i32_0 : i32
    scf.if %2 {
      %cst_9 = arith.constant 0.000000e+00 : f32
      %12 = vector.broadcast %cst_9 : f32 to vector<16x256xf32>
      %c0_10 = arith.constant 0 : index
      %c0_11 = arith.constant 0 : index
      %13 = vector.load %arg7[%c0_10, %c0_11] : memref<16x256xf32, #tpu.memory_space<vmem>>, vector<16x256xf32>
      tpu.vector_store %arg7[%c0_10, %c0_11], %12 {strides = array<i32>} : memref<16x256xf32, #tpu.memory_space<vmem>>, vector<16x256xf32>,
    } else {
    }
    %c0 = arith.constant 0 : index
    %c0_1 = arith.constant 0 : index
    %3 = vector.load %arg7[%c0, %c0_1] : memref<16x256xf32, #tpu.memory_space<vmem>>, vector<16x256xf32>
    %c0_2 = arith.constant 0 : index
    %c0_3 = arith.constant 0 : index
    %4 = vector.load %arg2[%c0_2, %c0_3] : memref<16x256xbf16, #tpu.memory_space<vmem>>, vector<16x256xbf16>
    %c0_4 = arith.constant 0 : index
    %c0_5 = arith.constant 0 : index
    %5 = vector.load %arg3[%c0_4, %c0_5] : memref<256x256xbf16, #tpu.memory_space<vmem>>, vector<256x256xbf16>
    %cst = arith.constant dense<0.000000e+00> : vector<16x256xf32>
    %6 = tpu.matmul %4, %5, %cst {dimension_numbers = #tpu.dot_dimension_numbers<[1], [0], [0], [1], [0, 0, 1, 1], [], []>} : vector<16x256xbf16>, vector<256x256xbf16>, vector<16x256xf32> -> vector<16x256xf32>
    %7 = arith.addf %3, %6 : vector<16x256xf32>
    %c0_6 = arith.constant 0 : index
    %c0_7 = arith.constant 0 : index
    %8 = vector.load %arg7[%c0_6, %c0_7] : memref<16x256xf32, #tpu.memory_space<vmem>>, vector<16x256xf32>
    tpu.vector_store %arg7[%c0_6, %c0_7], %7 {strides = array<i32>} : memref<16x256xf32, #tpu.memory_space<vmem>>, vector<16x256xf32>,
    %c1_i32 = arith.constant 1 : i32
    %9 = arith.cmpi eq, %arg1, %c1_i32 : i32
    %10 = arith.extui %9 : i1 to i32
    %c0_i32_8 = arith.constant 0 : i32
    %11 = arith.cmpi ne, %10, %c0_i32_8 : i32
    scf.if %11 {
      %c0_9 = arith.constant 0 : index
      %c0_10 = arith.constant 0 : index
      %12 = vector.load %arg7[%c0_9, %c0_10] : memref<16x256xf32, #tpu.memory_space<vmem>>, vector<16x256xf32>
      %cst_11 = arith.constant dense<0.000000e+00> : vector<256xf32>
      %13 = vector.multi_reduction <add>, %12, %cst_11 [0] : vector<16x256xf32> to vector<256xf32>
      %14 = vector.shape_cast %13 : vector<256xf32> to vector<1x256xf32>
      %cst_12 = arith.constant 1.600000e+01 : f32
      %15 = vector.broadcast %cst_12 : f32 to vector<1x256xf32>
      %16 = arith.divf %14, %15 : vector<1x256xf32>
      %17 = vector.broadcast %16 : vector<1x256xf32> to vector<16x256xf32>
      %18 = arith.subf %12, %17 : vector<16x256xf32>
      %19 = arith.mulf %18, %18 : vector<16x256xf32>
      %cst_13 = arith.constant dense<0.000000e+00> : vector<256xf32>
      %20 = vector.multi_reduction <add>, %19, %cst_13 [0] : vector<16x256xf32> to vector<256xf32>
      %21 = vector.shape_cast %20 : vector<256xf32> to vector<1x256xf32>
      %cst_14 = arith.constant 1.600000e+01 : f32
      %22 = vector.broadcast %cst_14 : f32 to vector<1x256xf32>
      %23 = arith.divf %21, %22 : vector<1x256xf32>
      %24 = vector.broadcast %16 : vector<1x256xf32> to vector<16x256xf32>
      %25 = arith.subf %12, %24 : vector<16x256xf32>
      %cst_15 = arith.constant 9.99999974E-6 : f32
      %26 = vector.broadcast %cst_15 : f32 to vector<1x256xf32>
      %27 = arith.addf %23, %26 : vector<1x256xf32>
      %28 = math.rsqrt %27 : vector<1x256xf32>
      %29 = vector.broadcast %28 : vector<1x256xf32> to vector<16x256xf32>
      %30 = arith.mulf %25, %29 : vector<16x256xf32>
      %c0_16 = arith.constant 0 : index
      %c0_17 = arith.constant 0 : index
      %31 = vector.load %arg4[%c0_16, %c0_17] : memref<1x256xf32, #tpu.memory_space<vmem>>, vector<1x256xf32>
      %32 = vector.broadcast %31 : vector<1x256xf32> to vector<16x256xf32>
      %33 = arith.mulf %30, %32 : vector<16x256xf32>
      %c0_18 = arith.constant 0 : index
      %c0_19 = arith.constant 0 : index
      %34 = vector.load %arg5[%c0_18, %c0_19] : memref<1x256xf32, #tpu.memory_space<vmem>>, vector<1x256xf32>
      %35 = vector.broadcast %34 : vector<1x256xf32> to vector<16x256xf32>
      %36 = arith.addf %33, %35 : vector<16x256xf32>
      %cst_20 = arith.constant 0.000000e+00 : f32
      %37 = vector.broadcast %cst_20 : f32 to vector<16x256xf32>
      %38 = arith.maximumf %36, %37 : vector<16x256xf32>
      %39 = arith.truncf %38 : vector<16x256xf32> to vector<16x256xbf16>
      %c0_21 = arith.constant 0 : index
      %c0_22 = arith.constant 0 : index
      %40 = vector.load %arg6[%c0_21, %c0_22] : memref<16x256xbf16, #tpu.memory_space<vmem>>, vector<16x256xbf16>
      tpu.vector_store %arg6[%c0_21, %c0_22], %39 {strides = array<i32>} : memref<16x256xbf16, #tpu.memory_space<vmem>>, vector<16x256xbf16>,
    } else {
    }
    return
  }
  func.func @transform_0(%arg0: i32, %arg1: i32) -> (i32, i32) {
    %c0_i32 = arith.constant 0 : i32
    %c0_i32_0 = arith.constant 0 : i32
    return %c0_i32, %arg1 : i32, i32
  }
  func.func @transform_1(%arg0: i32, %arg1: i32) -> (i32, i32) {
    %c0_i32 = arith.constant 0 : i32
    return %arg1, %arg0 : i32, i32
  }
  func.func @transform_2(%arg0: i32, %arg1: i32) -> (i32, i32) {
    %c0_i32 = arith.constant 0 : i32
    %c0_i32_0 = arith.constant 0 : i32
    return %c0_i32, %arg0 : i32, i32
  }
  func.func @transform_3(%arg0: i32, %arg1: i32) -> (i32, i32) {
    %c0_i32 = arith.constant 0 : i32
    %c0_i32_0 = arith.constant 0 : i32
    return %c0_i32, %arg0 : i32, i32
  }
  func.func @transform_4(%arg0: i32, %arg1: i32) -> (i32, i32) {
    %c0_i32 = arith.constant 0 : i32
    %c0_i32_0 = arith.constant 0 : i32
    return %c0_i32, %arg0 : i32, i32
  }
}

module attributes {stable_mosaic.version = 11 : i64} {
  func.func @_linear_kernel(%arg0: i32, %arg1: i32, %arg2: memref<16x256xbf16, #tpu.memory_space<vmem>>, %arg3: memref<256x256xbf16, #tpu.memory_space<vmem>>, %arg4: memref<1x256xf32, #tpu.memory_space<vmem>>, %arg5: memref<16x256xbf16, #tpu.memory_space<vmem>>, %arg6: memref<1x256xf32, #tpu.memory_space<vmem>>, %arg7: memref<16x256xf32, #tpu.memory_space<vmem>>) attributes {dimension_semantics = [#tpu.dimension_semantics<parallel>, #tpu.dimension_semantics<arbitrary>], iteration_bounds = array<i64: 2, 2>, scalar_prefetch = 0 : i64, scratch_operands = 1 : i64, tpu.core_type = #tpu.core_type<tc>, window_params = [{transform_indices = @transform_0, window_bounds = array<i64: 16, 256>}, {transform_indices = @transform_1, window_bounds = array<i64: 256, 256>}, {transform_indices = @transform_2, window_bounds = array<i64: 1, 256>}, {transform_indices = @transform_3, window_bounds = array<i64: 16, 256>}, {transform_indices = @transform_4, window_bounds = array<i64: 1, 256>}]} {
    %c0_i32 = arith.constant 0 : i32
    %0 = arith.cmpi eq, %arg1, %c0_i32 : i32
    %1 = arith.extui %0 : i1 to i32
    %c0_i32_0 = arith.constant 0 : i32
    %2 = arith.cmpi ne, %1, %c0_i32_0 : i32
    scf.if %2 {
      %cst_9 = arith.constant 0.000000e+00 : f32
      %12 = vector.broadcast %cst_9 : f32 to vector<16x256xf32>
      %c0_10 = arith.constant 0 : index
      %c0_11 = arith.constant 0 : index
      %13 = vector.load %arg7[%c0_10, %c0_11] : memref<16x256xf32, #tpu.memory_space<vmem>>, vector<16x256xf32>
      tpu.vector_store %arg7[%c0_10, %c0_11], %12 {strides = array<i32>} : memref<16x256xf32, #tpu.memory_space<vmem>>, vector<16x256xf32>,
    } else {
    }
    %c0 = arith.constant 0 : index
    %c0_1 = arith.constant 0 : index
    %3 = vector.load %arg7[%c0, %c0_1] : memref<16x256xf32, #tpu.memory_space<vmem>>, vector<16x256xf32>
    %c0_2 = arith.constant 0 : index
    %c0_3 = arith.constant 0 : index
    %4 = vector.load %arg2[%c0_2, %c0_3] : memref<16x256xbf16, #tpu.memory_space<vmem>>, vector<16x256xbf16>
    %c0_4 = arith.constant 0 : index
    %c0_5 = arith.constant 0 : index
    %5 = vector.load %arg3[%c0_4, %c0_5] : memref<256x256xbf16, #tpu.memory_space<vmem>>, vector<256x256xbf16>
    %cst = arith.constant dense<0.000000e+00> : vector<16x256xf32>
    %6 = tpu.matmul %4, %5, %cst {dimension_numbers = #tpu.dot_dimension_numbers<[1], [0], [0], [1], [0, 0, 1, 1], [], []>} : vector<16x256xbf16>, vector<256x256xbf16>, vector<16x256xf32> -> vector<16x256xf32>
    %7 = arith.addf %3, %6 : vector<16x256xf32>
    %c0_6 = arith.constant 0 : index
    %c0_7 = arith.constant 0 : index
    %8 = vector.load %arg7[%c0_6, %c0_7] : memref<16x256xf32, #tpu.memory_space<vmem>>, vector<16x256xf32>
    tpu.vector_store %arg7[%c0_6, %c0_7], %7 {strides = array<i32>} : memref<16x256xf32, #tpu.memory_space<vmem>>, vector<16x256xf32>,
    %c1_i32 = arith.constant 1 : i32
    %9 = arith.cmpi eq, %arg1, %c1_i32 : i32
    %10 = arith.extui %9 : i1 to i32
    %c0_i32_8 = arith.constant 0 : i32
    %11 = arith.cmpi ne, %10, %c0_i32_8 : i32
    scf.if %11 {
      %c0_9 = arith.constant 0 : index
      %c0_10 = arith.constant 0 : index
      %12 = vector.load %arg7[%c0_9, %c0_10] : memref<16x256xf32, #tpu.memory_space<vmem>>, vector<16x256xf32>
      %c0_11 = arith.constant 0 : index
      %c0_12 = arith.constant 0 : index
      %13 = vector.load %arg4[%c0_11, %c0_12] : memref<1x256xf32, #tpu.memory_space<vmem>>, vector<1x256xf32>
      %14 = vector.broadcast %13 : vector<1x256xf32> to vector<16x256xf32>
      %15 = arith.addf %12, %14 : vector<16x256xf32>
      %16 = arith.truncf %15 : vector<16x256xf32> to vector<16x256xbf16>
      %c0_13 = arith.constant 0 : index
      %c0_14 = arith.constant 0 : index
      %17 = vector.load %arg5[%c0_13, %c0_14] : memref<16x256xbf16, #tpu.memory_space<vmem>>, vector<16x256xbf16>
      tpu.vector_store %arg5[%c0_13, %c0_14], %16 {strides = array<i32>} : memref<16x256xbf16, #tpu.memory_space<vmem>>, vector<16x256xbf16>,
      %18 = arith.extf %16 : vector<16x256xbf16> to vector<16x256xf32>
      %cst_15 = arith.constant dense<0.000000e+00> : vector<256xf32>
      %19 = vector.multi_reduction <add>, %18, %cst_15 [0] : vector<16x256xf32> to vector<256xf32>
      %20 = vector.shape_cast %19 : vector<256xf32> to vector<1x256xf32>
      %cst_16 = arith.constant 1.600000e+01 : f32
      %21 = vector.broadcast %cst_16 : f32 to vector<1x256xf32>
      %22 = arith.divf %20, %21 : vector<1x256xf32>
      %c0_17 = arith.constant 0 : index
      %c0_18 = arith.constant 0 : index
      %23 = vector.load %arg6[%c0_17, %c0_18] : memref<1x256xf32, #tpu.memory_space<vmem>>, vector<1x256xf32>
      tpu.vector_store %arg6[%c0_17, %c0_18], %22 {strides = array<i32>} : memref<1x256xf32, #tpu.memory_space<vmem>>, vector<1x256xf32>,
    } else {
    }
    return
  }
  func.func @transform_0(%arg0: i32, %arg1: i32) -> (i32, i32) {
    %c0_i32 = arith.constant 0 : i32
    %c0_i32_0 = arith.constant 0 : i32
    return %c0_i32, %arg1 : i32, i32
  }
  func.func @transform_1(%arg0: i32, %arg1: i32) -> (i32, i32) {
    %c0_i32 = arith.constant 0 : i32
    return %arg1, %arg0 : i32, i32
  }
  func.func @transform_2(%arg0: i32, %arg1: i32) -> (i32, i32) {
    %c0_i32 = arith.constant 0 : i32
    %c0_i32_0 = arith.constant 0 : i32
    return %c0_i32, %arg0 : i32, i32
  }
  func.func @transform_3(%arg0: i32, %arg1: i32) -> (i32, i32) {
    %c0_i32 = arith.constant 0 : i32
    %c0_i32_0 = arith.constant 0 : i32
    return %c0_i32, %arg0 : i32, i32
  }
  func.func @transform_4(%arg0: i32, %arg1: i32) -> (i32, i32) {
    %c0_i32 = arith.constant 0 : i32
    %c0_i32_0 = arith.constant 0 : i32
    return %c0_i32, %arg0 : i32, i32
  }
}

module attributes {stable_mosaic.version = 11 : i64} {
  func.func @_ssley_loss_kernel(%arg0: i32, %arg1: i32, %arg2: i32, %arg3: memref<256x16xbf16, #tpu.memory_space<vmem>>, %arg4: memref<16x256xbf16, #tpu.memory_space<vmem>>, %arg5: memref<256x16xbf16, #tpu.memory_space<vmem>>, %arg6: memref<16x256xbf16, #tpu.memory_space<vmem>>, %arg7: memref<256x1xf32, #tpu.memory_space<vmem>>, %arg8: memref<256x1xf32, #tpu.memory_space<vmem>>, %arg9: memref<1x256xf32, #tpu.memory_space<vmem>>, %arg10: memref<1x256xf32, #tpu.memory_space<vmem>>, %arg11: memref<8x128xf32, #tpu.memory_space<vmem>>, %arg12: memref<256x256xf32, #tpu.memory_space<vmem>>, %arg13: memref<1x1xf32, #tpu.memory_space<vmem>>) attributes {dimension_semantics = [#tpu.dimension_semantics<parallel>, #tpu.dimension_semantics<arbitrary>, #tpu.dimension_semantics<arbitrary>], iteration_bounds = array<i64: 2, 2, 1>, scalar_prefetch = 0 : i64, scratch_operands = 2 : i64, tpu.core_type = #tpu.core_type<tc>, window_params = [{transform_indices = @transform_0, window_bounds = array<i64: 256, 16>}, {transform_indices = @transform_1, window_bounds = array<i64: 16, 256>}, {transform_indices = @transform_2, window_bounds = array<i64: 256, 16>}, {transform_indices = @transform_3, window_bounds = array<i64: 16, 256>}, {transform_indices = @transform_4, window_bounds = array<i64: 256, 1>}, {transform_indices = @transform_5, window_bounds = array<i64: 256, 1>}, {transform_indices = @transform_6, window_bounds = array<i64: 1, 256>}, {transform_indices = @transform_7, window_bounds = array<i64: 1, 256>}, {transform_indices = @transform_8, window_bounds = array<i64: 8, 128>}]} {
    %c0_i32 = arith.constant 0 : i32
    %0 = arith.cmpi eq, %arg1, %c0_i32 : i32
    %c0_i32_0 = arith.constant 0 : i32
    %1 = arith.cmpi eq, %arg2, %c0_i32_0 : i32
    %2 = arith.andi %0, %1 : i1
    %3 = arith.extui %2 : i1 to i32
    %c0_i32_1 = arith.constant 0 : i32
    %4 = arith.cmpi ne, %3, %c0_i32_1 : i32
    scf.if %4 {
      %cst_25 = arith.constant 0.000000e+00 : f32
      %34 = vector.broadcast %cst_25 : f32 to vector<1x1xf32>
      %c0_26 = arith.constant 0 : index
      %c0_27 = arith.constant 0 : index
      %35 = vector.load %arg13[%c0_26, %c0_27] : memref<1x1xf32, #tpu.memory_space<vmem>>, vector<1x1xf32>
      tpu.vector_store %arg13[%c0_26, %c0_27], %34 {strides = array<i32>} : memref<1x1xf32, #tpu.memory_space<vmem>>, vector<1x1xf32>,
    } else {
    }
    %c0_i32_2 = arith.constant 0 : i32
    %5 = arith.cmpi eq, %arg2, %c0_i32_2 : i32
    %6 = arith.extui %5 : i1 to i32
    %c0_i32_3 = arith.constant 0 : i32
    %7 = arith.cmpi ne, %6, %c0_i32_3 : i32
    scf.if %7 {
      %cst_25 = arith.constant 0.000000e+00 : f32
      %34 = vector.broadcast %cst_25 : f32 to vector<256x256xf32>
      %c0_26 = arith.constant 0 : index
      %c0_27 = arith.constant 0 : index
      %35 = vector.load %arg12[%c0_26, %c0_27] : memref<256x256xf32, #tpu.memory_space<vmem>>, vector<256x256xf32>
      tpu.vector_store %arg12[%c0_26, %c0_27], %34 {strides = array<i32>} : memref<256x256xf32, #tpu.memory_space<vmem>>, vector<256x256xf32>,
    } else {
    }
    %c0 = arith.constant 0 : index
    %c0_4 = arith.constant 0 : index
    %8 = vector.load %arg3[%c0, %c0_4] : memref<256x16xbf16, #tpu.memory_space<vmem>>, vector<256x16xbf16>
    %c0_5 = arith.constant 0 : index
    %c0_6 = arith.constant 0 : index
    %9 = vector.load %arg4[%c0_5, %c0_6] : memref<16x256xbf16, #tpu.memory_space<vmem>>, vector<16x256xbf16>
    %c0_7 = arith.constant 0 : index
    %c0_8 = arith.constant 0 : index
    %10 = vector.load %arg5[%c0_7, %c0_8] : memref<256x16xbf16, #tpu.memory_space<vmem>>, vector<256x16xbf16>
    %c0_9 = arith.constant 0 : index
    %c0_10 = arith.constant 0 : index
    %11 = vector.load %arg6[%c0_9, %c0_10] : memref<16x256xbf16, #tpu.memory_space<vmem>>, vector<16x256xbf16>
    %c0_11 = arith.constant 0 : index
    %c0_12 = arith.constant 0 : index
    %12 = vector.load %arg12[%c0_11, %c0_12] : memref<256x256xf32, #tpu.memory_space<vmem>>, vector<256x256xf32>
    %cst = arith.constant dense<0.000000e+00> : vector<256x256xf32>
    %13 = tpu.matmul %8, %9, %cst {dimension_numbers = #tpu.dot_dimension_numbers<[1], [0], [0], [1], [0, 0, 1, 1], [], []>} : vector<256x16xbf16>, vector<16x256xbf16>, vector<256x256xf32> -> vector<256x256xf32>
    %cst_13 = arith.constant dense<0.000000e+00> : vector<256x256xf32>
    %14 = tpu.matmul %10, %11, %cst_13 {dimension_numbers = #tpu.dot_dimension_numbers<[1], [0], [0], [1], [0, 0, 1, 1], [], []>} : vector<256x16xbf16>, vector<16x256xbf16>, vector<256x256xf32> -> vector<256x256xf32>
    %15 = arith.addf %13, %14 : vector<256x256xf32>
    %16 = arith.addf %12, %15 : vector<256x256xf32>
    %c0_14 = arith.constant 0 : index
    %c0_15 = arith.constant 0 : index
    %17 = vector.load %arg12[%c0_14, %c0_15] : memref<256x256xf32, #tpu.memory_space<vmem>>, vector<256x256xf32>
    tpu.vector_store %arg12[%c0_14, %c0_15], %16 {strides = array<i32>} : memref<256x256xf32, #tpu.memory_space<vmem>>, vector<256x256xf32>,
    %c0_i32_16 = arith.constant 0 : i32
    %18 = arith.cmpi eq, %arg1, %c0_i32_16 : i32
    %19 = arith.extui %18 : i1 to i32
    %c0_i32_17 = arith.constant 0 : i32
    %20 = arith.cmpi ne, %19, %c0_i32_17 : i32
    scf.if %20 {
      %c0_25 = arith.constant 0 : index
      %c0_26 = arith.constant 0 : index
      %34 = vector.load %arg13[%c0_25, %c0_26] : memref<1x1xf32, #tpu.memory_space<vmem>>, vector<1x1xf32>
      %35 = arith.extf %8 : vector<256x16xbf16> to vector<256x16xf32>
      %36 = arith.extf %10 : vector<256x16xbf16> to vector<256x16xf32>
      %37 = arith.mulf %35, %36 : vector<256x16xf32>
      %38 = vector.shape_cast %37 : vector<256x16xf32> to vector<1x256x16xf32>
      %cst_27 = arith.constant dense<0.000000e+00> : vector<1xf32>
      %39 = vector.multi_reduction <add>, %38, %cst_27 [1, 2] : vector<1x256x16xf32> to vector<1xf32>
      %40 = vector.shape_cast %39 : vector<1xf32> to vector<1x1x1xf32>
      %41 = vector.extract %40[0, 0, 0] : f32 from vector<1x1x1xf32>
      %42 = vector.broadcast %41 : f32 to vector<1x1xf32>
      %cst_28 = arith.constant -0.266666681 : f32
      %43 = vector.broadcast %cst_28 : f32 to vector<1x1xf32>
      %44 = arith.mulf %43, %42 : vector<1x1xf32>
      %45 = arith.addf %34, %44 : vector<1x1xf32>
      %c0_29 = arith.constant 0 : index
      %c0_30 = arith.constant 0 : index
      %46 = vector.load %arg13[%c0_29, %c0_30] : memref<1x1xf32, #tpu.memory_space<vmem>>, vector<1x1xf32>
      tpu.vector_store %arg13[%c0_29, %c0_30], %45 {strides = array<i32>} : memref<1x1xf32, #tpu.memory_space<vmem>>, vector<1x1xf32>,
    } else {
    }
    %c0_i32_18 = arith.constant 0 : i32
    %21 = arith.cmpi eq, %arg2, %c0_i32_18 : i32
    %22 = arith.extui %21 : i1 to i32
    %c0_i32_19 = arith.constant 0 : i32
    %23 = arith.cmpi ne, %22, %c0_i32_19 : i32
    scf.if %23 {
      %c0_25 = arith.constant 0 : index
      %c0_26 = arith.constant 0 : index
      %34 = vector.load %arg7[%c0_25, %c0_26] : memref<256x1xf32, #tpu.memory_space<vmem>>, vector<256x1xf32>
      %c0_27 = arith.constant 0 : index
      %c0_28 = arith.constant 0 : index
      %35 = vector.load %arg8[%c0_27, %c0_28] : memref<256x1xf32, #tpu.memory_space<vmem>>, vector<256x1xf32>
      %c0_29 = arith.constant 0 : index
      %c0_30 = arith.constant 0 : index
      %36 = vector.load %arg9[%c0_29, %c0_30] : memref<1x256xf32, #tpu.memory_space<vmem>>, vector<1x256xf32>
      %c0_31 = arith.constant 0 : index
      %c0_32 = arith.constant 0 : index
      %37 = vector.load %arg10[%c0_31, %c0_32] : memref<1x256xf32, #tpu.memory_space<vmem>>, vector<1x256xf32>
      %38 = vector.broadcast %34 : vector<256x1xf32> to vector<256x256xf32>
      %39 = vector.broadcast %36 : vector<1x256xf32> to vector<256x256xf32>
      %40 = arith.mulf %38, %39 : vector<256x256xf32>
      %41 = vector.broadcast %35 : vector<256x1xf32> to vector<256x256xf32>
      %42 = vector.broadcast %37 : vector<1x256xf32> to vector<256x256xf32>
      %43 = arith.mulf %41, %42 : vector<256x256xf32>
      %44 = arith.addf %40, %43 : vector<256x256xf32>
      %c0_33 = arith.constant 0 : index
      %c0_34 = arith.constant 0 : index
      %45 = vector.load %arg12[%c0_33, %c0_34] : memref<256x256xf32, #tpu.memory_space<vmem>>, vector<256x256xf32>
      %cst_35 = arith.constant 1.600000e+01 : f32
      %46 = vector.broadcast %cst_35 : f32 to vector<256x256xf32>
      %47 = arith.mulf %46, %44 : vector<256x256xf32>
      %48 = arith.subf %45, %47 : vector<256x256xf32>
      %cst_36 = arith.constant 0.0666666701 : f32
      %49 = vector.broadcast %cst_36 : f32 to vector<256x256xf32>
      %50 = arith.mulf %48, %49 : vector<256x256xf32>
      %c0_37 = arith.constant 0 : index
      %c0_38 = arith.constant 0 : index
      %51 = vector.load %arg13[%c0_37, %c0_38] : memref<1x1xf32, #tpu.memory_space<vmem>>, vector<1x1xf32>
      %52 = arith.mulf %50, %50 : vector<256x256xf32>
      %53 = vector.shape_cast %52 : vector<256x256xf32> to vector<1x256x256xf32>
      %cst_39 = arith.constant dense<0.000000e+00> : vector<1xf32>
      %54 = vector.multi_reduction <add>, %53, %cst_39 [1, 2] : vector<1x256x256xf32> to vector<1xf32>
      %55 = vector.shape_cast %54 : vector<1xf32> to vector<1x1x1xf32>
      %56 = vector.extract %55[0, 0, 0] : f32 from vector<1x1x1xf32>
      %57 = vector.broadcast %56 : f32 to vector<1x1xf32>
      %58 = arith.addf %51, %57 : vector<1x1xf32>
      %c0_40 = arith.constant 0 : index
      %c0_41 = arith.constant 0 : index
      %59 = vector.load %arg13[%c0_40, %c0_41] : memref<1x1xf32, #tpu.memory_space<vmem>>, vector<1x1xf32>
      tpu.vector_store %arg13[%c0_40, %c0_41], %58 {strides = array<i32>} : memref<1x1xf32, #tpu.memory_space<vmem>>, vector<1x1xf32>,
    } else {
    }
    %c0_i32_20 = arith.constant 0 : i32
    %24 = arith.cmpi eq, %arg1, %c0_i32_20 : i32
    %c0_i32_21 = arith.constant 0 : i32
    %25 = arith.cmpi eq, %arg2, %c0_i32_21 : i32
    %26 = arith.andi %24, %25 : i1
    %27 = arith.extui %26 : i1 to i32
    %c0_i32_22 = arith.constant 0 : i32
    %28 = arith.cmpi ne, %27, %c0_i32_22 : i32
    scf.if %28 {
      %c0_25 = arith.constant 0 : index
      %c0_26 = arith.constant 0 : index
      %34 = vector.load %arg13[%c0_25, %c0_26] : memref<1x1xf32, #tpu.memory_space<vmem>>, vector<1x1xf32>
      %c0_27 = arith.constant 0 : index
      %c0_28 = arith.constant 0 : index
      %35 = vector.load %arg7[%c0_27, %c0_28] : memref<256x1xf32, #tpu.memory_space<vmem>>, vector<256x1xf32>
      %c0_29 = arith.constant 0 : index
      %c0_30 = arith.constant 0 : index
      %36 = vector.load %arg8[%c0_29, %c0_30] : memref<256x1xf32, #tpu.memory_space<vmem>>, vector<256x1xf32>
      %37 = arith.mulf %35, %36 : vector<256x1xf32>
      %38 = vector.shape_cast %37 : vector<256x1xf32> to vector<1x256x1xf32>
      %cst_31 = arith.constant dense<0.000000e+00> : vector<1xf32>
      %39 = vector.multi_reduction <add>, %38, %cst_31 [1, 2] : vector<1x256x1xf32> to vector<1xf32>
      %40 = vector.shape_cast %39 : vector<1xf32> to vector<1x1x1xf32>
      %41 = vector.extract %40[0, 0, 0] : f32 from vector<1x1x1xf32>
      %42 = vector.broadcast %41 : f32 to vector<1x1xf32>
      %cst_32 = arith.constant 4.26666689 : f32
      %43 = vector.broadcast %cst_32 : f32 to vector<1x1xf32>
      %44 = arith.mulf %43, %42 : vector<1x1xf32>
      %45 = arith.addf %34, %44 : vector<1x1xf32>
      %c0_33 = arith.constant 0 : index
      %c0_34 = arith.constant 0 : index
      %46 = vector.load %arg13[%c0_33, %c0_34] : memref<1x1xf32, #tpu.memory_space<vmem>>, vector<1x1xf32>
      tpu.vector_store %arg13[%c0_33, %c0_34], %45 {strides = array<i32>} : memref<1x1xf32, #tpu.memory_space<vmem>>, vector<1x1xf32>,
    } else {
    }
    %c1_i32 = arith.constant 1 : i32
    %29 = arith.cmpi eq, %arg1, %c1_i32 : i32
    %c0_i32_23 = arith.constant 0 : i32
    %30 = arith.cmpi eq, %arg2, %c0_i32_23 : i32
    %31 = arith.andi %29, %30 : i1
    %32 = arith.extui %31 : i1 to i32
    %c0_i32_24 = arith.constant 0 : i32
    %33 = arith.cmpi ne, %32, %c0_i32_24 : i32
    scf.if %33 {
      %c0_25 = arith.constant 0 : index
      %c0_26 = arith.constant 0 : index
      %34 = vector.load %arg13[%c0_25, %c0_26] : memref<1x1xf32, #tpu.memory_space<vmem>>, vector<1x1xf32>
      %35 = vector.shape_cast %34 : vector<1x1xf32> to vector<1x1xf32>
      %36 = vector.broadcast %35 : vector<1x1xf32> to vector<8x128xf32>
      %c0_27 = arith.constant 0 : index
      %c0_28 = arith.constant 0 : index
      %37 = vector.load %arg11[%c0_27, %c0_28] : memref<8x128xf32, #tpu.memory_space<vmem>>, vector<8x128xf32>
      tpu.vector_store %arg11[%c0_27, %c0_28], %36 {strides = array<i32>} : memref<8x128xf32, #tpu.memory_space<vmem>>, vector<8x128xf32>,
    } else {
    }
    return
  }
  func.func @transform_0(%arg0: i32, %arg1: i32, %arg2: i32) -> (i32, i32) {
    %c0_i32 = arith.constant 0 : i32
    return %arg0, %arg2 : i32, i32
  }
  func.func @transform_1(%arg0: i32, %arg1: i32, %arg2: i32) -> (i32, i32) {
    %c0_i32 = arith.constant 0 : i32
    return %arg2, %arg1 : i32, i32
  }
  func.func @transform_2(%arg0: i32, %arg1: i32, %arg2: i32) -> (i32, i32) {
    %c0_i32 = arith.constant 0 : i32
    return %arg0, %arg2 : i32, i32
  }
  func.func @transform_3(%arg0: i32, %arg1: i32, %arg2: i32) -> (i32, i32) {
    %c0_i32 = arith.constant 0 : i32
    return %arg2, %arg1 : i32, i32
  }
  func.func @transform_4(%arg0: i32, %arg1: i32, %arg2: i32) -> (i32, i32) {
    %c0_i32 = arith.constant 0 : i32
    %c0_i32_0 = arith.constant 0 : i32
    return %arg0, %c0_i32 : i32, i32
  }
  func.func @transform_5(%arg0: i32, %arg1: i32, %arg2: i32) -> (i32, i32) {
    %c0_i32 = arith.constant 0 : i32
    %c0_i32_0 = arith.constant 0 : i32
    return %arg0, %c0_i32 : i32, i32
  }
  func.func @transform_6(%arg0: i32, %arg1: i32, %arg2: i32) -> (i32, i32) {
    %c0_i32 = arith.constant 0 : i32
    %c0_i32_0 = arith.constant 0 : i32
    return %c0_i32, %arg1 : i32, i32
  }
  func.func @transform_7(%arg0: i32, %arg1: i32, %arg2: i32) -> (i32, i32) {
    %c0_i32 = arith.constant 0 : i32
    %c0_i32_0 = arith.constant 0 : i32
    return %c0_i32, %arg1 : i32, i32
  }
  func.func @transform_8(%arg0: i32, %arg1: i32, %arg2: i32) -> (i32, i32) {
    %c0_i32 = arith.constant 0 : i32
    %c0_i32_0 = arith.constant 0 : i32
    return %arg0, %c0_i32 : i32, i32
  }
}

</mosaic_0001>

<llo_original>
// kernel: ssley_forward.13
$region0: #{ssley_forward.13}
  #allocation0 [shape = 'u32[]', space=smem, size = 0x4, offset = 0x4, fixed_abs, tag = 'smem constant byte address 0x4 - core index']
  #allocation1 [shape = 'u32[144,128]{1,0:T(1,128)}', space=vmem, size = 0x12000, scoped, tag = 'internal scratch']
  #allocation2 [shape = 'f32[16,256]{1,0:T(8,128)}', space=vmem, size = 0x4000, scoped, tag = 'scratch operand']
  %s0 = inlined_call_operand.vmem [shape: bf16[16,4], index: 0, kind: input, shape index: {}]
  %s1 = inlined_call_operand.vmem [shape: bf16[4,512], index: 1, kind: input, shape index: {}]
  %s2 = inlined_call_operand.vmem [shape: f32[1,512], index: 2, kind: input, shape index: {}]
  %s3 = inlined_call_operand.vmem [shape: bf16[16,512], index: 3, kind: output, shape index: {}]
  %s4 = sld [smem:[#allocation0]]
  $region87: #{ssley_forward.13} parent=0
    _
  %s6 = ssub.s32 1, %s4
  %s7 = scalar_select 0, %s6, %s4
  $region1: #{ssley_forward.13} parent=0
    #allocation3 [shape = 'u8[16384]{0}', space=vmem, size = 0x4000, scoped, tag = 'output window, operand 0']
    loop: start=0, step=1, limit=4
    $region2: #{ssley_forward.13} parent=1 // loop_pre_header
      _
    $region3: #{ssley_forward.13} parent=1 // loop_header
      %s9 = sphi 0, %s13
      %p10 = scmp.ge.s32.totalorder %s9, 4
      %s16 = sphi 0, %s28
      %s17 = sphi 0, %s24
      %s18 = sphi 0, %s16
      %s19 = sphi 0, %s17
      %s20 = sphi 0, %s18
      %s21 = sphi 0, %s19
      %s31 = sphi 0, %s33
      %s34 = sphi 0, %s31
      %s35 = sphi 0, %s34
      %s51 = sphi 0, %s35
      %s59 = sphi 0, %s61
      %s62 = sphi 0, %s59
      %s63 = sphi 0, %s62
      %s79 = sphi 0, %s63
      %s85 = sphi 0, %s87
      %s88 = sphi 0, %s85
      %s89 = sphi 0, %s88
      %s105 = sphi 0, %s89
      %s111 = sphi 0, %s113
      %s114 = sphi 0, %s111
      %s115 = sphi 0, %s114
      %s131 = sphi 0, %s115
    $region4: #{ssley_forward.13} parent=1 // loop_header_branch
      %12 = sbr.rel (%p10) target = $region8
    $region5: #{ssley_forward.13} parent=1 // loop_body
      %s14 = ssub.s32 %s9, 1
      %s15 = ssub.s32 %s9, 2
      %s22 = sadd.s32 1, %s17
      %p23 = scmp.ge.s32.totalorder %s22, 1
      %s24 = scalar_select %p23, 0, %s22
      %s25 = sadd.s32 1, %s16
      %s26 = scalar_select %p23, %s25, %s16
      %p27 = scmp.ge.s32.totalorder %s26, 2
      %s28 = scalar_select %p27, 0, %s26
      %s29 = ssub.s32 %s17, %s24
      %p30 = scmp.eq.s32.totalorder %s29, 0
      %s32 = sadd.s32 %s31, 1
      %s33 = scalar_select %p30, %s31, %s32
      %p36 = pneg %p30
      %p37 = scmp.eq.s32.totalorder %s9, 1
      %p38 = por %p36, %p37
      %p39 = scmp.ne.s32.totalorder %s31, %s34
      %p40 = scmp.eq.s32.totalorder %s9, 0
      %p41 = por %p39, %p40
      %p42 = scmp.ne.s32.totalorder %s31, %s34
      %p43 = scmp.eq.s32.totalorder %s14, 1
      %p44 = por %p42, %p43
      %p45 = scmp.ne.s32.totalorder %s34, %s35
      %p46 = scmp.eq.s32.totalorder %s14, 0
      %p47 = por %p45, %p46
      %p48 = scmp.ne.s32.totalorder %s34, %s35
      %p49 = scmp.eq.s32.totalorder %s15, 1
      %p50 = por %p48, %p49
      %p52 = scmp.ne.s32.totalorder %s35, %s51
      %p53 = scmp.eq.s32.totalorder %s15, 0
      %p54 = por %p52, %p53
      %s55 = ssub.s32 %s17, %s24
      %s56 = ssub.s32 %s16, %s28
      %s57 = sor.u32 %s55, %s56
      %p58 = scmp.eq.s32.totalorder %s57, 0
      %s60 = sadd.s32 %s59, 1
      %s61 = scalar_select %p58, %s59, %s60
      %p64 = pneg %p58
      %p65 = scmp.eq.s32.totalorder %s9, 1
      %p66 = por %p64, %p65
      %p67 = scmp.ne.s32.totalorder %s59, %s62
      %p68 = scmp.eq.s32.totalorder %s9, 0
      %p69 = por %p67, %p68
      %p70 = scmp.ne.s32.totalorder %s59, %s62
      %p71 = scmp.eq.s32.totalorder %s14, 1
      %p72 = por %p70, %p71
      %p73 = scmp.ne.s32.totalorder %s62, %s63
      %p74 = scmp.eq.s32.totalorder %s14, 0
      %p75 = por %p73, %p74
      %p76 = scmp.ne.s32.totalorder %s62, %s63
      %p77 = scmp.eq.s32.totalorder %s15, 1
      %p78 = por %p76, %p77
      %p80 = scmp.ne.s32.totalorder %s63, %s79
      %p81 = scmp.eq.s32.totalorder %s15, 0
      %p82 = por %p80, %p81
      %s83 = ssub.s32 %s16, %s28
      %p84 = scmp.eq.s32.totalorder %s83, 0
      %s86 = sadd.s32 %s85, 1
      %s87 = scalar_select %p84, %s85, %s86
      %p90 = pneg %p84
      %p91 = scmp.eq.s32.totalorder %s9, 1
      %p92 = por %p90, %p91
      %p93 = scmp.ne.s32.totalorder %s85, %s88
      %p94 = scmp.eq.s32.totalorder %s9, 0
      %p95 = por %p93, %p94
      %p96 = scmp.ne.s32.totalorder %s85, %s88
      %p97 = scmp.eq.s32.totalorder %s14, 1
      %p98 = por %p96, %p97
      %p99 = scmp.ne.s32.totalorder %s88, %s89
      %p100 = scmp.eq.s32.totalorder %s14, 0
      %p101 = por %p99, %p100
      %p102 = scmp.ne.s32.totalorder %s88, %s89
      %p103 = scmp.eq.s32.totalorder %s15, 1
      %p104 = por %p102, %p103
      %p106 = scmp.ne.s32.totalorder %s89, %s105
      %p107 = scmp.eq.s32.totalorder %s15, 0
      %p108 = por %p106, %p107
      %s109 = ssub.s32 %s16, %s28
      %p110 = scmp.eq.s32.totalorder %s109, 0
      %s112 = sadd.s32 %s111, 1
      %s113 = scalar_select %p110, %s111, %s112
      %p116 = pneg %p110
      %p117 = scmp.eq.s32.totalorder %s9, 1
      %p118 = por %p116, %p117
      %p119 = scmp.ne.s32.totalorder %s111, %s114
      %p120 = scmp.eq.s32.totalorder %s9, 0
      %p121 = por %p119, %p120
      %p122 = scmp.ne.s32.totalorder %s111, %s114
      %p123 = scmp.eq.s32.totalorder %s14, 1
      %p124 = por %p122, %p123
      %p125 = scmp.ne.s32.totalorder %s114, %s115
      %p126 = scmp.eq.s32.totalorder %s14, 0
      %p127 = por %p125, %p126
      %p128 = scmp.ne.s32.totalorder %s114, %s115
      %p129 = scmp.eq.s32.totalorder %s15, 1
      %p130 = por %p128, %p129
      %p132 = scmp.ne.s32.totalorder %s115, %s131
      %p133 = scmp.eq.s32.totalorder %s15, 0
      %p134 = por %p132, %p133
      %p135 = scmp.le.s32.totalorder 1, %s9
      %p136 = scmp.lt.s32.totalorder %s9, 3
      %p137 = pnand %p135, %p136
      %p138 = pneg %p137
      // Predicated region
      $region9: #{ssley_forward.13} parent=5 // pred_check
        _
      $region10: #{ssley_forward.13} parent=5 // pred_check_branch
        %140 = sbr.rel (%p137) target = $region12
      $region11: #{ssley_forward.13} parent=5 // pred_region
        %s141 = ssub.s32 %s9, 1
        // Predicated region
        $region13: #{ssley_forward.13} parent=11 // pred_check
          %p142 = pneg %p47
        $region14: #{ssley_forward.13} parent=11 // pred_check_branch
          %144 = sbr.rel (%p142) target = $region16
        $region15: #{ssley_forward.13} parent=11 // pred_region
          %p145 = scmp.lt.s32.totalorder %s19, 0
          %s146 = scalar_select %p145, %s19, 0
          %s147 = smul.addr %s146, 4
          %s148 = scalar_lea.vmem %s0, %s147
        $region16: #{ssley_forward.13} parent=11 // pred_fallthru
          _
      $region12: #{ssley_forward.13} parent=5 // pred_fallthru
        _
      %p149 = scmp.lt.s32.totalorder %s9, 2
      // Predicated region
      $region17: #{ssley_forward.13} parent=5 // pred_check
        %p150 = pneg %p149
      $region18: #{ssley_forward.13} parent=5 // pred_check_branch
        %152 = sbr.rel (%p150) target = $region20
      $region19: #{ssley_forward.13} parent=5 // pred_region
        // Predicated region
        $region21: #{ssley_forward.13} parent=19 // pred_check
          %p153 = pneg %p69
        $region22: #{ssley_forward.13} parent=19 // pred_check_branch
          %155 = sbr.rel (%p153) target = $region24
        $region23: #{ssley_forward.13} parent=19 // pred_region
          %s156 = smul.u32 2, %s16
          %p157 = scmp.lt.s32.totalorder %s17, 0
          %s158 = scalar_select %p157, %s17, 0
          %p159 = scmp.lt.s32.totalorder %s156, 3
          %s160 = scalar_select %p159, %s156, 3
          %s161 = smul.addr %s158, 4
          %s162 = sadd.s32 %s160, %s161
          %s163 = smul.addr %s162, 2
          %s164 = scalar_lea.vmem %s1, %s163
          %s165 = smul.u32 2, %s16
        $region24: #{ssley_forward.13} parent=19 // pred_fallthru
          _
        // Predicated region
        $region25: #{ssley_forward.13} parent=19 // pred_check
          %p166 = pneg %p95
        $region26: #{ssley_forward.13} parent=19 // pred_check_branch
          %168 = sbr.rel (%p166) target = $region28
        $region27: #{ssley_forward.13} parent=19 // pred_region
          %s169 = smul.u32 2, %s16
          %p170 = scmp.lt.s32.totalorder %s169, 3
          %s171 = scalar_select %p170, %s169, 3
          %s172 = scalar_lea.vmem %s2, %s171
          %s173 = smul.u32 2, %s16
        $region28: #{ssley_forward.13} parent=19 // pred_fallthru
          _
      $region20: #{ssley_forward.13} parent=5 // pred_fallthru
        _
      %p174 = scmp.le.s32.totalorder 1, %s9
      %p175 = scmp.lt.s32.totalorder %s9, 3
      %p176 = pnand %p174, %p175
      %p177 = pneg %p176
      // Predicated region
      $region29: #{ssley_forward.13} parent=5 // pred_check
        _
      $region30: #{ssley_forward.13} parent=5 // pred_check_branch
        %179 = sbr.rel (%p176) target = $region32
      $region31: #{ssley_forward.13} parent=5 // pred_region
        %s180 = ssub.s32 %s9, 1
        %p181 = scmp.lt.s32.totalorder %s19, 0
        %s182 = scalar_select %p181, %s19, 0
        %s183 = smul.addr %s182, 4
        %s184 = scalar_lea.vmem %s0, %s183
        %p185 = pneg %p47
        %p186 = pneg %p44
        %s187 = smul.u32 2, %s18
        %p188 = scmp.lt.s32.totalorder %s19, 0
        %s189 = scalar_select %p188, %s19, 0
        %p190 = scmp.lt.s32.totalorder %s187, 3
        %s191 = scalar_select %p190, %s187, 3
        %s192 = smul.addr %s189, 4
        %s193 = sadd.s32 %s191, %s192
        %s194 = smul.addr %s193, 2
        %s195 = scalar_lea.vmem %s1, %s194
        %p196 = pneg %p75
        %p197 = pneg %p72
        %s198 = smul.u32 2, %s18
        %p199 = scmp.lt.s32.totalorder %s198, 3
        %s200 = scalar_select %p199, %s198, 3
        %s201 = scalar_lea.vmem %s2, %s200
        %p202 = pneg %p101
        %p203 = pneg %p98
        %p204 = pneg %p127
        %p205 = pneg %p124
        %s206 = sand.u32 %s114, 1
        %s207 = sand.u32 %s114, 1
        %s208 = smul.addr %s207, 16
        %s209 = scalar_lea.vmem [#allocation3], %s208
        %p210 = scmp.lt.s32.totalorder %s19, 0
        %s211 = scalar_select %p210, %s19, 0
        %s212 = smul.addr %s211, 4
        %s213 = scalar_lea.vmem %s0, %s212
        %s214 = smul.u32 2, %s18
        %p215 = scmp.lt.s32.totalorder %s19, 0
        %s216 = scalar_select %p215, %s19, 0
        %p217 = scmp.lt.s32.totalorder %s214, 3
        %s218 = scalar_select %p217, %s214, 3
        %s219 = smul.addr %s216, 4
        %s220 = sadd.s32 %s218, %s219
        %s221 = smul.addr %s220, 2
        %s222 = scalar_lea.vmem %s1, %s221
        %s223 = smul.u32 2, %s18
        %s224 = smul.u32 2, %s18
        %p225 = scmp.lt.s32.totalorder %s224, 3
        %s226 = scalar_select %p225, %s224, 3
        %s227 = scalar_lea.vmem %s2, %s226
        %s228 = smul.u32 2, %s18
        %s229 = smul.u32 2, %s18
        %p231 = scmp.eq.s32.totalorder %s19, 0
        // Predicated region
        $region33: #{ssley_forward.13} parent=31 // pred_check
          %p232 = pneg %p231
        $region34: #{ssley_forward.13} parent=31 // pred_check_branch
          %234 = sbr.rel (%p232) target = $region36
        $region35: #{ssley_forward.13} parent=31 // pred_region
          %235 = vst [vmem:[#allocation2] sm:$0xff] 0.0
          %236 = vst [vmem:[#allocation2 + $0x8] sm:$0xff] 0.0
          %237 = vst [vmem:[#allocation2 + $0x10] sm:$0xff] 0.0
          %238 = vst [vmem:[#allocation2 + $0x18] sm:$0xff] 0.0
        $region36: #{ssley_forward.13} parent=31 // pred_fallthru
          _
        %v239 = vld [vmem:[#allocation2] sm:$0xff]
        %v240 = vld [vmem:[#allocation2 + $0x8] sm:$0xff]
        %v241 = vld [vmem:[#allocation2 + $0x10] sm:$0xff]
        %v242 = vld [vmem:[#allocation2 + $0x18] sm:$0xff]
        %v243 = vld [vmem:[%s213] sm:$0xf]
        %v244 = vld [vmem:[%s213 + $0x4] sm:$0xf]
        %v245 = vld [vmem:[%s222] sm:$0xf]
        %v248 = vunpack.c.l.b16 %v243
        %v249 = vunpack.c.l.b16 %v244
        %v250 = vpack.c.b16 %v249, %v248
        %v253 = vunpack.c.l.s4 1983009808
        %v254 = vunpack.c.0.s8 %v253
        %v255 = vlaneseq
        %v256 = vshrl.u32 %v255, 7
        %v257 = vsub.s32 %v254, %v256
        %v258 = vrot.slane %v245, %v257
        %v259 = vcombine.high %v258, %v258
        %vm260 = vcmask 31744
        %v262 = vsel %vm260, %v250, 0
        %vm264 = vcmask 1041408
        %v266 = vsel %vm264, %v258, 0
        %v269 = vsel %vm264, %v259, 0
        %271 = vmatprep.subr.bf16.mxu0 %v269
        %272 = vmatpush1.bf16.msra.mxu0 %v266
        %273 = vmatprep.subr.bf16.mxu0 0
        %274 = vmatpush1.bf16.msra.mxu0 0
        %275 = vmatprep.subr.bf16.mxu0 0
        %276 = vmatpush1.bf16.msra.mxu0 0
        %277 = vmatprep.subr.bf16.mxu0 0
        %278 = vmatpush1.bf16.msra.mxu0 0
        %279 = vmatprep.subr.bf16.mxu0 0
        %280 = vmatpush1.bf16.msra.mxu0 0
        %281 = vmatprep.subr.bf16.mxu0 0
        %282 = vmatpush1.bf16.msra.mxu0 0
        %283 = vmatprep.subr.bf16.mxu0 0
        %284 = vmatpush1.bf16.msra.mxu0 0
        %285 = vmatprep.subr.bf16.mxu0 0
        %286 = vmatpush1.bf16.msra.mxu0 0
        %287 = vmatprep.subr.bf16.mxu0 0
        %288 = vmatpush1.bf16.msra.mxu0 0
        %289 = vmatprep.subr.bf16.mxu0 0
        %290 = vmatpush1.bf16.msra.mxu0 0
        %291 = vmatprep.subr.bf16.mxu0 0
        %292 = vmatpush1.bf16.msra.mxu0 0
        %293 = vmatprep.subr.bf16.mxu0 0
        %294 = vmatpush1.bf16.msra.mxu0 0
        %295 = vmatprep.subr.bf16.mxu0 0
        %296 = vmatpush1.bf16.msra.mxu0 0
        %297 = vmatprep.subr.bf16.mxu0 0
        %298 = vmatpush1.bf16.msra.mxu0 0
        %299 = vmatprep.subr.bf16.mxu0 0
        %300 = vmatpush1.bf16.msra.mxu0 0
        %301 = vmatprep.subr.bf16.mxu0 0
        %302 = vmatpush1.bf16.msra.mxu0 0
        %303 = vmatprep.mubr.bf16.mxu0 0
        %304 = vmatmul.mubr.bf16.gmra.mrb[0].mxu0 %v262
        %v305 = vpop.f32.mrb[0].mxu0
        %v306 = vadd.f32 0.0, %v305
        %v307 = vpop.f32.mrb[0].mxu0
        %v308 = vadd.f32 0.0, %v307
        %v309 = vpop.f32.mrb[0].mxu0
        %v310 = vadd.f32 0.0, %v309
        %v311 = vpop.f32.mrb[0].mxu0
        %v312 = vadd.f32 0.0, %v311
        %313 = vdwg.mxu0
        %v314 = vadd.f32 %v239, %v306
        %v315 = vadd.f32 %v240, %v308
        %v316 = vadd.f32 %v241, %v310
        %v317 = vadd.f32 %v242, %v312
        %318 = vst [vmem:[#allocation2] sm:$0xff] %v314
        %319 = vst [vmem:[#allocation2 + $0x8] sm:$0xff] %v315
        %320 = vst [vmem:[#allocation2 + $0x10] sm:$0xff] %v316
        %321 = vst [vmem:[#allocation2 + $0x18] sm:$0xff] %v317
        // Predicated region
        $region37: #{ssley_forward.13} parent=31 // pred_check
          %p322 = pneg %p231
        $region38: #{ssley_forward.13} parent=31 // pred_check_branch
          %324 = sbr.rel (%p322) target = $region40
        $region39: #{ssley_forward.13} parent=31 // pred_region
          %v325 = vld [vmem:[#allocation2] sm:$0xff]
          %v326 = vld [vmem:[#allocation2 + $0x8] sm:$0xff]
          %v327 = vld [vmem:[#allocation2 + $0x10] sm:$0xff]
          %v328 = vld [vmem:[#allocation2 + $0x18] sm:$0xff]
          %v329 = vld [vmem:[%s227] sm:$0x3]
          %v331 = vlaneseq
          %v332 = vshrl.u32 %v331, 7
          %v333 = vsub.s32 0, %v332
          %v334 = vrot.slane %v329, %v333
          %v335 = vlaneseq
          %v336 = vshrl.u32 %v335, 7
          %v337 = vsub.s32 1, %v336
          %v338 = vrot.slane %v329, %v337
          %v341 = vadd.f32 %v325, %v334
          %v342 = vadd.f32 %v326, %v338
          %v343 = vadd.f32 %v327, %v334
          %v344 = vadd.f32 %v328, %v338
          %v345 = vpack.c.bf16 %v343, %v341
          %v346 = vpack.c.bf16 %v344, %v342
          %v349 = vunpack.c.l.b16 %v345
          %v350 = vunpack.c.l.b16 %v346
          %v351 = vunpack.c.h.b16 %v345
          %v352 = vunpack.c.h.b16 %v346
          %v353 = vpack.c.b16 %v350, %v349
          %v354 = vpack.c.b16 %v352, %v351
          %357 = vst [vmem:[%s209] sm:$0xff] %v353
          %358 = vst [vmem:[%s209 + $0x8] sm:$0xff] %v354
        $region40: #{ssley_forward.13} parent=31 // pred_fallthru
          _
        %s359 = sand.u32 %s114, 1
        %s360 = sand.u32 %s114, 1
        %s361 = smul.addr %s360, 16
        %s362 = scalar_lea.vmem [#allocation3], %s361
        // Predicated region
        $region41: #{ssley_forward.13} parent=31 // pred_check
          %p363 = pneg %p124
        $region42: #{ssley_forward.13} parent=31 // pred_check_branch
          %365 = sbr.rel (%p363) target = $region44
        $region43: #{ssley_forward.13} parent=31 // pred_region
          %s366 = smul.u32 2, %s18
          %s367 = smul.addr %s366, 4
          %s368 = scalar_lea.vmem %s3, %s367
          // Predicated region
          $region45: #{ssley_forward.13} parent=43 // pred_check
            _
          $region46: #{ssley_forward.13} parent=43 // pred_check_branch
            %370 = sbr.rel (0) target = $region48
          $region47: #{ssley_forward.13} parent=43 // pred_region
            // Predicated region
            $region49: #{ssley_forward.13} parent=47 // pred_check
              _
            $region50: #{ssley_forward.13} parent=47 // pred_check_branch
              %372 = sbr.rel (0) target = $region52
            $region51: #{ssley_forward.13} parent=47 // pred_region
              // Predicated region
              $region64: #{ssley_forward.13} parent=51 // pred_check
                _
              $region65: #{ssley_forward.13} parent=51 // pred_check_branch
                %389 = sbr.rel (0) target = $region67
              $region66: #{ssley_forward.13} parent=51 // pred_region
                loop: start=0, step=1, limit=1
                $region68: #{ssley_forward.13} parent=66 // loop_pre_header
                  _
                $region69: #{ssley_forward.13} parent=66 // loop_header
                  %s391 = sphi 0, %s395
                  %p392 = scmp.ge.s32.totalorder %s391, 1
                  %s396 = sphi %s362, %s362
                  %s397 = sphi %s368, %s368
                $region70: #{ssley_forward.13} parent=66 // loop_header_branch
                  %394 = sbr.rel (%p392) target = $region74
                $region71: #{ssley_forward.13} parent=66 // loop_body
                  %v398 = vld [vmem:[%s396] sm:$0xff]
                  %399 = vst [vmem:[%s397] sm:$0xff] %v398
                  %v400 = vld [vmem:[%s396 + $0x8] sm:$0xff]
                  %401 = vst [vmem:[%s397 + $0x10] sm:$0xff] %v400
                $region72: #{ssley_forward.13} parent=66 // loop_footer
                  %s395 = sadd.s32 1, %s391
                $region73: #{ssley_forward.13} parent=66 // loop_footer_branch
                  %390 = sbr.rel target = $region69
                $region74: #{ssley_forward.13} parent=66 // loop_exit
                  _
              $region67: #{ssley_forward.13} parent=51 // pred_fallthru
                _
              // Predicated region
              $region75: #{ssley_forward.13} parent=51 // pred_check
                _
              $region76: #{ssley_forward.13} parent=51 // pred_check_branch
                %403 = sbr.rel target = $region78
              $region77: #{ssley_forward.13} parent=51 // pred_region
                _
              $region78: #{ssley_forward.13} parent=51 // pred_fallthru
                _
            $region52: #{ssley_forward.13} parent=47 // pred_fallthru
              _
            // Predicated region
            $region53: #{ssley_forward.13} parent=47 // pred_check
              _
            $region54: #{ssley_forward.13} parent=47 // pred_check_branch
              %374 = sbr.rel target = $region56
            $region55: #{ssley_forward.13} parent=47 // pred_region
              loop: start=0, step=1, limit=1
              $region57: #{ssley_forward.13} parent=55 // loop_pre_header
                _
              $region58: #{ssley_forward.13} parent=55 // loop_header
                %s377 = sphi 0, %s381
                %p378 = scmp.ge.s32.totalorder %s377, 1
                %s382 = sphi %s362, %s362
                %s383 = sphi %s368, %s368
              $region59: #{ssley_forward.13} parent=55 // loop_header_branch
                %380 = sbr.rel (%p378) target = $region63
              $region60: #{ssley_forward.13} parent=55 // loop_body
                %v384 = vld [vmem:[%s382] sm:$0xff]
                %385 = vst [vmem:[%s383] sm:$0xff] %v384
                %v386 = vld [vmem:[%s382 + $0x8] sm:$0xff]
                %387 = vst [vmem:[%s383 + $0x10] sm:$0xff] %v386
              $region61: #{ssley_forward.13} parent=55 // loop_footer
                %s381 = sadd.s32 1, %s377
              $region62: #{ssley_forward.13} parent=55 // loop_footer_branch
                %376 = sbr.rel target = $region58
              $region63: #{ssley_forward.13} parent=55 // loop_exit
                _
            $region56: #{ssley_forward.13} parent=47 // pred_fallthru
              _
          $region48: #{ssley_forward.13} parent=43 // pred_fallthru
            _
          %404 = vnop
        $region44: #{ssley_forward.13} parent=31 // pred_fallthru
          _
      $region32: #{ssley_forward.13} parent=5 // pred_fallthru
        _
      %p405 = scmp.le.s32.totalorder 2, %s9
      // Predicated region
      $region79: #{ssley_forward.13} parent=5 // pred_check
        %p406 = pneg %p405
      $region80: #{ssley_forward.13} parent=5 // pred_check_branch
        %408 = sbr.rel (%p406) target = $region82
      $region81: #{ssley_forward.13} parent=5 // pred_region
        %s409 = ssub.s32 %s9, 2
        // Predicated region
        $region83: #{ssley_forward.13} parent=81 // pred_check
          %p410 = pneg %p130
        $region84: #{ssley_forward.13} parent=81 // pred_check_branch
          %412 = sbr.rel (%p410) target = $region86
        $region85: #{ssley_forward.13} parent=81 // pred_region
          %s413 = sand.u32 %s115, 1
          %s414 = sand.u32 %s115, 1
          %s415 = smul.addr %s414, 16
          %s416 = scalar_lea.vmem [#allocation3], %s415
        $region86: #{ssley_forward.13} parent=81 // pred_fallthru
          _
      $region82: #{ssley_forward.13} parent=5 // pred_fallthru
        _
    $region6: #{ssley_forward.13} parent=1 // loop_footer
      %s13 = sadd.s32 1, %s9
    $region7: #{ssley_forward.13} parent=1 // loop_footer_branch
      %8 = sbr.rel target = $region3
    $region8: #{ssley_forward.13} parent=1 // loop_exit
      _

// kernel: ssley_forward.14
$region0: #{ssley_forward.14}
  #allocation0 [shape = 'u32[]', space=smem, size = 0x4, offset = 0x4, fixed_abs, tag = 'smem constant byte address 0x4 - core index']
  #allocation1 [shape = 'u32[144,128]{1,0:T(1,128)}', space=vmem, size = 0x12000, scoped, tag = 'internal scratch']
  #allocation2 [shape = 'f32[16,256]{1,0:T(8,128)}', space=vmem, size = 0x4000, scoped, tag = 'scratch operand']
  %s0 = inlined_call_operand.vmem [shape: bf16[16,512], index: 0, kind: input, shape index: {}]
  %s1 = inlined_call_operand.vmem [shape: bf16[512,512], index: 1, kind: input, shape index: {}]
  %s2 = inlined_call_operand.vmem [shape: f32[1,512], index: 2, kind: input, shape index: {}]
  %s3 = inlined_call_operand.vmem [shape: f32[1,512], index: 3, kind: input, shape index: {}]
  %s4 = inlined_call_operand.vmem [shape: bf16[16,512], index: 4, kind: output, shape index: {}]
  %s5 = sld [smem:[#allocation0]]
  $region167: #{ssley_forward.14} parent=0
    _
  %s7 = ssub.s32 1, %s5
  %s8 = scalar_select 0, %s7, %s5
  $region1: #{ssley_forward.14} parent=0
    #allocation3 [shape = 'u8[16384]{0}', space=vmem, size = 0x4000, scoped, tag = 'input window, operand 0']
    #allocation4 [shape = 'u8[262144]{0}', space=vmem, size = 0x40000, scoped, tag = 'input window, operand 1']
    #allocation5 [shape = 'u8[16384]{0}', space=vmem, size = 0x4000, scoped, tag = 'output window, operand 0']
    loop: start=0, step=1, limit=6
    $region2: #{ssley_forward.14} parent=1 // loop_pre_header
      _
    $region3: #{ssley_forward.14} parent=1 // loop_header
      %s10 = sphi 0, %s14
      %p11 = scmp.ge.s32.totalorder %s10, 6
      %s17 = sphi 0, %s29
      %s18 = sphi 0, %s25
      %s19 = sphi 0, %s17
      %s20 = sphi 0, %s18
      %s21 = sphi 0, %s19
      %s22 = sphi 0, %s20
      %s32 = sphi 0, %s34
      %s35 = sphi 0, %s32
      %s36 = sphi 0, %s35
      %s52 = sphi 0, %s36
      %s60 = sphi 0, %s62
      %s63 = sphi 0, %s60
      %s64 = sphi 0, %s63
      %s80 = sphi 0, %s64
      %s86 = sphi 0, %s88
      %s89 = sphi 0, %s86
      %s90 = sphi 0, %s89
      %s106 = sphi 0, %s90
      %s112 = sphi 0, %s114
      %s115 = sphi 0, %s112
      %s116 = sphi 0, %s115
      %s132 = sphi 0, %s116
      %s138 = sphi 0, %s140
      %s141 = sphi 0, %s138
      %s142 = sphi 0, %s141
      %s158 = sphi 0, %s142
    $region4: #{ssley_forward.14} parent=1 // loop_header_branch
      %13 = sbr.rel (%p11) target = $region8
    $region5: #{ssley_forward.14} parent=1 // loop_body
      %s15 = ssub.s32 %s10, 1
      %s16 = ssub.s32 %s10, 2
      %s23 = sadd.s32 1, %s18
      %p24 = scmp.ge.s32.totalorder %s23, 2
      %s25 = scalar_select %p24, 0, %s23
      %s26 = sadd.s32 1, %s17
      %s27 = scalar_select %p24, %s26, %s17
      %p28 = scmp.ge.s32.totalorder %s27, 2
      %s29 = scalar_select %p28, 0, %s27
      %s30 = ssub.s32 %s18, %s25
      %p31 = scmp.eq.s32.totalorder %s30, 0
      %s33 = sadd.s32 %s32, 1
      %s34 = scalar_select %p31, %s32, %s33
      %p37 = pneg %p31
      %p38 = scmp.eq.s32.totalorder %s10, 3
      %p39 = por %p37, %p38
      %p40 = scmp.ne.s32.totalorder %s32, %s35
      %p41 = scmp.eq.s32.totalorder %s10, 0
      %p42 = por %p40, %p41
      %p43 = scmp.ne.s32.totalorder %s32, %s35
      %p44 = scmp.eq.s32.totalorder %s15, 3
      %p45 = por %p43, %p44
      %p46 = scmp.ne.s32.totalorder %s35, %s36
      %p47 = scmp.eq.s32.totalorder %s15, 0
      %p48 = por %p46, %p47
      %p49 = scmp.ne.s32.totalorder %s35, %s36
      %p50 = scmp.eq.s32.totalorder %s16, 3
      %p51 = por %p49, %p50
      %p53 = scmp.ne.s32.totalorder %s36, %s52
      %p54 = scmp.eq.s32.totalorder %s16, 0
      %p55 = por %p53, %p54
      %s56 = ssub.s32 %s18, %s25
      %s57 = ssub.s32 %s17, %s29
      %s58 = sor.u32 %s56, %s57
      %p59 = scmp.eq.s32.totalorder %s58, 0
      %s61 = sadd.s32 %s60, 1
      %s62 = scalar_select %p59, %s60, %s61
      %p65 = pneg %p59
      %p66 = scmp.eq.s32.totalorder %s10, 3
      %p67 = por %p65, %p66
      %p68 = scmp.ne.s32.totalorder %s60, %s63
      %p69 = scmp.eq.s32.totalorder %s10, 0
      %p70 = por %p68, %p69
      %p71 = scmp.ne.s32.totalorder %s60, %s63
      %p72 = scmp.eq.s32.totalorder %s15, 3
      %p73 = por %p71, %p72
      %p74 = scmp.ne.s32.totalorder %s63, %s64
      %p75 = scmp.eq.s32.totalorder %s15, 0
      %p76 = por %p74, %p75
      %p77 = scmp.ne.s32.totalorder %s63, %s64
      %p78 = scmp.eq.s32.totalorder %s16, 3
      %p79 = por %p77, %p78
      %p81 = scmp.ne.s32.totalorder %s64, %s80
      %p82 = scmp.eq.s32.totalorder %s16, 0
      %p83 = por %p81, %p82
      %s84 = ssub.s32 %s17, %s29
      %p85 = scmp.eq.s32.totalorder %s84, 0
      %s87 = sadd.s32 %s86, 1
      %s88 = scalar_select %p85, %s86, %s87
      %p91 = pneg %p85
      %p92 = scmp.eq.s32.totalorder %s10, 3
      %p93 = por %p91, %p92
      %p94 = scmp.ne.s32.totalorder %s86, %s89
      %p95 = scmp.eq.s32.totalorder %s10, 0
      %p96 = por %p94, %p95
      %p97 = scmp.ne.s32.totalorder %s86, %s89
      %p98 = scmp.eq.s32.totalorder %s15, 3
      %p99 = por %p97, %p98
      %p100 = scmp.ne.s32.totalorder %s89, %s90
      %p101 = scmp.eq.s32.totalorder %s15, 0
      %p102 = por %p100, %p101
      %p103 = scmp.ne.s32.totalorder %s89, %s90
      %p104 = scmp.eq.s32.totalorder %s16, 3
      %p105 = por %p103, %p104
      %p107 = scmp.ne.s32.totalorder %s90, %s106
      %p108 = scmp.eq.s32.totalorder %s16, 0
      %p109 = por %p107, %p108
      %s110 = ssub.s32 %s17, %s29
      %p111 = scmp.eq.s32.totalorder %s110, 0
      %s113 = sadd.s32 %s112, 1
      %s114 = scalar_select %p111, %s112, %s113
      %p117 = pneg %p111
      %p118 = scmp.eq.s32.totalorder %s10, 3
      %p119 = por %p117, %p118
      %p120 = scmp.ne.s32.totalorder %s112, %s115
      %p121 = scmp.eq.s32.totalorder %s10, 0
      %p122 = por %p120, %p121
      %p123 = scmp.ne.s32.totalorder %s112, %s115
      %p124 = scmp.eq.s32.totalorder %s15, 3
      %p125 = por %p123, %p124
      %p126 = scmp.ne.s32.totalorder %s115, %s116
      %p127 = scmp.eq.s32.totalorder %s15, 0
      %p128 = por %p126, %p127
      %p129 = scmp.ne.s32.totalorder %s115, %s116
      %p130 = scmp.eq.s32.totalorder %s16, 3
      %p131 = por %p129, %p130
      %p133 = scmp.ne.s32.totalorder %s116, %s132
      %p134 = scmp.eq.s32.totalorder %s16, 0
      %p135 = por %p133, %p134
      %s136 = ssub.s32 %s17, %s29
      %p137 = scmp.eq.s32.totalorder %s136, 0
      %s139 = sadd.s32 %s138, 1
      %s140 = scalar_select %p137, %s138, %s139
      %p143 = pneg %p137
      %p144 = scmp.eq.s32.totalorder %s10, 3
      %p145 = por %p143, %p144
      %p146 = scmp.ne.s32.totalorder %s138, %s141
      %p147 = scmp.eq.s32.totalorder %s10, 0
      %p148 = por %p146, %p147
      %p149 = scmp.ne.s32.totalorder %s138, %s141
      %p150 = scmp.eq.s32.totalorder %s15, 3
      %p151 = por %p149, %p150
      %p152 = scmp.ne.s32.totalorder %s141, %s142
      %p153 = scmp.eq.s32.totalorder %s15, 0
      %p154 = por %p152, %p153
      %p155 = scmp.ne.s32.totalorder %s141, %s142
      %p156 = scmp.eq.s32.totalorder %s16, 3
      %p157 = por %p155, %p156
      %p159 = scmp.ne.s32.totalorder %s142, %s158
      %p160 = scmp.eq.s32.totalorder %s16, 0
      %p161 = por %p159, %p160
      %p162 = scmp.le.s32.totalorder 1, %s10
      %p163 = scmp.lt.s32.totalorder %s10, 5
      %p164 = pnand %p162, %p163
      %p165 = pneg %p164
      // Predicated region
      $region9: #{ssley_forward.14} parent=5 // pred_check
        _
      $region10: #{ssley_forward.14} parent=5 // pred_check_branch
        %167 = sbr.rel (%p164) target = $region12
      $region11: #{ssley_forward.14} parent=5 // pred_region
        %s168 = ssub.s32 %s10, 1
      $region12: #{ssley_forward.14} parent=5 // pred_fallthru
        _
      %p169 = scmp.lt.s32.totalorder %s10, 4
      // Predicated region
      $region13: #{ssley_forward.14} parent=5 // pred_check
        %p170 = pneg %p169
      $region14: #{ssley_forward.14} parent=5 // pred_check_branch
        %172 = sbr.rel (%p170) target = $region16
      $region15: #{ssley_forward.14} parent=5 // pred_region
        // Predicated region
        $region17: #{ssley_forward.14} parent=15 // pred_check
          %p173 = pneg %p42
        $region18: #{ssley_forward.14} parent=15 // pred_check_branch
          %175 = sbr.rel (%p173) target = $region20
        $region19: #{ssley_forward.14} parent=15 // pred_region
          %s176 = sand.u32 %s32, 1
          %s177 = sand.u32 %s32, 1
          %s178 = smul.addr %s177, 16
          %s179 = scalar_lea.vmem [#allocation3], %s178
          %s180 = smul.u32 2, %s18
          %s181 = smul.addr %s180, 4
          %s182 = scalar_lea.vmem %s0, %s181
          // Predicated region
          $region21: #{ssley_forward.14} parent=19 // pred_check
            _
          $region22: #{ssley_forward.14} parent=19 // pred_check_branch
            %184 = sbr.rel (0) target = $region24
          $region23: #{ssley_forward.14} parent=19 // pred_region
            // Predicated region
            $region25: #{ssley_forward.14} parent=23 // pred_check
              _
            $region26: #{ssley_forward.14} parent=23 // pred_check_branch
              %186 = sbr.rel (0) target = $region28
            $region27: #{ssley_forward.14} parent=23 // pred_region
              // Predicated region
              $region40: #{ssley_forward.14} parent=27 // pred_check
                _
              $region41: #{ssley_forward.14} parent=27 // pred_check_branch
                %203 = sbr.rel (0) target = $region43
              $region42: #{ssley_forward.14} parent=27 // pred_region
                loop: start=0, step=1, limit=1
                $region44: #{ssley_forward.14} parent=42 // loop_pre_header
                  _
                $region45: #{ssley_forward.14} parent=42 // loop_header
                  %s205 = sphi 0, %s209
                  %p206 = scmp.ge.s32.totalorder %s205, 1
                  %s210 = sphi %s182, %s182
                  %s211 = sphi %s179, %s179
                $region46: #{ssley_forward.14} parent=42 // loop_header_branch
                  %208 = sbr.rel (%p206) target = $region50
                $region47: #{ssley_forward.14} parent=42 // loop_body
                  %v212 = vld [vmem:[%s210] sm:$0xff]
                  %213 = vst [vmem:[%s211] sm:$0xff] %v212
                  %v214 = vld [vmem:[%s210 + $0x10] sm:$0xff]
                  %215 = vst [vmem:[%s211 + $0x8] sm:$0xff] %v214
                $region48: #{ssley_forward.14} parent=42 // loop_footer
                  %s209 = sadd.s32 1, %s205
                $region49: #{ssley_forward.14} parent=42 // loop_footer_branch
                  %204 = sbr.rel target = $region45
                $region50: #{ssley_forward.14} parent=42 // loop_exit
                  _
              $region43: #{ssley_forward.14} parent=27 // pred_fallthru
                _
              // Predicated region
              $region51: #{ssley_forward.14} parent=27 // pred_check
                _
              $region52: #{ssley_forward.14} parent=27 // pred_check_branch
                %217 = sbr.rel target = $region54
              $region53: #{ssley_forward.14} parent=27 // pred_region
                _
              $region54: #{ssley_forward.14} parent=27 // pred_fallthru
                _
            $region28: #{ssley_forward.14} parent=23 // pred_fallthru
              _
            // Predicated region
            $region29: #{ssley_forward.14} parent=23 // pred_check
              _
            $region30: #{ssley_forward.14} parent=23 // pred_check_branch
              %188 = sbr.rel target = $region32
            $region31: #{ssley_forward.14} parent=23 // pred_region
              loop: start=0, step=1, limit=1
              $region33: #{ssley_forward.14} parent=31 // loop_pre_header
                _
              $region34: #{ssley_forward.14} parent=31 // loop_header
                %s191 = sphi 0, %s195
                %p192 = scmp.ge.s32.totalorder %s191, 1
                %s196 = sphi %s182, %s182
                %s197 = sphi %s179, %s179
              $region35: #{ssley_forward.14} parent=31 // loop_header_branch
                %194 = sbr.rel (%p192) target = $region39
              $region36: #{ssley_forward.14} parent=31 // loop_body
                %v198 = vld [vmem:[%s196] sm:$0xff]
                %199 = vst [vmem:[%s197] sm:$0xff] %v198
                %v200 = vld [vmem:[%s196 + $0x10] sm:$0xff]
                %201 = vst [vmem:[%s197 + $0x8] sm:$0xff] %v200
              $region37: #{ssley_forward.14} parent=31 // loop_footer
                %s195 = sadd.s32 1, %s191
              $region38: #{ssley_forward.14} parent=31 // loop_footer_branch
                %190 = sbr.rel target = $region34
              $region39: #{ssley_forward.14} parent=31 // loop_exit
                _
            $region32: #{ssley_forward.14} parent=23 // pred_fallthru
              _
          $region24: #{ssley_forward.14} parent=19 // pred_fallthru
            _
          %218 = vnop
        $region20: #{ssley_forward.14} parent=15 // pred_fallthru
          _
        // Predicated region
        $region55: #{ssley_forward.14} parent=15 // pred_check
          %p219 = pneg %p70
        $region56: #{ssley_forward.14} parent=15 // pred_check_branch
          %221 = sbr.rel (%p219) target = $region58
        $region57: #{ssley_forward.14} parent=15 // pred_region
          %s222 = sand.u32 %s60, 1
          %s223 = sand.u32 %s60, 1
          %s224 = smul.addr %s223, 256
          %s225 = scalar_lea.vmem [#allocation4], %s224
          %s226 = smul.u32 32, %s18
          %s227 = smul.u32 2, %s17
          %s228 = smul.addr %s226, 4
          %s229 = sadd.s32 %s227, %s228
          %s230 = smul.addr %s229, 4
          %s231 = scalar_lea.vmem %s1, %s230
          // Predicated region
          $region59: #{ssley_forward.14} parent=57 // pred_check
            _
          $region60: #{ssley_forward.14} parent=57 // pred_check_branch
            %233 = sbr.rel (0) target = $region62
          $region61: #{ssley_forward.14} parent=57 // pred_region
            // Predicated region
            $region63: #{ssley_forward.14} parent=61 // pred_check
              _
            $region64: #{ssley_forward.14} parent=61 // pred_check_branch
              %235 = sbr.rel (0) target = $region66
            $region65: #{ssley_forward.14} parent=61 // pred_region
              // Predicated region
              $region78: #{ssley_forward.14} parent=65 // pred_check
                _
              $region79: #{ssley_forward.14} parent=65 // pred_check_branch
                %312 = sbr.rel (0) target = $region81
              $region80: #{ssley_forward.14} parent=65 // pred_region
                loop: start=0, step=1, limit=1
                $region82: #{ssley_forward.14} parent=80 // loop_pre_header
                  _
                $region83: #{ssley_forward.14} parent=80 // loop_header
                  %s314 = sphi 0, %s318
                  %p315 = scmp.ge.s32.totalorder %s314, 1
                  %s319 = sphi %s231, %s231
                  %s320 = sphi %s225, %s225
                $region84: #{ssley_forward.14} parent=80 // loop_header_branch
                  %317 = sbr.rel (%p315) target = $region88
                $region85: #{ssley_forward.14} parent=80 // loop_body
                  %v321 = vld [vmem:[%s319] sm:$0xff]
                  %322 = vst [vmem:[%s320] sm:$0xff] %v321
                  %v323 = vld [vmem:[%s319 + $0x10] sm:$0xff]
                  %324 = vst [vmem:[%s320 + $0x8] sm:$0xff] %v323
                  %v325 = vld [vmem:[%s319 + $0x20] sm:$0xff]
                  %326 = vst [vmem:[%s320 + $0x10] sm:$0xff] %v325
                  %v327 = vld [vmem:[%s319 + $0x30] sm:$0xff]
                  %328 = vst [vmem:[%s320 + $0x18] sm:$0xff] %v327
                  %v329 = vld [vmem:[%s319 + $0x40] sm:$0xff]
                  %330 = vst [vmem:[%s320 + $0x20] sm:$0xff] %v329
                  %v331 = vld [vmem:[%s319 + $0x50] sm:$0xff]
                  %332 = vst [vmem:[%s320 + $0x28] sm:$0xff] %v331
                  %v333 = vld [vmem:[%s319 + $0x60] sm:$0xff]
                  %334 = vst [vmem:[%s320 + $0x30] sm:$0xff] %v333
                  %v335 = vld [vmem:[%s319 + $0x70] sm:$0xff]
                  %336 = vst [vmem:[%s320 + $0x38] sm:$0xff] %v335
                  %v337 = vld [vmem:[%s319 + $0x80] sm:$0xff]
                  %338 = vst [vmem:[%s320 + $0x40] sm:$0xff] %v337
                  %v339 = vld [vmem:[%s319 + $0x90] sm:$0xff]
                  %340 = vst [vmem:[%s320 + $0x48] sm:$0xff] %v339
                  %v341 = vld [vmem:[%s319 + $0xa0] sm:$0xff]
                  %342 = vst [vmem:[%s320 + $0x50] sm:$0xff] %v341
                  %v343 = vld [vmem:[%s319 + $0xb0] sm:$0xff]
                  %344 = vst [vmem:[%s320 + $0x58] sm:$0xff] %v343
                  %v345 = vld [vmem:[%s319 + $0xc0] sm:$0xff]
                  %346 = vst [vmem:[%s320 + $0x60] sm:$0xff] %v345
                  %v347 = vld [vmem:[%s319 + $0xd0] sm:$0xff]
                  %348 = vst [vmem:[%s320 + $0x68] sm:$0xff] %v347
                  %v349 = vld [vmem:[%s319 + $0xe0] sm:$0xff]
                  %350 = vst [vmem:[%s320 + $0x70] sm:$0xff] %v349
                  %v351 = vld [vmem:[%s319 + $0xf0] sm:$0xff]
                  %352 = vst [vmem:[%s320 + $0x78] sm:$0xff] %v351
                  %v353 = vld [vmem:[%s319 + $0x100] sm:$0xff]
                  %354 = vst [vmem:[%s320 + $0x80] sm:$0xff] %v353
                  %v355 = vld [vmem:[%s319 + $0x110] sm:$0xff]
                  %356 = vst [vmem:[%s320 + $0x88] sm:$0xff] %v355
                  %v357 = vld [vmem:[%s319 + $0x120] sm:$0xff]
                  %358 = vst [vmem:[%s320 + $0x90] sm:$0xff] %v357
                  %v359 = vld [vmem:[%s319 + $0x130] sm:$0xff]
                  %360 = vst [vmem:[%s320 + $0x98] sm:$0xff] %v359
                  %v361 = vld [vmem:[%s319 + $0x140] sm:$0xff]
                  %362 = vst [vmem:[%s320 + $0xa0] sm:$0xff] %v361
                  %v363 = vld [vmem:[%s319 + $0x150] sm:$0xff]
                  %364 = vst [vmem:[%s320 + $0xa8] sm:$0xff] %v363
                  %v365 = vld [vmem:[%s319 + $0x160] sm:$0xff]
                  %366 = vst [vmem:[%s320 + $0xb0] sm:$0xff] %v365
                  %v367 = vld [vmem:[%s319 + $0x170] sm:$0xff]
                  %368 = vst [vmem:[%s320 + $0xb8] sm:$0xff] %v367
                  %v369 = vld [vmem:[%s319 + $0x180] sm:$0xff]
                  %370 = vst [vmem:[%s320 + $0xc0] sm:$0xff] %v369
                  %v371 = vld [vmem:[%s319 + $0x190] sm:$0xff]
                  %372 = vst [vmem:[%s320 + $0xc8] sm:$0xff] %v371
                  %v373 = vld [vmem:[%s319 + $0x1a0] sm:$0xff]
                  %374 = vst [vmem:[%s320 + $0xd0] sm:$0xff] %v373
                  %v375 = vld [vmem:[%s319 + $0x1b0] sm:$0xff]
                  %376 = vst [vmem:[%s320 + $0xd8] sm:$0xff] %v375
                  %v377 = vld [vmem:[%s319 + $0x1c0] sm:$0xff]
                  %378 = vst [vmem:[%s320 + $0xe0] sm:$0xff] %v377
                  %v379 = vld [vmem:[%s319 + $0x1d0] sm:$0xff]
                  %380 = vst [vmem:[%s320 + $0xe8] sm:$0xff] %v379
                  %v381 = vld [vmem:[%s319 + $0x1e0] sm:$0xff]
                  %382 = vst [vmem:[%s320 + $0xf0] sm:$0xff] %v381
                  %v383 = vld [vmem:[%s319 + $0x1f0] sm:$0xff]
                  %384 = vst [vmem:[%s320 + $0xf8] sm:$0xff] %v383
                $region86: #{ssley_forward.14} parent=80 // loop_footer
                  %s318 = sadd.s32 1, %s314
                $region87: #{ssley_forward.14} parent=80 // loop_footer_branch
                  %313 = sbr.rel target = $region83
                $region88: #{ssley_forward.14} parent=80 // loop_exit
                  _
              $region81: #{ssley_forward.14} parent=65 // pred_fallthru
                _
              // Predicated region
              $region89: #{ssley_forward.14} parent=65 // pred_check
                _
              $region90: #{ssley_forward.14} parent=65 // pred_check_branch
                %386 = sbr.rel target = $region92
              $region91: #{ssley_forward.14} parent=65 // pred_region
                _
              $region92: #{ssley_forward.14} parent=65 // pred_fallthru
                _
            $region66: #{ssley_forward.14} parent=61 // pred_fallthru
              _
            // Predicated region
            $region67: #{ssley_forward.14} parent=61 // pred_check
              _
            $region68: #{ssley_forward.14} parent=61 // pred_check_branch
              %237 = sbr.rel target = $region70
            $region69: #{ssley_forward.14} parent=61 // pred_region
              loop: start=0, step=1, limit=1
              $region71: #{ssley_forward.14} parent=69 // loop_pre_header
                _
              $region72: #{ssley_forward.14} parent=69 // loop_header
                %s240 = sphi 0, %s244
                %p241 = scmp.ge.s32.totalorder %s240, 1
                %s245 = sphi %s231, %s231
                %s246 = sphi %s225, %s225
              $region73: #{ssley_forward.14} parent=69 // loop_header_branch
                %243 = sbr.rel (%p241) target = $region77
              $region74: #{ssley_forward.14} parent=69 // loop_body
                %v247 = vld [vmem:[%s245] sm:$0xff]
                %248 = vst [vmem:[%s246] sm:$0xff] %v247
                %v249 = vld [vmem:[%s245 + $0x10] sm:$0xff]
                %250 = vst [vmem:[%s246 + $0x8] sm:$0xff] %v249
                %v251 = vld [vmem:[%s245 + $0x20] sm:$0xff]
                %252 = vst [vmem:[%s246 + $0x10] sm:$0xff] %v251
                %v253 = vld [vmem:[%s245 + $0x30] sm:$0xff]
                %254 = vst [vmem:[%s246 + $0x18] sm:$0xff] %v253
                %v255 = vld [vmem:[%s245 + $0x40] sm:$0xff]
                %256 = vst [vmem:[%s246 + $0x20] sm:$0xff] %v255
                %v257 = vld [vmem:[%s245 + $0x50] sm:$0xff]
                %258 = vst [vmem:[%s246 + $0x28] sm:$0xff] %v257
                %v259 = vld [vmem:[%s245 + $0x60] sm:$0xff]
                %260 = vst [vmem:[%s246 + $0x30] sm:$0xff] %v259
                %v261 = vld [vmem:[%s245 + $0x70] sm:$0xff]
                %262 = vst [vmem:[%s246 + $0x38] sm:$0xff] %v261
                %v263 = vld [vmem:[%s245 + $0x80] sm:$0xff]
                %264 = vst [vmem:[%s246 + $0x40] sm:$0xff] %v263
                %v265 = vld [vmem:[%s245 + $0x90] sm:$0xff]
                %266 = vst [vmem:[%s246 + $0x48] sm:$0xff] %v265
                %v267 = vld [vmem:[%s245 + $0xa0] sm:$0xff]
                %268 = vst [vmem:[%s246 + $0x50] sm:$0xff] %v267
                %v269 = vld [vmem:[%s245 + $0xb0] sm:$0xff]
                %270 = vst [vmem:[%s246 + $0x58] sm:$0xff] %v269
                %v271 = vld [vmem:[%s245 + $0xc0] sm:$0xff]
                %272 = vst [vmem:[%s246 + $0x60] sm:$0xff] %v271
                %v273 = vld [vmem:[%s245 + $0xd0] sm:$0xff]
                %274 = vst [vmem:[%s246 + $0x68] sm:$0xff] %v273
                %v275 = vld [vmem:[%s245 + $0xe0] sm:$0xff]
                %276 = vst [vmem:[%s246 + $0x70] sm:$0xff] %v275
                %v277 = vld [vmem:[%s245 + $0xf0] sm:$0xff]
                %278 = vst [vmem:[%s246 + $0x78] sm:$0xff] %v277
                %v279 = vld [vmem:[%s245 + $0x100] sm:$0xff]
                %280 = vst [vmem:[%s246 + $0x80] sm:$0xff] %v279
                %v281 = vld [vmem:[%s245 + $0x110] sm:$0xff]
                %282 = vst [vmem:[%s246 + $0x88] sm:$0xff] %v281
                %v283 = vld [vmem:[%s245 + $0x120] sm:$0xff]
                %284 = vst [vmem:[%s246 + $0x90] sm:$0xff] %v283
                %v285 = vld [vmem:[%s245 + $0x130] sm:$0xff]
                %286 = vst [vmem:[%s246 + $0x98] sm:$0xff] %v285
                %v287 = vld [vmem:[%s245 + $0x140] sm:$0xff]
                %288 = vst [vmem:[%s246 + $0xa0] sm:$0xff] %v287
                %v289 = vld [vmem:[%s245 + $0x150] sm:$0xff]
                %290 = vst [vmem:[%s246 + $0xa8] sm:$0xff] %v289
                %v291 = vld [vmem:[%s245 + $0x160] sm:$0xff]
                %292 = vst [vmem:[%s246 + $0xb0] sm:$0xff] %v291
                %v293 = vld [vmem:[%s245 + $0x170] sm:$0xff]
                %294 = vst [vmem:[%s246 + $0xb8] sm:$0xff] %v293
                %v295 = vld [vmem:[%s245 + $0x180] sm:$0xff]
                %296 = vst [vmem:[%s246 + $0xc0] sm:$0xff] %v295
                %v297 = vld [vmem:[%s245 + $0x190] sm:$0xff]
                %298 = vst [vmem:[%s246 + $0xc8] sm:$0xff] %v297
                %v299 = vld [vmem:[%s245 + $0x1a0] sm:$0xff]
                %300 = vst [vmem:[%s246 + $0xd0] sm:$0xff] %v299
                %v301 = vld [vmem:[%s245 + $0x1b0] sm:$0xff]
                %302 = vst [vmem:[%s246 + $0xd8] sm:$0xff] %v301
                %v303 = vld [vmem:[%s245 + $0x1c0] sm:$0xff]
                %304 = vst [vmem:[%s246 + $0xe0] sm:$0xff] %v303
                %v305 = vld [vmem:[%s245 + $0x1d0] sm:$0xff]
                %306 = vst [vmem:[%s246 + $0xe8] sm:$0xff] %v305
                %v307 = vld [vmem:[%s245 + $0x1e0] sm:$0xff]
                %308 = vst [vmem:[%s246 + $0xf0] sm:$0xff] %v307
                %v309 = vld [vmem:[%s245 + $0x1f0] sm:$0xff]
                %310 = vst [vmem:[%s246 + $0xf8] sm:$0xff] %v309
              $region75: #{ssley_forward.14} parent=69 // loop_footer
                %s244 = sadd.s32 1, %s240
              $region76: #{ssley_forward.14} parent=69 // loop_footer_branch
                %239 = sbr.rel target = $region72
              $region77: #{ssley_forward.14} parent=69 // loop_exit
                _
            $region70: #{ssley_forward.14} parent=61 // pred_fallthru
              _
          $region62: #{ssley_forward.14} parent=57 // pred_fallthru
            _
          %387 = vnop
        $region58: #{ssley_forward.14} parent=15 // pred_fallthru
          _
        // Predicated region
        $region93: #{ssley_forward.14} parent=15 // pred_check
          %p388 = pneg %p96
        $region94: #{ssley_forward.14} parent=15 // pred_check_branch
          %390 = sbr.rel (%p388) target = $region96
        $region95: #{ssley_forward.14} parent=15 // pred_region
          %s391 = smul.u32 2, %s17
          %p392 = scmp.lt.s32.totalorder %s391, 3
          %s393 = scalar_select %p392, %s391, 3
          %s394 = scalar_lea.vmem %s2, %s393
          %s395 = smul.u32 2, %s17
        $region96: #{ssley_forward.14} parent=15 // pred_fallthru
          _
        // Predicated region
        $region97: #{ssley_forward.14} parent=15 // pred_check
          %p396 = pneg %p122
        $region98: #{ssley_forward.14} parent=15 // pred_check_branch
          %398 = sbr.rel (%p396) target = $region100
        $region99: #{ssley_forward.14} parent=15 // pred_region
          %s399 = smul.u32 2, %s17
          %p400 = scmp.lt.s32.totalorder %s399, 3
          %s401 = scalar_select %p400, %s399, 3
          %s402 = scalar_lea.vmem %s3, %s401
          %s403 = smul.u32 2, %s17
        $region100: #{ssley_forward.14} parent=15 // pred_fallthru
          _
      $region16: #{ssley_forward.14} parent=5 // pred_fallthru
        _
      %p404 = scmp.le.s32.totalorder 1, %s10
      %p405 = scmp.lt.s32.totalorder %s10, 5
      %p406 = pnand %p404, %p405
      %p407 = pneg %p406
      // Predicated region
      $region101: #{ssley_forward.14} parent=5 // pred_check
        _
      $region102: #{ssley_forward.14} parent=5 // pred_check_branch
        %409 = sbr.rel (%p406) target = $region104
      $region103: #{ssley_forward.14} parent=5 // pred_region
        %s410 = ssub.s32 %s10, 1
        %s411 = sand.u32 %s35, 1
        %s412 = sand.u32 %s35, 1
        %s413 = smul.addr %s412, 16
        %s414 = scalar_lea.vmem [#allocation3], %s413
        // Predicated region
        $region105: #{ssley_forward.14} parent=103 // pred_check
          %p415 = pneg %p48
        $region106: #{ssley_forward.14} parent=103 // pred_check_branch
          %417 = sbr.rel (%p415) target = $region108
        $region107: #{ssley_forward.14} parent=103 // pred_region
          _
        $region108: #{ssley_forward.14} parent=103 // pred_fallthru
          _
        %s418 = sand.u32 %s63, 1
        %s419 = sand.u32 %s63, 1
        %s420 = smul.addr %s419, 256
        %s421 = scalar_lea.vmem [#allocation4], %s420
        // Predicated region
        $region109: #{ssley_forward.14} parent=103 // pred_check
          %p422 = pneg %p76
        $region110: #{ssley_forward.14} parent=103 // pred_check_branch
          %424 = sbr.rel (%p422) target = $region112
        $region111: #{ssley_forward.14} parent=103 // pred_region
          _
        $region112: #{ssley_forward.14} parent=103 // pred_fallthru
          _
        %s425 = sand.u32 %s35, 1
        %s426 = sand.u32 %s35, 1
        %s427 = smul.addr %s426, 16
        %s428 = scalar_lea.vmem [#allocation3], %s427
        %p429 = pneg %p48
        %p430 = pneg %p45
        %s431 = sand.u32 %s63, 1
        %s432 = sand.u32 %s63, 1
        %s433 = smul.addr %s432, 256
        %s434 = scalar_lea.vmem [#allocation4], %s433
        %p435 = pneg %p76
        %p436 = pneg %p73
        %s437 = smul.u32 2, %s19
        %p438 = scmp.lt.s32.totalorder %s437, 3
        %s439 = scalar_select %p438, %s437, 3
        %s440 = scalar_lea.vmem %s2, %s439
        %p441 = pneg %p102
        %p442 = pneg %p99
        %s443 = smul.u32 2, %s19
        %p444 = scmp.lt.s32.totalorder %s443, 3
        %s445 = scalar_select %p444, %s443, 3
        %s446 = scalar_lea.vmem %s3, %s445
        %p447 = pneg %p128
        %p448 = pneg %p125
        %p449 = pneg %p154
        %p450 = pneg %p151
        %s451 = sand.u32 %s141, 1
        %s452 = sand.u32 %s141, 1
        %s453 = smul.addr %s452, 16
        %s454 = scalar_lea.vmem [#allocation5], %s453
        %s455 = smul.u32 2, %s20
        %s456 = smul.u32 32, %s20
        %s457 = smul.u32 2, %s19
        %s458 = smul.u32 2, %s19
        %p459 = scmp.lt.s32.totalorder %s458, 3
        %s460 = scalar_select %p459, %s458, 3
        %s461 = scalar_lea.vmem %s2, %s460
        %s462 = smul.u32 2, %s19
        %s463 = smul.u32 2, %s19
        %p464 = scmp.lt.s32.totalorder %s463, 3
        %s465 = scalar_select %p464, %s463, 3
        %s466 = scalar_lea.vmem %s3, %s465
        %s467 = smul.u32 2, %s19
        %s468 = smul.u32 2, %s19
        %p469 = scmp.eq.s32.totalorder %s20, 0
        // Predicated region
        $region113: #{ssley_forward.14} parent=103 // pred_check
          %p470 = pneg %p469
        $region114: #{ssley_forward.14} parent=103 // pred_check_branch
          %472 = sbr.rel (%p470) target = $region116
        $region115: #{ssley_forward.14} parent=103 // pred_region
          %473 = vst [vmem:[#allocation2] sm:$0xff] 0.0
          %474 = vst [vmem:[#allocation2 + $0x8] sm:$0xff] 0.0
          %475 = vst [vmem:[#allocation2 + $0x10] sm:$0xff] 0.0
          %476 = vst [vmem:[#allocation2 + $0x18] sm:$0xff] 0.0
        $region116: #{ssley_forward.14} parent=103 // pred_fallthru
          _
        %v477 = vld [vmem:[#allocation2] sm:$0xff]
        %v478 = vld [vmem:[#allocation2 + $0x8] sm:$0xff]
        %v479 = vld [vmem:[#allocation2 + $0x10] sm:$0xff]
        %v480 = vld [vmem:[#allocation2 + $0x18] sm:$0xff]
        %v481 = vld [vmem:[%s414] sm:$0xff]
        %v482 = vld [vmem:[%s414 + $0x8] sm:$0xff]
        %v483 = vld [vmem:[%s421] sm:$0xff]
        %v484 = vld [vmem:[%s421 + $0x8] sm:$0xff]
        %v485 = vld [vmem:[%s421 + $0x10] sm:$0xff]
        %v486 = vld [vmem:[%s421 + $0x18] sm:$0xff]
        %v487 = vld [vmem:[%s421 + $0x20] sm:$0xff]
        %v488 = vld [vmem:[%s421 + $0x28] sm:$0xff]
        %v489 = vld [vmem:[%s421 + $0x30] sm:$0xff]
        %v490 = vld [vmem:[%s421 + $0x38] sm:$0xff]
        %v491 = vld [vmem:[%s421 + $0x40] sm:$0xff]
        %v492 = vld [vmem:[%s421 + $0x48] sm:$0xff]
        %v493 = vld [vmem:[%s421 + $0x50] sm:$0xff]
        %v494 = vld [vmem:[%s421 + $0x58] sm:$0xff]
        %v495 = vld [vmem:[%s421 + $0x60] sm:$0xff]
        %v496 = vld [vmem:[%s421 + $0x68] sm:$0xff]
        %v497 = vld [vmem:[%s421 + $0x70] sm:$0xff]
        %v498 = vld [vmem:[%s421 + $0x78] sm:$0xff]
        %v499 = vld [vmem:[%s421 + $0x80] sm:$0xff]
        %v500 = vld [vmem:[%s421 + $0x88] sm:$0xff]
        %v501 = vld [vmem:[%s421 + $0x90] sm:$0xff]
        %v502 = vld [vmem:[%s421 + $0x98] sm:$0xff]
        %v503 = vld [vmem:[%s421 + $0xa0] sm:$0xff]
        %v504 = vld [vmem:[%s421 + $0xa8] sm:$0xff]
        %v505 = vld [vmem:[%s421 + $0xb0] sm:$0xff]
        %v506 = vld [vmem:[%s421 + $0xb8] sm:$0xff]
        %v507 = vld [vmem:[%s421 + $0xc0] sm:$0xff]
        %v508 = vld [vmem:[%s421 + $0xc8] sm:$0xff]
        %v509 = vld [vmem:[%s421 + $0xd0] sm:$0xff]
        %v510 = vld [vmem:[%s421 + $0xd8] sm:$0xff]
        %v511 = vld [vmem:[%s421 + $0xe0] sm:$0xff]
        %v512 = vld [vmem:[%s421 + $0xe8] sm:$0xff]
        %v513 = vld [vmem:[%s421 + $0xf0] sm:$0xff]
        %v514 = vld [vmem:[%s421 + $0xf8] sm:$0xff]
        %v517 = vunpack.c.l.b16 %v481
        %v518 = vunpack.c.h.b16 %v481
        %v519 = vunpack.c.l.b16 %v482
        %v520 = vunpack.c.h.b16 %v482
        %v521 = vpack.c.b16 %v519, %v517
        %v522 = vpack.c.b16 %v520, %v518
        %v557 = vunpack.c.l.b16 %v483
        %v558 = vunpack.c.h.b16 %v483
        %v559 = vunpack.c.l.b16 %v484
        %v560 = vunpack.c.h.b16 %v484
        %v561 = vunpack.c.l.b16 %v485
        %v562 = vunpack.c.h.b16 %v485
        %v563 = vunpack.c.l.b16 %v486
        %v564 = vunpack.c.h.b16 %v486
        %v565 = vunpack.c.l.b16 %v487
        %v566 = vunpack.c.h.b16 %v487
        %v567 = vunpack.c.l.b16 %v488
        %v568 = vunpack.c.h.b16 %v488
        %v569 = vunpack.c.l.b16 %v489
        %v570 = vunpack.c.h.b16 %v489
        %v571 = vunpack.c.l.b16 %v490
        %v572 = vunpack.c.h.b16 %v490
        %v573 = vunpack.c.l.b16 %v491
        %v574 = vunpack.c.h.b16 %v491
        %v575 = vunpack.c.l.b16 %v492
        %v576 = vunpack.c.h.b16 %v492
        %v577 = vunpack.c.l.b16 %v493
        %v578 = vunpack.c.h.b16 %v493
        %v579 = vunpack.c.l.b16 %v494
        %v580 = vunpack.c.h.b16 %v494
        %v581 = vunpack.c.l.b16 %v495
        %v582 = vunpack.c.h.b16 %v495
        %v583 = vunpack.c.l.b16 %v496
        %v584 = vunpack.c.h.b16 %v496
        %v585 = vunpack.c.l.b16 %v497
        %v586 = vunpack.c.h.b16 %v497
        %v587 = vunpack.c.l.b16 %v498
        %v588 = vunpack.c.h.b16 %v498
        %v589 = vunpack.c.l.b16 %v499
        %v590 = vunpack.c.h.b16 %v499
        %v591 = vunpack.c.l.b16 %v500
        %v592 = vunpack.c.h.b16 %v500
        %v593 = vunpack.c.l.b16 %v501
        %v594 = vunpack.c.h.b16 %v501
        %v595 = vunpack.c.l.b16 %v502
        %v596 = vunpack.c.h.b16 %v502
        %v597 = vunpack.c.l.b16 %v503
        %v598 = vunpack.c.h.b16 %v503
        %v599 = vunpack.c.l.b16 %v504
        %v600 = vunpack.c.h.b16 %v504
        %v601 = vunpack.c.l.b16 %v505
        %v602 = vunpack.c.h.b16 %v505
        %v603 = vunpack.c.l.b16 %v506
        %v604 = vunpack.c.h.b16 %v506
        %v605 = vunpack.c.l.b16 %v507
        %v606 = vunpack.c.h.b16 %v507
        %v607 = vunpack.c.l.b16 %v508
        %v608 = vunpack.c.h.b16 %v508
        %v609 = vunpack.c.l.b16 %v509
        %v610 = vunpack.c.h.b16 %v509
        %v611 = vunpack.c.l.b16 %v510
        %v612 = vunpack.c.h.b16 %v510
        %v613 = vunpack.c.l.b16 %v511
        %v614 = vunpack.c.h.b16 %v511
        %v615 = vunpack.c.l.b16 %v512
        %v616 = vunpack.c.h.b16 %v512
        %v617 = vunpack.c.l.b16 %v513
        %v618 = vunpack.c.h.b16 %v513
        %v619 = vunpack.c.l.b16 %v514
        %v620 = vunpack.c.h.b16 %v514
        %v621 = vpack.c.b16 %v559, %v557
        %v622 = vpack.c.b16 %v560, %v558
        %v623 = vpack.c.b16 %v563, %v561
        %v624 = vpack.c.b16 %v564, %v562
        %v625 = vpack.c.b16 %v567, %v565
        %v626 = vpack.c.b16 %v568, %v566
        %v627 = vpack.c.b16 %v571, %v569
        %v628 = vpack.c.b16 %v572, %v570
        %v629 = vpack.c.b16 %v575, %v573
        %v630 = vpack.c.b16 %v576, %v574
        %v631 = vpack.c.b16 %v579, %v577
        %v632 = vpack.c.b16 %v580, %v578
        %v633 = vpack.c.b16 %v583, %v581
        %v634 = vpack.c.b16 %v584, %v582
        %v635 = vpack.c.b16 %v587, %v585
        %v636 = vpack.c.b16 %v588, %v586
        %v637 = vpack.c.b16 %v591, %v589
        %v638 = vpack.c.b16 %v592, %v590
        %v639 = vpack.c.b16 %v595, %v593
        %v640 = vpack.c.b16 %v596, %v594
        %v641 = vpack.c.b16 %v599, %v597
        %v642 = vpack.c.b16 %v600, %v598
        %v643 = vpack.c.b16 %v603, %v601
        %v644 = vpack.c.b16 %v604, %v602
        %v645 = vpack.c.b16 %v607, %v605
        %v646 = vpack.c.b16 %v608, %v606
        %v647 = vpack.c.b16 %v611, %v609
        %v648 = vpack.c.b16 %v612, %v610
        %v649 = vpack.c.b16 %v615, %v613
        %v650 = vpack.c.b16 %v616, %v614
        %v651 = vpack.c.b16 %v619, %v617
        %v652 = vpack.c.b16 %v620, %v618
        %685 = vmatprep.subr.bf16.mxu0 %v622
        %686 = vmatpush1.bf16.msra.mxu0 %v621
        %687 = vmatprep.subr.bf16.mxu0 %v624
        %688 = vmatpush1.bf16.msra.mxu0 %v623
        %689 = vmatprep.subr.bf16.mxu0 %v626
        %690 = vmatpush1.bf16.msra.mxu0 %v625
        %691 = vmatprep.subr.bf16.mxu0 %v628
        %692 = vmatpush1.bf16.msra.mxu0 %v627
        %693 = vmatprep.subr.bf16.mxu0 %v630
        %694 = vmatpush1.bf16.msra.mxu0 %v629
        %695 = vmatprep.subr.bf16.mxu0 %v632
        %696 = vmatpush1.bf16.msra.mxu0 %v631
        %697 = vmatprep.subr.bf16.mxu0 %v634
        %698 = vmatpush1.bf16.msra.mxu0 %v633
        %699 = vmatprep.subr.bf16.mxu0 %v636
        %700 = vmatpush1.bf16.msra.mxu0 %v635
        %701 = vmatprep.subr.bf16.mxu0 %v638
        %702 = vmatpush1.bf16.msra.mxu0 %v637
        %703 = vmatprep.subr.bf16.mxu0 %v640
        %704 = vmatpush1.bf16.msra.mxu0 %v639
        %705 = vmatprep.subr.bf16.mxu0 %v642
        %706 = vmatpush1.bf16.msra.mxu0 %v641
        %707 = vmatprep.subr.bf16.mxu0 %v644
        %708 = vmatpush1.bf16.msra.mxu0 %v643
        %709 = vmatprep.subr.bf16.mxu0 %v646
        %710 = vmatpush1.bf16.msra.mxu0 %v645
        %711 = vmatprep.subr.bf16.mxu0 %v648
        %712 = vmatpush1.bf16.msra.mxu0 %v647
        %713 = vmatprep.subr.bf16.mxu0 %v650
        %714 = vmatpush1.bf16.msra.mxu0 %v649
        %715 = vmatprep.subr.bf16.mxu0 %v652
        %716 = vmatpush1.bf16.msra.mxu0 %v651
        %717 = vmatprep.mubr.bf16.mxu0 %v522
        %718 = vmatmul.mubr.bf16.gmra.mrb[0].mxu0 %v521
        %v719 = vpop.f32.mrb[0].mxu0
        %v720 = vadd.f32 0.0, %v719
        %v721 = vpop.f32.mrb[0].mxu0
        %v722 = vadd.f32 0.0, %v721
        %v723 = vpop.f32.mrb[0].mxu0
        %v724 = vadd.f32 0.0, %v723
        %v725 = vpop.f32.mrb[0].mxu0
        %v726 = vadd.f32 0.0, %v725
        %727 = vdwg.mxu0
        %v728 = vadd.f32 %v477, %v720
        %v729 = vadd.f32 %v478, %v722
        %v730 = vadd.f32 %v479, %v724
        %v731 = vadd.f32 %v480, %v726
        %732 = vst [vmem:[#allocation2] sm:$0xff] %v728
        %733 = vst [vmem:[#allocation2 + $0x8] sm:$0xff] %v729
        %734 = vst [vmem:[#allocation2 + $0x10] sm:$0xff] %v730
        %735 = vst [vmem:[#allocation2 + $0x18] sm:$0xff] %v731
        %p736 = scmp.eq.s32.totalorder %s20, 1
        // Predicated region
        $region117: #{ssley_forward.14} parent=103 // pred_check
          %p737 = pneg %p736
        $region118: #{ssley_forward.14} parent=103 // pred_check_branch
          %739 = sbr.rel (%p737) target = $region120
        $region119: #{ssley_forward.14} parent=103 // pred_region
          %v740 = vld [vmem:[#allocation2] sm:$0xff]
          %v741 = vld [vmem:[#allocation2 + $0x8] sm:$0xff]
          %v742 = vld [vmem:[#allocation2 + $0x10] sm:$0xff]
          %v743 = vld [vmem:[#allocation2 + $0x18] sm:$0xff]
          %v744 = vadd.f32 %v740, %v742
          %v745 = vrot.slane %v744, 4
          %v746 = vadd.f32 %v744, %v745
          %v747 = vrot.slane %v746, 2
          %v748 = vadd.f32 %v746, %v747
          %v749 = vrot.slane %v748, 1
          %v750 = vadd.f32 %v748, %v749
          %v751 = vadd.f32 %v741, %v743
          %v752 = vrot.slane %v751, 4
          %v753 = vadd.f32 %v751, %v752
          %v754 = vrot.slane %v753, 2
          %v755 = vadd.f32 %v753, %v754
          %v756 = vrot.slane %v755, 1
          %v757 = vadd.f32 %v755, %v756
          %v758 = vrcp.pop 16.0
          %v759 = vmul.f32 %v750, %v758
          %v760 = vmul.f32 %v757, %v758
          %v761 = vsub.f32 %v740, %v759
          %v762 = vsub.f32 %v741, %v760
          %v763 = vsub.f32 %v742, %v759
          %v764 = vsub.f32 %v743, %v760
          %v765 = vmul.f32 %v761, %v761
          %v766 = vmul.f32 %v762, %v762
          %v767 = vmul.f32 %v763, %v763
          %v768 = vmul.f32 %v764, %v764
          %v769 = vadd.f32 %v765, %v767
          %v770 = vrot.slane %v769, 4
          %v771 = vadd.f32 %v769, %v770
          %v772 = vrot.slane %v771, 2
          %v773 = vadd.f32 %v771, %v772
          %v774 = vrot.slane %v773, 1
          %v775 = vadd.f32 %v773, %v774
          %v776 = vadd.f32 %v766, %v768
          %v777 = vrot.slane %v776, 4
          %v778 = vadd.f32 %v776, %v777
          %v779 = vrot.slane %v778, 2
          %v780 = vadd.f32 %v778, %v779
          %v781 = vrot.slane %v780, 1
          %v782 = vadd.f32 %v780, %v781
          %v783 = vmul.f32 %v775, %v758
          %v784 = vmul.f32 %v782, %v758
          %v785 = vadd.f32 %v783, 1e-05
          %v786 = vadd.f32 %v784, 1e-05
          %v787 = vrsqrt.pop %v785
          %v788 = vrsqrt.pop %v786
          %v789 = vmul.f32 %v761, %v787
          %v790 = vmul.f32 %v762, %v788
          %v791 = vmul.f32 %v763, %v787
          %v792 = vmul.f32 %v764, %v788
          %v793 = vld [vmem:[%s461] sm:$0x3]
          %v795 = vlaneseq
          %v796 = vshrl.u32 %v795, 7
          %v797 = vsub.s32 0, %v796
          %v798 = vrot.slane %v793, %v797
          %v799 = vlaneseq
          %v800 = vshrl.u32 %v799, 7
          %v801 = vsub.s32 1, %v800
          %v802 = vrot.slane %v793, %v801
          %v805 = vmul.f32 %v789, %v798
          %v806 = vmul.f32 %v790, %v802
          %v807 = vmul.f32 %v791, %v798
          %v808 = vmul.f32 %v792, %v802
          %v809 = vld [vmem:[%s466] sm:$0x3]
          %v811 = vlaneseq
          %v812 = vshrl.u32 %v811, 7
          %v813 = vsub.s32 0, %v812
          %v814 = vrot.slane %v809, %v813
          %v815 = vlaneseq
          %v816 = vshrl.u32 %v815, 7
          %v817 = vsub.s32 1, %v816
          %v818 = vrot.slane %v809, %v817
          %v821 = vadd.f32 %v805, %v814
          %v822 = vadd.f32 %v806, %v818
          %v823 = vadd.f32 %v807, %v814
          %v824 = vadd.f32 %v808, %v818
          %v825 = vmax.f32 %v821, 0.0
          %v826 = vmax.f32 %v822, 0.0
          %v827 = vmax.f32 %v823, 0.0
          %v828 = vmax.f32 %v824, 0.0
          %v829 = vpack.c.bf16 %v827, %v825
          %v830 = vpack.c.bf16 %v828, %v826
          %v833 = vunpack.c.l.b16 %v829
          %v834 = vunpack.c.l.b16 %v830
          %v835 = vunpack.c.h.b16 %v829
          %v836 = vunpack.c.h.b16 %v830
          %v837 = vpack.c.b16 %v834, %v833
          %v838 = vpack.c.b16 %v836, %v835
          %841 = vst [vmem:[%s454] sm:$0xff] %v837
          %842 = vst [vmem:[%s454 + $0x8] sm:$0xff] %v838
        $region120: #{ssley_forward.14} parent=103 // pred_fallthru
          _
        %s843 = sand.u32 %s141, 1
        %s844 = sand.u32 %s141, 1
        %s845 = smul.addr %s844, 16
        %s846 = scalar_lea.vmem [#allocation5], %s845
        // Predicated region
        $region121: #{ssley_forward.14} parent=103 // pred_check
          %p847 = pneg %p151
        $region122: #{ssley_forward.14} parent=103 // pred_check_branch
          %849 = sbr.rel (%p847) target = $region124
        $region123: #{ssley_forward.14} parent=103 // pred_region
          %s850 = smul.u32 2, %s19
          %s851 = smul.addr %s850, 4
          %s852 = scalar_lea.vmem %s4, %s851
          // Predicated region
          $region125: #{ssley_forward.14} parent=123 // pred_check
            _
          $region126: #{ssley_forward.14} parent=123 // pred_check_branch
            %854 = sbr.rel (0) target = $region128
          $region127: #{ssley_forward.14} parent=123 // pred_region
            // Predicated region
            $region129: #{ssley_forward.14} parent=127 // pred_check
              _
            $region130: #{ssley_forward.14} parent=127 // pred_check_branch
              %856 = sbr.rel (0) target = $region132
            $region131: #{ssley_forward.14} parent=127 // pred_region
              // Predicated region
              $region144: #{ssley_forward.14} parent=131 // pred_check
                _
              $region145: #{ssley_forward.14} parent=131 // pred_check_branch
                %873 = sbr.rel (0) target = $region147
              $region146: #{ssley_forward.14} parent=131 // pred_region
                loop: start=0, step=1, limit=1
                $region148: #{ssley_forward.14} parent=146 // loop_pre_header
                  _
                $region149: #{ssley_forward.14} parent=146 // loop_header
                  %s875 = sphi 0, %s879
                  %p876 = scmp.ge.s32.totalorder %s875, 1
                  %s880 = sphi %s846, %s846
                  %s881 = sphi %s852, %s852
                $region150: #{ssley_forward.14} parent=146 // loop_header_branch
                  %878 = sbr.rel (%p876) target = $region154
                $region151: #{ssley_forward.14} parent=146 // loop_body
                  %v882 = vld [vmem:[%s880] sm:$0xff]
                  %883 = vst [vmem:[%s881] sm:$0xff] %v882
                  %v884 = vld [vmem:[%s880 + $0x8] sm:$0xff]
                  %885 = vst [vmem:[%s881 + $0x10] sm:$0xff] %v884
                $region152: #{ssley_forward.14} parent=146 // loop_footer
                  %s879 = sadd.s32 1, %s875
                $region153: #{ssley_forward.14} parent=146 // loop_footer_branch
                  %874 = sbr.rel target = $region149
                $region154: #{ssley_forward.14} parent=146 // loop_exit
                  _
              $region147: #{ssley_forward.14} parent=131 // pred_fallthru
                _
              // Predicated region
              $region155: #{ssley_forward.14} parent=131 // pred_check
                _
              $region156: #{ssley_forward.14} parent=131 // pred_check_branch
                %887 = sbr.rel target = $region158
              $region157: #{ssley_forward.14} parent=131 // pred_region
                _
              $region158: #{ssley_forward.14} parent=131 // pred_fallthru
                _
            $region132: #{ssley_forward.14} parent=127 // pred_fallthru
              _
            // Predicated region
            $region133: #{ssley_forward.14} parent=127 // pred_check
              _
            $region134: #{ssley_forward.14} parent=127 // pred_check_branch
              %858 = sbr.rel target = $region136
            $region135: #{ssley_forward.14} parent=127 // pred_region
              loop: start=0, step=1, limit=1
              $region137: #{ssley_forward.14} parent=135 // loop_pre_header
                _
              $region138: #{ssley_forward.14} parent=135 // loop_header
                %s861 = sphi 0, %s865
                %p862 = scmp.ge.s32.totalorder %s861, 1
                %s866 = sphi %s846, %s846
                %s867 = sphi %s852, %s852
              $region139: #{ssley_forward.14} parent=135 // loop_header_branch
                %864 = sbr.rel (%p862) target = $region143
              $region140: #{ssley_forward.14} parent=135 // loop_body
                %v868 = vld [vmem:[%s866] sm:$0xff]
                %869 = vst [vmem:[%s867] sm:$0xff] %v868
                %v870 = vld [vmem:[%s866 + $0x8] sm:$0xff]
                %871 = vst [vmem:[%s867 + $0x10] sm:$0xff] %v870
              $region141: #{ssley_forward.14} parent=135 // loop_footer
                %s865 = sadd.s32 1, %s861
              $region142: #{ssley_forward.14} parent=135 // loop_footer_branch
                %860 = sbr.rel target = $region138
              $region143: #{ssley_forward.14} parent=135 // loop_exit
                _
            $region136: #{ssley_forward.14} parent=127 // pred_fallthru
              _
          $region128: #{ssley_forward.14} parent=123 // pred_fallthru
            _
          %888 = vnop
        $region124: #{ssley_forward.14} parent=103 // pred_fallthru
          _
      $region104: #{ssley_forward.14} parent=5 // pred_fallthru
        _
      %p889 = scmp.le.s32.totalorder 2, %s10
      // Predicated region
      $region159: #{ssley_forward.14} parent=5 // pred_check
        %p890 = pneg %p889
      $region160: #{ssley_forward.14} parent=5 // pred_check_branch
        %892 = sbr.rel (%p890) target = $region162
      $region161: #{ssley_forward.14} parent=5 // pred_region
        %s893 = ssub.s32 %s10, 2
        // Predicated region
        $region163: #{ssley_forward.14} parent=161 // pred_check
          %p894 = pneg %p157
        $region164: #{ssley_forward.14} parent=161 // pred_check_branch
          %896 = sbr.rel (%p894) target = $region166
        $region165: #{ssley_forward.14} parent=161 // pred_region
          %s897 = sand.u32 %s142, 1
          %s898 = sand.u32 %s142, 1
          %s899 = smul.addr %s898, 16
          %s900 = scalar_lea.vmem [#allocation5], %s899
        $region166: #{ssley_forward.14} parent=161 // pred_fallthru
          _
      $region162: #{ssley_forward.14} parent=5 // pred_fallthru
        _
    $region6: #{ssley_forward.14} parent=1 // loop_footer
      %s14 = sadd.s32 1, %s10
    $region7: #{ssley_forward.14} parent=1 // loop_footer_branch
      %9 = sbr.rel target = $region3
    $region8: #{ssley_forward.14} parent=1 // loop_exit
      _

// kernel: ssley_forward.16
$region0: #{ssley_forward.16}
  #allocation0 [shape = 'u32[]', space=smem, size = 0x4, offset = 0x4, fixed_abs, tag = 'smem constant byte address 0x4 - core index']
  #allocation1 [shape = 'u32[144,128]{1,0:T(1,128)}', space=vmem, size = 0x12000, scoped, tag = 'internal scratch']
  #allocation2 [shape = 'f32[16,256]{1,0:T(8,128)}', space=vmem, size = 0x4000, scoped, tag = 'scratch operand']
  %s0 = inlined_call_operand.vmem [shape: bf16[16,512], index: 0, kind: input, shape index: {}]
  %s1 = inlined_call_operand.vmem [shape: bf16[512,512], index: 1, kind: input, shape index: {}]
  %s2 = inlined_call_operand.vmem [shape: f32[1,512], index: 2, kind: input, shape index: {}]
  %s3 = inlined_call_operand.vmem [shape: bf16[16,512], index: 3, kind: output, shape index: {0}]
  %s4 = inlined_call_operand.vmem [shape: f32[1,512], index: 4, kind: output, shape index: {1}]
  %5 = xla_tuple %s3, %s4
  %s6 = sld [smem:[#allocation0]]
  $region171: #{ssley_forward.16} parent=0
    _
  %s8 = ssub.s32 1, %s6
  %s9 = scalar_select 0, %s8, %s6
  $region1: #{ssley_forward.16} parent=0
    #allocation3 [shape = 'u8[16384]{0}', space=vmem, size = 0x4000, scoped, tag = 'input window, operand 0']
    #allocation4 [shape = 'u8[262144]{0}', space=vmem, size = 0x40000, scoped, tag = 'input window, operand 1']
    #allocation5 [shape = 'u8[16384]{0}', space=vmem, size = 0x4000, scoped, tag = 'output window, operand 0']
    loop: start=0, step=1, limit=6
    $region2: #{ssley_forward.16} parent=1 // loop_pre_header
      _
    $region3: #{ssley_forward.16} parent=1 // loop_header
      %s11 = sphi 0, %s15
      %p12 = scmp.ge.s32.totalorder %s11, 6
      %s18 = sphi 0, %s30
      %s19 = sphi 0, %s26
      %s20 = sphi 0, %s18
      %s21 = sphi 0, %s19
      %s22 = sphi 0, %s20
      %s23 = sphi 0, %s21
      %s33 = sphi 0, %s35
      %s36 = sphi 0, %s33
      %s37 = sphi 0, %s36
      %s53 = sphi 0, %s37
      %s61 = sphi 0, %s63
      %s64 = sphi 0, %s61
      %s65 = sphi 0, %s64
      %s81 = sphi 0, %s65
      %s87 = sphi 0, %s89
      %s90 = sphi 0, %s87
      %s91 = sphi 0, %s90
      %s107 = sphi 0, %s91
      %s113 = sphi 0, %s115
      %s116 = sphi 0, %s113
      %s117 = sphi 0, %s116
      %s133 = sphi 0, %s117
      %s139 = sphi 0, %s141
      %s142 = sphi 0, %s139
      %s143 = sphi 0, %s142
      %s159 = sphi 0, %s143
    $region4: #{ssley_forward.16} parent=1 // loop_header_branch
      %14 = sbr.rel (%p12) target = $region8
    $region5: #{ssley_forward.16} parent=1 // loop_body
      %s16 = ssub.s32 %s11, 1
      %s17 = ssub.s32 %s11, 2
      %s24 = sadd.s32 1, %s19
      %p25 = scmp.ge.s32.totalorder %s24, 2
      %s26 = scalar_select %p25, 0, %s24
      %s27 = sadd.s32 1, %s18
      %s28 = scalar_select %p25, %s27, %s18
      %p29 = scmp.ge.s32.totalorder %s28, 2
      %s30 = scalar_select %p29, 0, %s28
      %s31 = ssub.s32 %s19, %s26
      %p32 = scmp.eq.s32.totalorder %s31, 0
      %s34 = sadd.s32 %s33, 1
      %s35 = scalar_select %p32, %s33, %s34
      %p38 = pneg %p32
      %p39 = scmp.eq.s32.totalorder %s11, 3
      %p40 = por %p38, %p39
      %p41 = scmp.ne.s32.totalorder %s33, %s36
      %p42 = scmp.eq.s32.totalorder %s11, 0
      %p43 = por %p41, %p42
      %p44 = scmp.ne.s32.totalorder %s33, %s36
      %p45 = scmp.eq.s32.totalorder %s16, 3
      %p46 = por %p44, %p45
      %p47 = scmp.ne.s32.totalorder %s36, %s37
      %p48 = scmp.eq.s32.totalorder %s16, 0
      %p49 = por %p47, %p48
      %p50 = scmp.ne.s32.totalorder %s36, %s37
      %p51 = scmp.eq.s32.totalorder %s17, 3
      %p52 = por %p50, %p51
      %p54 = scmp.ne.s32.totalorder %s37, %s53
      %p55 = scmp.eq.s32.totalorder %s17, 0
      %p56 = por %p54, %p55
      %s57 = ssub.s32 %s19, %s26
      %s58 = ssub.s32 %s18, %s30
      %s59 = sor.u32 %s57, %s58
      %p60 = scmp.eq.s32.totalorder %s59, 0
      %s62 = sadd.s32 %s61, 1
      %s63 = scalar_select %p60, %s61, %s62
      %p66 = pneg %p60
      %p67 = scmp.eq.s32.totalorder %s11, 3
      %p68 = por %p66, %p67
      %p69 = scmp.ne.s32.totalorder %s61, %s64
      %p70 = scmp.eq.s32.totalorder %s11, 0
      %p71 = por %p69, %p70
      %p72 = scmp.ne.s32.totalorder %s61, %s64
      %p73 = scmp.eq.s32.totalorder %s16, 3
      %p74 = por %p72, %p73
      %p75 = scmp.ne.s32.totalorder %s64, %s65
      %p76 = scmp.eq.s32.totalorder %s16, 0
      %p77 = por %p75, %p76
      %p78 = scmp.ne.s32.totalorder %s64, %s65
      %p79 = scmp.eq.s32.totalorder %s17, 3
      %p80 = por %p78, %p79
      %p82 = scmp.ne.s32.totalorder %s65, %s81
      %p83 = scmp.eq.s32.totalorder %s17, 0
      %p84 = por %p82, %p83
      %s85 = ssub.s32 %s18, %s30
      %p86 = scmp.eq.s32.totalorder %s85, 0
      %s88 = sadd.s32 %s87, 1
      %s89 = scalar_select %p86, %s87, %s88
      %p92 = pneg %p86
      %p93 = scmp.eq.s32.totalorder %s11, 3
      %p94 = por %p92, %p93
      %p95 = scmp.ne.s32.totalorder %s87, %s90
      %p96 = scmp.eq.s32.totalorder %s11, 0
      %p97 = por %p95, %p96
      %p98 = scmp.ne.s32.totalorder %s87, %s90
      %p99 = scmp.eq.s32.totalorder %s16, 3
      %p100 = por %p98, %p99
      %p101 = scmp.ne.s32.totalorder %s90, %s91
      %p102 = scmp.eq.s32.totalorder %s16, 0
      %p103 = por %p101, %p102
      %p104 = scmp.ne.s32.totalorder %s90, %s91
      %p105 = scmp.eq.s32.totalorder %s17, 3
      %p106 = por %p104, %p105
      %p108 = scmp.ne.s32.totalorder %s91, %s107
      %p109 = scmp.eq.s32.totalorder %s17, 0
      %p110 = por %p108, %p109
      %s111 = ssub.s32 %s18, %s30
      %p112 = scmp.eq.s32.totalorder %s111, 0
      %s114 = sadd.s32 %s113, 1
      %s115 = scalar_select %p112, %s113, %s114
      %p118 = pneg %p112
      %p119 = scmp.eq.s32.totalorder %s11, 3
      %p120 = por %p118, %p119
      %p121 = scmp.ne.s32.totalorder %s113, %s116
      %p122 = scmp.eq.s32.totalorder %s11, 0
      %p123 = por %p121, %p122
      %p124 = scmp.ne.s32.totalorder %s113, %s116
      %p125 = scmp.eq.s32.totalorder %s16, 3
      %p126 = por %p124, %p125
      %p127 = scmp.ne.s32.totalorder %s116, %s117
      %p128 = scmp.eq.s32.totalorder %s16, 0
      %p129 = por %p127, %p128
      %p130 = scmp.ne.s32.totalorder %s116, %s117
      %p131 = scmp.eq.s32.totalorder %s17, 3
      %p132 = por %p130, %p131
      %p134 = scmp.ne.s32.totalorder %s117, %s133
      %p135 = scmp.eq.s32.totalorder %s17, 0
      %p136 = por %p134, %p135
      %s137 = ssub.s32 %s18, %s30
      %p138 = scmp.eq.s32.totalorder %s137, 0
      %s140 = sadd.s32 %s139, 1
      %s141 = scalar_select %p138, %s139, %s140
      %p144 = pneg %p138
      %p145 = scmp.eq.s32.totalorder %s11, 3
      %p146 = por %p144, %p145
      %p147 = scmp.ne.s32.totalorder %s139, %s142
      %p148 = scmp.eq.s32.totalorder %s11, 0
      %p149 = por %p147, %p148
      %p150 = scmp.ne.s32.totalorder %s139, %s142
      %p151 = scmp.eq.s32.totalorder %s16, 3
      %p152 = por %p150, %p151
      %p153 = scmp.ne.s32.totalorder %s142, %s143
      %p154 = scmp.eq.s32.totalorder %s16, 0
      %p155 = por %p153, %p154
      %p156 = scmp.ne.s32.totalorder %s142, %s143
      %p157 = scmp.eq.s32.totalorder %s17, 3
      %p158 = por %p156, %p157
      %p160 = scmp.ne.s32.totalorder %s143, %s159
      %p161 = scmp.eq.s32.totalorder %s17, 0
      %p162 = por %p160, %p161
      %p163 = scmp.le.s32.totalorder 1, %s11
      %p164 = scmp.lt.s32.totalorder %s11, 5
      %p165 = pnand %p163, %p164
      %p166 = pneg %p165
      // Predicated region
      $region9: #{ssley_forward.16} parent=5 // pred_check
        _
      $region10: #{ssley_forward.16} parent=5 // pred_check_branch
        %168 = sbr.rel (%p165) target = $region12
      $region11: #{ssley_forward.16} parent=5 // pred_region
        %s169 = ssub.s32 %s11, 1
      $region12: #{ssley_forward.16} parent=5 // pred_fallthru
        _
      %p170 = scmp.lt.s32.totalorder %s11, 4
      // Predicated region
      $region13: #{ssley_forward.16} parent=5 // pred_check
        %p171 = pneg %p170
      $region14: #{ssley_forward.16} parent=5 // pred_check_branch
        %173 = sbr.rel (%p171) target = $region16
      $region15: #{ssley_forward.16} parent=5 // pred_region
        // Predicated region
        $region17: #{ssley_forward.16} parent=15 // pred_check
          %p174 = pneg %p43
        $region18: #{ssley_forward.16} parent=15 // pred_check_branch
          %176 = sbr.rel (%p174) target = $region20
        $region19: #{ssley_forward.16} parent=15 // pred_region
          %s177 = sand.u32 %s33, 1
          %s178 = sand.u32 %s33, 1
          %s179 = smul.addr %s178, 16
          %s180 = scalar_lea.vmem [#allocation3], %s179
          %s181 = smul.u32 2, %s19
          %s182 = smul.addr %s181, 4
          %s183 = scalar_lea.vmem %s0, %s182
          // Predicated region
          $region21: #{ssley_forward.16} parent=19 // pred_check
            _
          $region22: #{ssley_forward.16} parent=19 // pred_check_branch
            %185 = sbr.rel (0) target = $region24
          $region23: #{ssley_forward.16} parent=19 // pred_region
            // Predicated region
            $region25: #{ssley_forward.16} parent=23 // pred_check
              _
            $region26: #{ssley_forward.16} parent=23 // pred_check_branch
              %187 = sbr.rel (0) target = $region28
            $region27: #{ssley_forward.16} parent=23 // pred_region
              // Predicated region
              $region40: #{ssley_forward.16} parent=27 // pred_check
                _
              $region41: #{ssley_forward.16} parent=27 // pred_check_branch
                %204 = sbr.rel (0) target = $region43
              $region42: #{ssley_forward.16} parent=27 // pred_region
                loop: start=0, step=1, limit=1
                $region44: #{ssley_forward.16} parent=42 // loop_pre_header
                  _
                $region45: #{ssley_forward.16} parent=42 // loop_header
                  %s206 = sphi 0, %s210
                  %p207 = scmp.ge.s32.totalorder %s206, 1
                  %s211 = sphi %s183, %s183
                  %s212 = sphi %s180, %s180
                $region46: #{ssley_forward.16} parent=42 // loop_header_branch
                  %209 = sbr.rel (%p207) target = $region50
                $region47: #{ssley_forward.16} parent=42 // loop_body
                  %v213 = vld [vmem:[%s211] sm:$0xff]
                  %214 = vst [vmem:[%s212] sm:$0xff] %v213
                  %v215 = vld [vmem:[%s211 + $0x10] sm:$0xff]
                  %216 = vst [vmem:[%s212 + $0x8] sm:$0xff] %v215
                $region48: #{ssley_forward.16} parent=42 // loop_footer
                  %s210 = sadd.s32 1, %s206
                $region49: #{ssley_forward.16} parent=42 // loop_footer_branch
                  %205 = sbr.rel target = $region45
                $region50: #{ssley_forward.16} parent=42 // loop_exit
                  _
              $region43: #{ssley_forward.16} parent=27 // pred_fallthru
                _
              // Predicated region
              $region51: #{ssley_forward.16} parent=27 // pred_check
                _
              $region52: #{ssley_forward.16} parent=27 // pred_check_branch
                %218 = sbr.rel target = $region54
              $region53: #{ssley_forward.16} parent=27 // pred_region
                _
              $region54: #{ssley_forward.16} parent=27 // pred_fallthru
                _
            $region28: #{ssley_forward.16} parent=23 // pred_fallthru
              _
            // Predicated region
            $region29: #{ssley_forward.16} parent=23 // pred_check
              _
            $region30: #{ssley_forward.16} parent=23 // pred_check_branch
              %189 = sbr.rel target = $region32
            $region31: #{ssley_forward.16} parent=23 // pred_region
              loop: start=0, step=1, limit=1
              $region33: #{ssley_forward.16} parent=31 // loop_pre_header
                _
              $region34: #{ssley_forward.16} parent=31 // loop_header
                %s192 = sphi 0, %s196
                %p193 = scmp.ge.s32.totalorder %s192, 1
                %s197 = sphi %s183, %s183
                %s198 = sphi %s180, %s180
              $region35: #{ssley_forward.16} parent=31 // loop_header_branch
                %195 = sbr.rel (%p193) target = $region39
              $region36: #{ssley_forward.16} parent=31 // loop_body
                %v199 = vld [vmem:[%s197] sm:$0xff]
                %200 = vst [vmem:[%s198] sm:$0xff] %v199
                %v201 = vld [vmem:[%s197 + $0x10] sm:$0xff]
                %202 = vst [vmem:[%s198 + $0x8] sm:$0xff] %v201
              $region37: #{ssley_forward.16} parent=31 // loop_footer
                %s196 = sadd.s32 1, %s192
              $region38: #{ssley_forward.16} parent=31 // loop_footer_branch
                %191 = sbr.rel target = $region34
              $region39: #{ssley_forward.16} parent=31 // loop_exit
                _
            $region32: #{ssley_forward.16} parent=23 // pred_fallthru
              _
          $region24: #{ssley_forward.16} parent=19 // pred_fallthru
            _
          %219 = vnop
        $region20: #{ssley_forward.16} parent=15 // pred_fallthru
          _
        // Predicated region
        $region55: #{ssley_forward.16} parent=15 // pred_check
          %p220 = pneg %p71
        $region56: #{ssley_forward.16} parent=15 // pred_check_branch
          %222 = sbr.rel (%p220) target = $region58
        $region57: #{ssley_forward.16} parent=15 // pred_region
          %s223 = sand.u32 %s61, 1
          %s224 = sand.u32 %s61, 1
          %s225 = smul.addr %s224, 256
          %s226 = scalar_lea.vmem [#allocation4], %s225
          %s227 = smul.u32 32, %s19
          %s228 = smul.u32 2, %s18
          %s229 = smul.addr %s227, 4
          %s230 = sadd.s32 %s228, %s229
          %s231 = smul.addr %s230, 4
          %s232 = scalar_lea.vmem %s1, %s231
          // Predicated region
          $region59: #{ssley_forward.16} parent=57 // pred_check
            _
          $region60: #{ssley_forward.16} parent=57 // pred_check_branch
            %234 = sbr.rel (0) target = $region62
          $region61: #{ssley_forward.16} parent=57 // pred_region
            // Predicated region
            $region63: #{ssley_forward.16} parent=61 // pred_check
              _
            $region64: #{ssley_forward.16} parent=61 // pred_check_branch
              %236 = sbr.rel (0) target = $region66
            $region65: #{ssley_forward.16} parent=61 // pred_region
              // Predicated region
              $region78: #{ssley_forward.16} parent=65 // pred_check
                _
              $region79: #{ssley_forward.16} parent=65 // pred_check_branch
                %313 = sbr.rel (0) target = $region81
              $region80: #{ssley_forward.16} parent=65 // pred_region
                loop: start=0, step=1, limit=1
                $region82: #{ssley_forward.16} parent=80 // loop_pre_header
                  _
                $region83: #{ssley_forward.16} parent=80 // loop_header
                  %s315 = sphi 0, %s319
                  %p316 = scmp.ge.s32.totalorder %s315, 1
                  %s320 = sphi %s232, %s232
                  %s321 = sphi %s226, %s226
                $region84: #{ssley_forward.16} parent=80 // loop_header_branch
                  %318 = sbr.rel (%p316) target = $region88
                $region85: #{ssley_forward.16} parent=80 // loop_body
                  %v322 = vld [vmem:[%s320] sm:$0xff]
                  %323 = vst [vmem:[%s321] sm:$0xff] %v322
                  %v324 = vld [vmem:[%s320 + $0x10] sm:$0xff]
                  %325 = vst [vmem:[%s321 + $0x8] sm:$0xff] %v324
                  %v326 = vld [vmem:[%s320 + $0x20] sm:$0xff]
                  %327 = vst [vmem:[%s321 + $0x10] sm:$0xff] %v326
                  %v328 = vld [vmem:[%s320 + $0x30] sm:$0xff]
                  %329 = vst [vmem:[%s321 + $0x18] sm:$0xff] %v328
                  %v330 = vld [vmem:[%s320 + $0x40] sm:$0xff]
                  %331 = vst [vmem:[%s321 + $0x20] sm:$0xff] %v330
                  %v332 = vld [vmem:[%s320 + $0x50] sm:$0xff]
                  %333 = vst [vmem:[%s321 + $0x28] sm:$0xff] %v332
                  %v334 = vld [vmem:[%s320 + $0x60] sm:$0xff]
                  %335 = vst [vmem:[%s321 + $0x30] sm:$0xff] %v334
                  %v336 = vld [vmem:[%s320 + $0x70] sm:$0xff]
                  %337 = vst [vmem:[%s321 + $0x38] sm:$0xff] %v336
                  %v338 = vld [vmem:[%s320 + $0x80] sm:$0xff]
                  %339 = vst [vmem:[%s321 + $0x40] sm:$0xff] %v338
                  %v340 = vld [vmem:[%s320 + $0x90] sm:$0xff]
                  %341 = vst [vmem:[%s321 + $0x48] sm:$0xff] %v340
                  %v342 = vld [vmem:[%s320 + $0xa0] sm:$0xff]
                  %343 = vst [vmem:[%s321 + $0x50] sm:$0xff] %v342
                  %v344 = vld [vmem:[%s320 + $0xb0] sm:$0xff]
                  %345 = vst [vmem:[%s321 + $0x58] sm:$0xff] %v344
                  %v346 = vld [vmem:[%s320 + $0xc0] sm:$0xff]
                  %347 = vst [vmem:[%s321 + $0x60] sm:$0xff] %v346
                  %v348 = vld [vmem:[%s320 + $0xd0] sm:$0xff]
                  %349 = vst [vmem:[%s321 + $0x68] sm:$0xff] %v348
                  %v350 = vld [vmem:[%s320 + $0xe0] sm:$0xff]
                  %351 = vst [vmem:[%s321 + $0x70] sm:$0xff] %v350
                  %v352 = vld [vmem:[%s320 + $0xf0] sm:$0xff]
                  %353 = vst [vmem:[%s321 + $0x78] sm:$0xff] %v352
                  %v354 = vld [vmem:[%s320 + $0x100] sm:$0xff]
                  %355 = vst [vmem:[%s321 + $0x80] sm:$0xff] %v354
                  %v356 = vld [vmem:[%s320 + $0x110] sm:$0xff]
                  %357 = vst [vmem:[%s321 + $0x88] sm:$0xff] %v356
                  %v358 = vld [vmem:[%s320 + $0x120] sm:$0xff]
                  %359 = vst [vmem:[%s321 + $0x90] sm:$0xff] %v358
                  %v360 = vld [vmem:[%s320 + $0x130] sm:$0xff]
                  %361 = vst [vmem:[%s321 + $0x98] sm:$0xff] %v360
                  %v362 = vld [vmem:[%s320 + $0x140] sm:$0xff]
                  %363 = vst [vmem:[%s321 + $0xa0] sm:$0xff] %v362
                  %v364 = vld [vmem:[%s320 + $0x150] sm:$0xff]
                  %365 = vst [vmem:[%s321 + $0xa8] sm:$0xff] %v364
                  %v366 = vld [vmem:[%s320 + $0x160] sm:$0xff]
                  %367 = vst [vmem:[%s321 + $0xb0] sm:$0xff] %v366
                  %v368 = vld [vmem:[%s320 + $0x170] sm:$0xff]
                  %369 = vst [vmem:[%s321 + $0xb8] sm:$0xff] %v368
                  %v370 = vld [vmem:[%s320 + $0x180] sm:$0xff]
                  %371 = vst [vmem:[%s321 + $0xc0] sm:$0xff] %v370
                  %v372 = vld [vmem:[%s320 + $0x190] sm:$0xff]
                  %373 = vst [vmem:[%s321 + $0xc8] sm:$0xff] %v372
                  %v374 = vld [vmem:[%s320 + $0x1a0] sm:$0xff]
                  %375 = vst [vmem:[%s321 + $0xd0] sm:$0xff] %v374
                  %v376 = vld [vmem:[%s320 + $0x1b0] sm:$0xff]
                  %377 = vst [vmem:[%s321 + $0xd8] sm:$0xff] %v376
                  %v378 = vld [vmem:[%s320 + $0x1c0] sm:$0xff]
                  %379 = vst [vmem:[%s321 + $0xe0] sm:$0xff] %v378
                  %v380 = vld [vmem:[%s320 + $0x1d0] sm:$0xff]
                  %381 = vst [vmem:[%s321 + $0xe8] sm:$0xff] %v380
                  %v382 = vld [vmem:[%s320 + $0x1e0] sm:$0xff]
                  %383 = vst [vmem:[%s321 + $0xf0] sm:$0xff] %v382
                  %v384 = vld [vmem:[%s320 + $0x1f0] sm:$0xff]
                  %385 = vst [vmem:[%s321 + $0xf8] sm:$0xff] %v384
                $region86: #{ssley_forward.16} parent=80 // loop_footer
                  %s319 = sadd.s32 1, %s315
                $region87: #{ssley_forward.16} parent=80 // loop_footer_branch
                  %314 = sbr.rel target = $region83
                $region88: #{ssley_forward.16} parent=80 // loop_exit
                  _
              $region81: #{ssley_forward.16} parent=65 // pred_fallthru
                _
              // Predicated region
              $region89: #{ssley_forward.16} parent=65 // pred_check
                _
              $region90: #{ssley_forward.16} parent=65 // pred_check_branch
                %387 = sbr.rel target = $region92
              $region91: #{ssley_forward.16} parent=65 // pred_region
                _
              $region92: #{ssley_forward.16} parent=65 // pred_fallthru
                _
            $region66: #{ssley_forward.16} parent=61 // pred_fallthru
              _
            // Predicated region
            $region67: #{ssley_forward.16} parent=61 // pred_check
              _
            $region68: #{ssley_forward.16} parent=61 // pred_check_branch
              %238 = sbr.rel target = $region70
            $region69: #{ssley_forward.16} parent=61 // pred_region
              loop: start=0, step=1, limit=1
              $region71: #{ssley_forward.16} parent=69 // loop_pre_header
                _
              $region72: #{ssley_forward.16} parent=69 // loop_header
                %s241 = sphi 0, %s245
                %p242 = scmp.ge.s32.totalorder %s241, 1
                %s246 = sphi %s232, %s232
                %s247 = sphi %s226, %s226
              $region73: #{ssley_forward.16} parent=69 // loop_header_branch
                %244 = sbr.rel (%p242) target = $region77
              $region74: #{ssley_forward.16} parent=69 // loop_body
                %v248 = vld [vmem:[%s246] sm:$0xff]
                %249 = vst [vmem:[%s247] sm:$0xff] %v248
                %v250 = vld [vmem:[%s246 + $0x10] sm:$0xff]
                %251 = vst [vmem:[%s247 + $0x8] sm:$0xff] %v250
                %v252 = vld [vmem:[%s246 + $0x20] sm:$0xff]
                %253 = vst [vmem:[%s247 + $0x10] sm:$0xff] %v252
                %v254 = vld [vmem:[%s246 + $0x30] sm:$0xff]
                %255 = vst [vmem:[%s247 + $0x18] sm:$0xff] %v254
                %v256 = vld [vmem:[%s246 + $0x40] sm:$0xff]
                %257 = vst [vmem:[%s247 + $0x20] sm:$0xff] %v256
                %v258 = vld [vmem:[%s246 + $0x50] sm:$0xff]
                %259 = vst [vmem:[%s247 + $0x28] sm:$0xff] %v258
                %v260 = vld [vmem:[%s246 + $0x60] sm:$0xff]
                %261 = vst [vmem:[%s247 + $0x30] sm:$0xff] %v260
                %v262 = vld [vmem:[%s246 + $0x70] sm:$0xff]
                %263 = vst [vmem:[%s247 + $0x38] sm:$0xff] %v262
                %v264 = vld [vmem:[%s246 + $0x80] sm:$0xff]
                %265 = vst [vmem:[%s247 + $0x40] sm:$0xff] %v264
                %v266 = vld [vmem:[%s246 + $0x90] sm:$0xff]
                %267 = vst [vmem:[%s247 + $0x48] sm:$0xff] %v266
                %v268 = vld [vmem:[%s246 + $0xa0] sm:$0xff]
                %269 = vst [vmem:[%s247 + $0x50] sm:$0xff] %v268
                %v270 = vld [vmem:[%s246 + $0xb0] sm:$0xff]
                %271 = vst [vmem:[%s247 + $0x58] sm:$0xff] %v270
                %v272 = vld [vmem:[%s246 + $0xc0] sm:$0xff]
                %273 = vst [vmem:[%s247 + $0x60] sm:$0xff] %v272
                %v274 = vld [vmem:[%s246 + $0xd0] sm:$0xff]
                %275 = vst [vmem:[%s247 + $0x68] sm:$0xff] %v274
                %v276 = vld [vmem:[%s246 + $0xe0] sm:$0xff]
                %277 = vst [vmem:[%s247 + $0x70] sm:$0xff] %v276
                %v278 = vld [vmem:[%s246 + $0xf0] sm:$0xff]
                %279 = vst [vmem:[%s247 + $0x78] sm:$0xff] %v278
                %v280 = vld [vmem:[%s246 + $0x100] sm:$0xff]
                %281 = vst [vmem:[%s247 + $0x80] sm:$0xff] %v280
                %v282 = vld [vmem:[%s246 + $0x110] sm:$0xff]
                %283 = vst [vmem:[%s247 + $0x88] sm:$0xff] %v282
                %v284 = vld [vmem:[%s246 + $0x120] sm:$0xff]
                %285 = vst [vmem:[%s247 + $0x90] sm:$0xff] %v284
                %v286 = vld [vmem:[%s246 + $0x130] sm:$0xff]
                %287 = vst [vmem:[%s247 + $0x98] sm:$0xff] %v286
                %v288 = vld [vmem:[%s246 + $0x140] sm:$0xff]
                %289 = vst [vmem:[%s247 + $0xa0] sm:$0xff] %v288
                %v290 = vld [vmem:[%s246 + $0x150] sm:$0xff]
                %291 = vst [vmem:[%s247 + $0xa8] sm:$0xff] %v290
                %v292 = vld [vmem:[%s246 + $0x160] sm:$0xff]
                %293 = vst [vmem:[%s247 + $0xb0] sm:$0xff] %v292
                %v294 = vld [vmem:[%s246 + $0x170] sm:$0xff]
                %295 = vst [vmem:[%s247 + $0xb8] sm:$0xff] %v294
                %v296 = vld [vmem:[%s246 + $0x180] sm:$0xff]
                %297 = vst [vmem:[%s247 + $0xc0] sm:$0xff] %v296
                %v298 = vld [vmem:[%s246 + $0x190] sm:$0xff]
                %299 = vst [vmem:[%s247 + $0xc8] sm:$0xff] %v298
                %v300 = vld [vmem:[%s246 + $0x1a0] sm:$0xff]
                %301 = vst [vmem:[%s247 + $0xd0] sm:$0xff] %v300
                %v302 = vld [vmem:[%s246 + $0x1b0] sm:$0xff]
                %303 = vst [vmem:[%s247 + $0xd8] sm:$0xff] %v302
                %v304 = vld [vmem:[%s246 + $0x1c0] sm:$0xff]
                %305 = vst [vmem:[%s247 + $0xe0] sm:$0xff] %v304
                %v306 = vld [vmem:[%s246 + $0x1d0] sm:$0xff]
                %307 = vst [vmem:[%s247 + $0xe8] sm:$0xff] %v306
                %v308 = vld [vmem:[%s246 + $0x1e0] sm:$0xff]
                %309 = vst [vmem:[%s247 + $0xf0] sm:$0xff] %v308
                %v310 = vld [vmem:[%s246 + $0x1f0] sm:$0xff]
                %311 = vst [vmem:[%s247 + $0xf8] sm:$0xff] %v310
              $region75: #{ssley_forward.16} parent=69 // loop_footer
                %s245 = sadd.s32 1, %s241
              $region76: #{ssley_forward.16} parent=69 // loop_footer_branch
                %240 = sbr.rel target = $region72
              $region77: #{ssley_forward.16} parent=69 // loop_exit
                _
            $region70: #{ssley_forward.16} parent=61 // pred_fallthru
              _
          $region62: #{ssley_forward.16} parent=57 // pred_fallthru
            _
          %388 = vnop
        $region58: #{ssley_forward.16} parent=15 // pred_fallthru
          _
        // Predicated region
        $region93: #{ssley_forward.16} parent=15 // pred_check
          %p389 = pneg %p97
        $region94: #{ssley_forward.16} parent=15 // pred_check_branch
          %391 = sbr.rel (%p389) target = $region96
        $region95: #{ssley_forward.16} parent=15 // pred_region
          %s392 = smul.u32 2, %s18
          %p393 = scmp.lt.s32.totalorder %s392, 3
          %s394 = scalar_select %p393, %s392, 3
          %s395 = scalar_lea.vmem %s2, %s394
          %s396 = smul.u32 2, %s18
        $region96: #{ssley_forward.16} parent=15 // pred_fallthru
          _
      $region16: #{ssley_forward.16} parent=5 // pred_fallthru
        _
      %p397 = scmp.le.s32.totalorder 1, %s11
      %p398 = scmp.lt.s32.totalorder %s11, 5
      %p399 = pnand %p397, %p398
      %p400 = pneg %p399
      // Predicated region
      $region97: #{ssley_forward.16} parent=5 // pred_check
        _
      $region98: #{ssley_forward.16} parent=5 // pred_check_branch
        %402 = sbr.rel (%p399) target = $region100
      $region99: #{ssley_forward.16} parent=5 // pred_region
        %s403 = ssub.s32 %s11, 1
        %s404 = sand.u32 %s36, 1
        %s405 = sand.u32 %s36, 1
        %s406 = smul.addr %s405, 16
        %s407 = scalar_lea.vmem [#allocation3], %s406
        // Predicated region
        $region101: #{ssley_forward.16} parent=99 // pred_check
          %p408 = pneg %p49
        $region102: #{ssley_forward.16} parent=99 // pred_check_branch
          %410 = sbr.rel (%p408) target = $region104
        $region103: #{ssley_forward.16} parent=99 // pred_region
          _
        $region104: #{ssley_forward.16} parent=99 // pred_fallthru
          _
        %s411 = sand.u32 %s64, 1
        %s412 = sand.u32 %s64, 1
        %s413 = smul.addr %s412, 256
        %s414 = scalar_lea.vmem [#allocation4], %s413
        // Predicated region
        $region105: #{ssley_forward.16} parent=99 // pred_check
          %p415 = pneg %p77
        $region106: #{ssley_forward.16} parent=99 // pred_check_branch
          %417 = sbr.rel (%p415) target = $region108
        $region107: #{ssley_forward.16} parent=99 // pred_region
          _
        $region108: #{ssley_forward.16} parent=99 // pred_fallthru
          _
        %s418 = sand.u32 %s36, 1
        %s419 = sand.u32 %s36, 1
        %s420 = smul.addr %s419, 16
        %s421 = scalar_lea.vmem [#allocation3], %s420
        %p422 = pneg %p49
        %p423 = pneg %p46
        %s424 = sand.u32 %s64, 1
        %s425 = sand.u32 %s64, 1
        %s426 = smul.addr %s425, 256
        %s427 = scalar_lea.vmem [#allocation4], %s426
        %p428 = pneg %p77
        %p429 = pneg %p74
        %s430 = smul.u32 2, %s20
        %p431 = scmp.lt.s32.totalorder %s430, 3
        %s432 = scalar_select %p431, %s430, 3
        %s433 = scalar_lea.vmem %s2, %s432
        %p434 = pneg %p103
        %p435 = pneg %p100
        %p436 = pneg %p129
        %p437 = pneg %p126
        %s438 = sand.u32 %s116, 1
        %s439 = sand.u32 %s116, 1
        %s440 = smul.addr %s439, 16
        %s441 = scalar_lea.vmem [#allocation5], %s440
        %p442 = pneg %p155
        %p443 = pneg %p152
        %s444 = smul.u32 2, %s20
        %p445 = scmp.lt.s32.totalorder %s444, 3
        %s446 = scalar_select %p445, %s444, 3
        %s447 = scalar_lea.vmem %s4, %s446
        %s448 = smul.u32 2, %s21
        %s449 = smul.u32 32, %s21
        %s450 = smul.u32 2, %s20
        %s451 = smul.u32 2, %s20
        %p452 = scmp.lt.s32.totalorder %s451, 3
        %s453 = scalar_select %p452, %s451, 3
        %s454 = scalar_lea.vmem %s2, %s453
        %s455 = smul.u32 2, %s20
        %s456 = smul.u32 2, %s20
        %s457 = smul.u32 2, %s20
        %p458 = scmp.lt.s32.totalorder %s457, 3
        %s459 = scalar_select %p458, %s457, 3
        %s460 = scalar_lea.vmem %s4, %s459
        %s461 = smul.u32 2, %s20
        %p462 = scmp.eq.s32.totalorder %s21, 0
        // Predicated region
        $region109: #{ssley_forward.16} parent=99 // pred_check
          %p463 = pneg %p462
        $region110: #{ssley_forward.16} parent=99 // pred_check_branch
          %465 = sbr.rel (%p463) target = $region112
        $region111: #{ssley_forward.16} parent=99 // pred_region
          %466 = vst [vmem:[#allocation2] sm:$0xff] 0.0
          %467 = vst [vmem:[#allocation2 + $0x8] sm:$0xff] 0.0
          %468 = vst [vmem:[#allocation2 + $0x10] sm:$0xff] 0.0
          %469 = vst [vmem:[#allocation2 + $0x18] sm:$0xff] 0.0
        $region112: #{ssley_forward.16} parent=99 // pred_fallthru
          _
        %v470 = vld [vmem:[#allocation2] sm:$0xff]
        %v471 = vld [vmem:[#allocation2 + $0x8] sm:$0xff]
        %v472 = vld [vmem:[#allocation2 + $0x10] sm:$0xff]
        %v473 = vld [vmem:[#allocation2 + $0x18] sm:$0xff]
        %v474 = vld [vmem:[%s407] sm:$0xff]
        %v475 = vld [vmem:[%s407 + $0x8] sm:$0xff]
        %v476 = vld [vmem:[%s414] sm:$0xff]
        %v477 = vld [vmem:[%s414 + $0x8] sm:$0xff]
        %v478 = vld [vmem:[%s414 + $0x10] sm:$0xff]
        %v479 = vld [vmem:[%s414 + $0x18] sm:$0xff]
        %v480 = vld [vmem:[%s414 + $0x20] sm:$0xff]
        %v481 = vld [vmem:[%s414 + $0x28] sm:$0xff]
        %v482 = vld [vmem:[%s414 + $0x30] sm:$0xff]
        %v483 = vld [vmem:[%s414 + $0x38] sm:$0xff]
        %v484 = vld [vmem:[%s414 + $0x40] sm:$0xff]
        %v485 = vld [vmem:[%s414 + $0x48] sm:$0xff]
        %v486 = vld [vmem:[%s414 + $0x50] sm:$0xff]
        %v487 = vld [vmem:[%s414 + $0x58] sm:$0xff]
        %v488 = vld [vmem:[%s414 + $0x60] sm:$0xff]
        %v489 = vld [vmem:[%s414 + $0x68] sm:$0xff]
        %v490 = vld [vmem:[%s414 + $0x70] sm:$0xff]
        %v491 = vld [vmem:[%s414 + $0x78] sm:$0xff]
        %v492 = vld [vmem:[%s414 + $0x80] sm:$0xff]
        %v493 = vld [vmem:[%s414 + $0x88] sm:$0xff]
        %v494 = vld [vmem:[%s414 + $0x90] sm:$0xff]
        %v495 = vld [vmem:[%s414 + $0x98] sm:$0xff]
        %v496 = vld [vmem:[%s414 + $0xa0] sm:$0xff]
        %v497 = vld [vmem:[%s414 + $0xa8] sm:$0xff]
        %v498 = vld [vmem:[%s414 + $0xb0] sm:$0xff]
        %v499 = vld [vmem:[%s414 + $0xb8] sm:$0xff]
        %v500 = vld [vmem:[%s414 + $0xc0] sm:$0xff]
        %v501 = vld [vmem:[%s414 + $0xc8] sm:$0xff]
        %v502 = vld [vmem:[%s414 + $0xd0] sm:$0xff]
        %v503 = vld [vmem:[%s414 + $0xd8] sm:$0xff]
        %v504 = vld [vmem:[%s414 + $0xe0] sm:$0xff]
        %v505 = vld [vmem:[%s414 + $0xe8] sm:$0xff]
        %v506 = vld [vmem:[%s414 + $0xf0] sm:$0xff]
        %v507 = vld [vmem:[%s414 + $0xf8] sm:$0xff]
        %v510 = vunpack.c.l.b16 %v474
        %v511 = vunpack.c.h.b16 %v474
        %v512 = vunpack.c.l.b16 %v475
        %v513 = vunpack.c.h.b16 %v475
        %v514 = vpack.c.b16 %v512, %v510
        %v515 = vpack.c.b16 %v513, %v511
        %v550 = vunpack.c.l.b16 %v476
        %v551 = vunpack.c.h.b16 %v476
        %v552 = vunpack.c.l.b16 %v477
        %v553 = vunpack.c.h.b16 %v477
        %v554 = vunpack.c.l.b16 %v478
        %v555 = vunpack.c.h.b16 %v478
        %v556 = vunpack.c.l.b16 %v479
        %v557 = vunpack.c.h.b16 %v479
        %v558 = vunpack.c.l.b16 %v480
        %v559 = vunpack.c.h.b16 %v480
        %v560 = vunpack.c.l.b16 %v481
        %v561 = vunpack.c.h.b16 %v481
        %v562 = vunpack.c.l.b16 %v482
        %v563 = vunpack.c.h.b16 %v482
        %v564 = vunpack.c.l.b16 %v483
        %v565 = vunpack.c.h.b16 %v483
        %v566 = vunpack.c.l.b16 %v484
        %v567 = vunpack.c.h.b16 %v484
        %v568 = vunpack.c.l.b16 %v485
        %v569 = vunpack.c.h.b16 %v485
        %v570 = vunpack.c.l.b16 %v486
        %v571 = vunpack.c.h.b16 %v486
        %v572 = vunpack.c.l.b16 %v487
        %v573 = vunpack.c.h.b16 %v487
        %v574 = vunpack.c.l.b16 %v488
        %v575 = vunpack.c.h.b16 %v488
        %v576 = vunpack.c.l.b16 %v489
        %v577 = vunpack.c.h.b16 %v489
        %v578 = vunpack.c.l.b16 %v490
        %v579 = vunpack.c.h.b16 %v490
        %v580 = vunpack.c.l.b16 %v491
        %v581 = vunpack.c.h.b16 %v491
        %v582 = vunpack.c.l.b16 %v492
        %v583 = vunpack.c.h.b16 %v492
        %v584 = vunpack.c.l.b16 %v493
        %v585 = vunpack.c.h.b16 %v493
        %v586 = vunpack.c.l.b16 %v494
        %v587 = vunpack.c.h.b16 %v494
        %v588 = vunpack.c.l.b16 %v495
        %v589 = vunpack.c.h.b16 %v495
        %v590 = vunpack.c.l.b16 %v496
        %v591 = vunpack.c.h.b16 %v496
        %v592 = vunpack.c.l.b16 %v497
        %v593 = vunpack.c.h.b16 %v497
        %v594 = vunpack.c.l.b16 %v498
        %v595 = vunpack.c.h.b16 %v498
        %v596 = vunpack.c.l.b16 %v499
        %v597 = vunpack.c.h.b16 %v499
        %v598 = vunpack.c.l.b16 %v500
        %v599 = vunpack.c.h.b16 %v500
        %v600 = vunpack.c.l.b16 %v501
        %v601 = vunpack.c.h.b16 %v501
        %v602 = vunpack.c.l.b16 %v502
        %v603 = vunpack.c.h.b16 %v502
        %v604 = vunpack.c.l.b16 %v503
        %v605 = vunpack.c.h.b16 %v503
        %v606 = vunpack.c.l.b16 %v504
        %v607 = vunpack.c.h.b16 %v504
        %v608 = vunpack.c.l.b16 %v505
        %v609 = vunpack.c.h.b16 %v505
        %v610 = vunpack.c.l.b16 %v506
        %v611 = vunpack.c.h.b16 %v506
        %v612 = vunpack.c.l.b16 %v507
        %v613 = vunpack.c.h.b16 %v507
        %v614 = vpack.c.b16 %v552, %v550
        %v615 = vpack.c.b16 %v553, %v551
        %v616 = vpack.c.b16 %v556, %v554
        %v617 = vpack.c.b16 %v557, %v555
        %v618 = vpack.c.b16 %v560, %v558
        %v619 = vpack.c.b16 %v561, %v559
        %v620 = vpack.c.b16 %v564, %v562
        %v621 = vpack.c.b16 %v565, %v563
        %v622 = vpack.c.b16 %v568, %v566
        %v623 = vpack.c.b16 %v569, %v567
        %v624 = vpack.c.b16 %v572, %v570
        %v625 = vpack.c.b16 %v573, %v571
        %v626 = vpack.c.b16 %v576, %v574
        %v627 = vpack.c.b16 %v577, %v575
        %v628 = vpack.c.b16 %v580, %v578
        %v629 = vpack.c.b16 %v581, %v579
        %v630 = vpack.c.b16 %v584, %v582
        %v631 = vpack.c.b16 %v585, %v583
        %v632 = vpack.c.b16 %v588, %v586
        %v633 = vpack.c.b16 %v589, %v587
        %v634 = vpack.c.b16 %v592, %v590
        %v635 = vpack.c.b16 %v593, %v591
        %v636 = vpack.c.b16 %v596, %v594
        %v637 = vpack.c.b16 %v597, %v595
        %v638 = vpack.c.b16 %v600, %v598
        %v639 = vpack.c.b16 %v601, %v599
        %v640 = vpack.c.b16 %v604, %v602
        %v641 = vpack.c.b16 %v605, %v603
        %v642 = vpack.c.b16 %v608, %v606
        %v643 = vpack.c.b16 %v609, %v607
        %v644 = vpack.c.b16 %v612, %v610
        %v645 = vpack.c.b16 %v613, %v611
        %678 = vmatprep.subr.bf16.mxu0 %v615
        %679 = vmatpush1.bf16.msra.mxu0 %v614
        %680 = vmatprep.subr.bf16.mxu0 %v617
        %681 = vmatpush1.bf16.msra.mxu0 %v616
        %682 = vmatprep.subr.bf16.mxu0 %v619
        %683 = vmatpush1.bf16.msra.mxu0 %v618
        %684 = vmatprep.subr.bf16.mxu0 %v621
        %685 = vmatpush1.bf16.msra.mxu0 %v620
        %686 = vmatprep.subr.bf16.mxu0 %v623
        %687 = vmatpush1.bf16.msra.mxu0 %v622
        %688 = vmatprep.subr.bf16.mxu0 %v625
        %689 = vmatpush1.bf16.msra.mxu0 %v624
        %690 = vmatprep.subr.bf16.mxu0 %v627
        %691 = vmatpush1.bf16.msra.mxu0 %v626
        %692 = vmatprep.subr.bf16.mxu0 %v629
        %693 = vmatpush1.bf16.msra.mxu0 %v628
        %694 = vmatprep.subr.bf16.mxu0 %v631
        %695 = vmatpush1.bf16.msra.mxu0 %v630
        %696 = vmatprep.subr.bf16.mxu0 %v633
        %697 = vmatpush1.bf16.msra.mxu0 %v632
        %698 = vmatprep.subr.bf16.mxu0 %v635
        %699 = vmatpush1.bf16.msra.mxu0 %v634
        %700 = vmatprep.subr.bf16.mxu0 %v637
        %701 = vmatpush1.bf16.msra.mxu0 %v636
        %702 = vmatprep.subr.bf16.mxu0 %v639
        %703 = vmatpush1.bf16.msra.mxu0 %v638
        %704 = vmatprep.subr.bf16.mxu0 %v641
        %705 = vmatpush1.bf16.msra.mxu0 %v640
        %706 = vmatprep.subr.bf16.mxu0 %v643
        %707 = vmatpush1.bf16.msra.mxu0 %v642
        %708 = vmatprep.subr.bf16.mxu0 %v645
        %709 = vmatpush1.bf16.msra.mxu0 %v644
        %710 = vmatprep.mubr.bf16.mxu0 %v515
        %711 = vmatmul.mubr.bf16.gmra.mrb[0].mxu0 %v514
        %v712 = vpop.f32.mrb[0].mxu0
        %v713 = vadd.f32 0.0, %v712
        %v714 = vpop.f32.mrb[0].mxu0
        %v715 = vadd.f32 0.0, %v714
        %v716 = vpop.f32.mrb[0].mxu0
        %v717 = vadd.f32 0.0, %v716
        %v718 = vpop.f32.mrb[0].mxu0
        %v719 = vadd.f32 0.0, %v718
        %720 = vdwg.mxu0
        %v721 = vadd.f32 %v470, %v713
        %v722 = vadd.f32 %v471, %v715
        %v723 = vadd.f32 %v472, %v717
        %v724 = vadd.f32 %v473, %v719
        %725 = vst [vmem:[#allocation2] sm:$0xff] %v721
        %726 = vst [vmem:[#allocation2 + $0x8] sm:$0xff] %v722
        %727 = vst [vmem:[#allocation2 + $0x10] sm:$0xff] %v723
        %728 = vst [vmem:[#allocation2 + $0x18] sm:$0xff] %v724
        %p729 = scmp.eq.s32.totalorder %s21, 1
        // Predicated region
        $region113: #{ssley_forward.16} parent=99 // pred_check
          %p730 = pneg %p729
        $region114: #{ssley_forward.16} parent=99 // pred_check_branch
          %732 = sbr.rel (%p730) target = $region116
        $region115: #{ssley_forward.16} parent=99 // pred_region
          %v733 = vld [vmem:[#allocation2] sm:$0xff]
          %v734 = vld [vmem:[#allocation2 + $0x8] sm:$0xff]
          %v735 = vld [vmem:[#allocation2 + $0x10] sm:$0xff]
          %v736 = vld [vmem:[#allocation2 + $0x18] sm:$0xff]
          %v737 = vld [vmem:[%s454] sm:$0x3]
          %v739 = vlaneseq
          %v740 = vshrl.u32 %v739, 7
          %v741 = vsub.s32 0, %v740
          %v742 = vrot.slane %v737, %v741
          %v743 = vlaneseq
          %v744 = vshrl.u32 %v743, 7
          %v745 = vsub.s32 1, %v744
          %v746 = vrot.slane %v737, %v745
          %v749 = vadd.f32 %v733, %v742
          %v750 = vadd.f32 %v734, %v746
          %v751 = vadd.f32 %v735, %v742
          %v752 = vadd.f32 %v736, %v746
          %v753 = vpack.c.bf16 %v751, %v749
          %v754 = vpack.c.bf16 %v752, %v750
          %v757 = vunpack.c.l.b16 %v753
          %v758 = vunpack.c.l.b16 %v754
          %v759 = vunpack.c.h.b16 %v753
          %v760 = vunpack.c.h.b16 %v754
          %v761 = vpack.c.b16 %v758, %v757
          %v762 = vpack.c.b16 %v760, %v759
          %765 = vst [vmem:[%s441] sm:$0xff] %v761
          %766 = vst [vmem:[%s441 + $0x8] sm:$0xff] %v762
          %v767 = vunpack.c.l.bf16 %v753
          %v768 = vunpack.c.l.bf16 %v754
          %v769 = vunpack.c.h.bf16 %v753
          %v770 = vunpack.c.h.bf16 %v754
          %v771 = vadd.f32 %v767, %v769
          %v772 = vrot.slane %v771, 4
          %v773 = vadd.f32 %v771, %v772
          %v774 = vrot.slane %v773, 2
          %v775 = vadd.f32 %v773, %v774
          %v776 = vrot.slane %v775, 1
          %v777 = vadd.f32 %v775, %v776
          %v778 = vadd.f32 %v768, %v770
          %v779 = vrot.slane %v778, 4
          %v780 = vadd.f32 %v778, %v779
          %v781 = vrot.slane %v780, 2
          %v782 = vadd.f32 %v780, %v781
          %v783 = vrot.slane %v782, 1
          %v784 = vadd.f32 %v782, %v783
          %v785 = vrcp.pop 16.0
          %v786 = vmul.f32 %v777, %v785
          %v787 = vmul.f32 %v784, %v785
          %v790 = vcombine.low %v786, %v787
          %v792 = vunpack.c.l.s4 1966171168
          %v793 = vunpack.c.0.s8 %v792
          %v794 = vlaneseq
          %v795 = vshrl.u32 %v794, 7
          %v796 = vsub.s32 %v793, %v795
          %v797 = vrot.slane %v790, %v796
          %v799 = vunpack.c.l.s4 1966171168
          %v800 = vunpack.c.0.s8 %v799
          %v801 = vlaneseq
          %v802 = vshrl.u32 %v801, 7
          %v803 = vsub.s32 %v800, %v802
          %v804 = vrot.slane %v797, %v803
          %v806 = vlaneseq
          %vm807 = vcmp.ge.s32.totalorder %v806, 0
          %vm808 = vcmp.lt.s32.totalorder %v806, 256
          %vm809 = vmand %vm807, %vm808
          %810 = vst.msk [vmem:[%s460] sm:$0x3] %vm809, %v804
        $region116: #{ssley_forward.16} parent=99 // pred_fallthru
          _
        %s811 = sand.u32 %s116, 1
        %s812 = sand.u32 %s116, 1
        %s813 = smul.addr %s812, 16
        %s814 = scalar_lea.vmem [#allocation5], %s813
        %s815 = smul.u32 2, %s20
        %p816 = scmp.lt.s32.totalorder %s815, 3
        %s817 = scalar_select %p816, %s815, 3
        %s818 = scalar_lea.vmem %s4, %s817
        // Predicated region
        $region117: #{ssley_forward.16} parent=99 // pred_check
          %p819 = pneg %p126
        $region118: #{ssley_forward.16} parent=99 // pred_check_branch
          %821 = sbr.rel (%p819) target = $region120
        $region119: #{ssley_forward.16} parent=99 // pred_region
          %s822 = smul.u32 2, %s20
          %s823 = smul.addr %s822, 4
          %s824 = scalar_lea.vmem %s3, %s823
          // Predicated region
          $region121: #{ssley_forward.16} parent=119 // pred_check
            _
          $region122: #{ssley_forward.16} parent=119 // pred_check_branch
            %826 = sbr.rel (0) target = $region124
          $region123: #{ssley_forward.16} parent=119 // pred_region
            // Predicated region
            $region125: #{ssley_forward.16} parent=123 // pred_check
              _
            $region126: #{ssley_forward.16} parent=123 // pred_check_branch
              %828 = sbr.rel (0) target = $region128
            $region127: #{ssley_forward.16} parent=123 // pred_region
              // Predicated region
              $region140: #{ssley_forward.16} parent=127 // pred_check
                _
              $region141: #{ssley_forward.16} parent=127 // pred_check_branch
                %845 = sbr.rel (0) target = $region143
              $region142: #{ssley_forward.16} parent=127 // pred_region
                loop: start=0, step=1, limit=1
                $region144: #{ssley_forward.16} parent=142 // loop_pre_header
                  _
                $region145: #{ssley_forward.16} parent=142 // loop_header
                  %s847 = sphi 0, %s851
                  %p848 = scmp.ge.s32.totalorder %s847, 1
                  %s852 = sphi %s814, %s814
                  %s853 = sphi %s824, %s824
                $region146: #{ssley_forward.16} parent=142 // loop_header_branch
                  %850 = sbr.rel (%p848) target = $region150
                $region147: #{ssley_forward.16} parent=142 // loop_body
                  %v854 = vld [vmem:[%s852] sm:$0xff]
                  %855 = vst [vmem:[%s853] sm:$0xff] %v854
                  %v856 = vld [vmem:[%s852 + $0x8] sm:$0xff]
                  %857 = vst [vmem:[%s853 + $0x10] sm:$0xff] %v856
                $region148: #{ssley_forward.16} parent=142 // loop_footer
                  %s851 = sadd.s32 1, %s847
                $region149: #{ssley_forward.16} parent=142 // loop_footer_branch
                  %846 = sbr.rel target = $region145
                $region150: #{ssley_forward.16} parent=142 // loop_exit
                  _
              $region143: #{ssley_forward.16} parent=127 // pred_fallthru
                _
              // Predicated region
              $region151: #{ssley_forward.16} parent=127 // pred_check
                _
              $region152: #{ssley_forward.16} parent=127 // pred_check_branch
                %859 = sbr.rel target = $region154
              $region153: #{ssley_forward.16} parent=127 // pred_region
                _
              $region154: #{ssley_forward.16} parent=127 // pred_fallthru
                _
            $region128: #{ssley_forward.16} parent=123 // pred_fallthru
              _
            // Predicated region
            $region129: #{ssley_forward.16} parent=123 // pred_check
              _
            $region130: #{ssley_forward.16} parent=123 // pred_check_branch
              %830 = sbr.rel target = $region132
            $region131: #{ssley_forward.16} parent=123 // pred_region
              loop: start=0, step=1, limit=1
              $region133: #{ssley_forward.16} parent=131 // loop_pre_header
                _
              $region134: #{ssley_forward.16} parent=131 // loop_header
                %s833 = sphi 0, %s837
                %p834 = scmp.ge.s32.totalorder %s833, 1
                %s838 = sphi %s814, %s814
                %s839 = sphi %s824, %s824
              $region135: #{ssley_forward.16} parent=131 // loop_header_branch
                %836 = sbr.rel (%p834) target = $region139
              $region136: #{ssley_forward.16} parent=131 // loop_body
                %v840 = vld [vmem:[%s838] sm:$0xff]
                %841 = vst [vmem:[%s839] sm:$0xff] %v840
                %v842 = vld [vmem:[%s838 + $0x8] sm:$0xff]
                %843 = vst [vmem:[%s839 + $0x10] sm:$0xff] %v842
              $region137: #{ssley_forward.16} parent=131 // loop_footer
                %s837 = sadd.s32 1, %s833
              $region138: #{ssley_forward.16} parent=131 // loop_footer_branch
                %832 = sbr.rel target = $region134
              $region139: #{ssley_forward.16} parent=131 // loop_exit
                _
            $region132: #{ssley_forward.16} parent=123 // pred_fallthru
              _
          $region124: #{ssley_forward.16} parent=119 // pred_fallthru
            _
          %860 = vnop
        $region120: #{ssley_forward.16} parent=99 // pred_fallthru
          _
        // Predicated region
        $region155: #{ssley_forward.16} parent=99 // pred_check
          %p861 = pneg %p152
        $region156: #{ssley_forward.16} parent=99 // pred_check_branch
          %863 = sbr.rel (%p861) target = $region158
        $region157: #{ssley_forward.16} parent=99 // pred_region
          %s864 = smul.u32 2, %s20
        $region158: #{ssley_forward.16} parent=99 // pred_fallthru
          _
      $region100: #{ssley_forward.16} parent=5 // pred_fallthru
        _
      %p865 = scmp.le.s32.totalorder 2, %s11
      // Predicated region
      $region159: #{ssley_forward.16} parent=5 // pred_check
        %p866 = pneg %p865
      $region160: #{ssley_forward.16} parent=5 // pred_check_branch
        %868 = sbr.rel (%p866) target = $region162
      $region161: #{ssley_forward.16} parent=5 // pred_region
        %s869 = ssub.s32 %s11, 2
        // Predicated region
        $region163: #{ssley_forward.16} parent=161 // pred_check
          %p870 = pneg %p132
        $region164: #{ssley_forward.16} parent=161 // pred_check_branch
          %872 = sbr.rel (%p870) target = $region166
        $region165: #{ssley_forward.16} parent=161 // pred_region
          %s873 = sand.u32 %s117, 1
          %s874 = sand.u32 %s117, 1
          %s875 = smul.addr %s874, 16
          %s876 = scalar_lea.vmem [#allocation5], %s875
        $region166: #{ssley_forward.16} parent=161 // pred_fallthru
          _
        // Predicated region
        $region167: #{ssley_forward.16} parent=161 // pred_check
          %p877 = pneg %p158
        $region168: #{ssley_forward.16} parent=161 // pred_check_branch
          %879 = sbr.rel (%p877) target = $region170
        $region169: #{ssley_forward.16} parent=161 // pred_region
          %s880 = smul.u32 2, %s22
          %p881 = scmp.lt.s32.totalorder %s880, 3
          %s882 = scalar_select %p881, %s880, 3
          %s883 = scalar_lea.vmem %s4, %s882
        $region170: #{ssley_forward.16} parent=161 // pred_fallthru
          _
      $region162: #{ssley_forward.16} parent=5 // pred_fallthru
        _
    $region6: #{ssley_forward.16} parent=1 // loop_footer
      %s15 = sadd.s32 1, %s11
    $region7: #{ssley_forward.16} parent=1 // loop_footer_branch
      %10 = sbr.rel target = $region3
    $region8: #{ssley_forward.16} parent=1 // loop_exit
      _

// kernel: ssley_forward.17
$region0: #{ssley_forward.17}
  #allocation0 [shape = 'u32[]', space=smem, size = 0x4, offset = 0x4, fixed_abs, tag = 'smem constant byte address 0x4 - core index']
  #allocation1 [shape = 'u32[144,128]{1,0:T(1,128)}', space=vmem, size = 0x12000, scoped, tag = 'internal scratch']
  #allocation2 [shape = 'f32[256,256]{1,0:T(8,128)}', space=vmem, size = 0x40000, scoped, tag = 'scratch operand']
  #allocation3 [shape = 'f32[1,1]{1,0:T(1,128)}', space=vmem, size = 0x200, scoped, tag = 'scratch operand']
  %s0 = inlined_call_operand.vmem [shape: bf16[512,16], index: 0, kind: input, shape index: {}]
  %s1 = inlined_call_operand.vmem [shape: bf16[16,512], index: 1, kind: input, shape index: {}]
  %s2 = inlined_call_operand.vmem [shape: bf16[512,16], index: 2, kind: input, shape index: {}]
  %s3 = inlined_call_operand.vmem [shape: bf16[16,512], index: 3, kind: input, shape index: {}]
  %s4 = inlined_call_operand.vmem [shape: f32[512,1], index: 4, kind: input, shape index: {}]
  %s5 = inlined_call_operand.vmem [shape: f32[512,1], index: 5, kind: input, shape index: {}]
  %s6 = inlined_call_operand.vmem [shape: f32[1,512], index: 6, kind: input, shape index: {}]
  %s7 = inlined_call_operand.vmem [shape: f32[1,512], index: 7, kind: input, shape index: {}]
  %s8 = inlined_call_operand.vmem [shape: f32[16,128], index: 8, kind: output, shape index: {}]
  %s9 = sld [smem:[#allocation0]]
  $region165: #{ssley_forward.17} parent=0
    _
  %s11 = ssub.s32 1, %s9
  %s12 = scalar_select 0, %s11, %s9
  $region1: #{ssley_forward.17} parent=0
    #allocation4 [shape = 'u8[16384]{0}', space=vmem, size = 0x4000, scoped, tag = 'input window, operand 1']
    #allocation5 [shape = 'u8[16384]{0}', space=vmem, size = 0x4000, scoped, tag = 'input window, operand 3']
    loop: start=0, step=1, limit=6
    $region2: #{ssley_forward.17} parent=1 // loop_pre_header
      _
    $region3: #{ssley_forward.17} parent=1 // loop_header
      %s14 = sphi 0, %s18
      %p15 = scmp.ge.s32.totalorder %s14, 6
      %s21 = sphi 0, %s40
      %s22 = sphi 0, %s36
      %s23 = sphi 0, %s32
      %s24 = sphi 0, %s21
      %s25 = sphi 0, %s22
      %s26 = sphi 0, %s23
      %s27 = sphi 0, %s24
      %s28 = sphi 0, %s25
      %s29 = sphi 0, %s26
      %s45 = sphi 0, %s47
      %s48 = sphi 0, %s45
      %s49 = sphi 0, %s48
      %s65 = sphi 0, %s49
      %s73 = sphi 0, %s75
      %s76 = sphi 0, %s73
      %s77 = sphi 0, %s76
      %s93 = sphi 0, %s77
      %s101 = sphi 0, %s103
      %s104 = sphi 0, %s101
      %s105 = sphi 0, %s104
      %s121 = sphi 0, %s105
      %s129 = sphi 0, %s131
      %s132 = sphi 0, %s129
      %s133 = sphi 0, %s132
      %s149 = sphi 0, %s133
      %s155 = sphi 0, %s157
      %s158 = sphi 0, %s155
      %s159 = sphi 0, %s158
      %s175 = sphi 0, %s159
      %s181 = sphi 0, %s183
      %s184 = sphi 0, %s181
      %s185 = sphi 0, %s184
      %s201 = sphi 0, %s185
      %s207 = sphi 0, %s209
      %s210 = sphi 0, %s207
      %s211 = sphi 0, %s210
      %s227 = sphi 0, %s211
      %s233 = sphi 0, %s235
      %s236 = sphi 0, %s233
      %s237 = sphi 0, %s236
      %s253 = sphi 0, %s237
      %s259 = sphi 0, %s261
      %s262 = sphi 0, %s259
      %s263 = sphi 0, %s262
      %s279 = sphi 0, %s263
    $region4: #{ssley_forward.17} parent=1 // loop_header_branch
      %17 = sbr.rel (%p15) target = $region8
    $region5: #{ssley_forward.17} parent=1 // loop_body
      %s19 = ssub.s32 %s14, 1
      %s20 = ssub.s32 %s14, 2
      %s30 = sadd.s32 1, %s23
      %p31 = scmp.ge.s32.totalorder %s30, 1
      %s32 = scalar_select %p31, 0, %s30
      %s33 = sadd.s32 1, %s22
      %s34 = scalar_select %p31, %s33, %s22
      %p35 = scmp.ge.s32.totalorder %s34, 2
      %s36 = scalar_select %p35, 0, %s34
      %s37 = sadd.s32 1, %s21
      %s38 = scalar_select %p35, %s37, %s21
      %p39 = scmp.ge.s32.totalorder %s38, 2
      %s40 = scalar_select %p39, 0, %s38
      %s41 = ssub.s32 %s21, %s40
      %s42 = ssub.s32 %s23, %s32
      %s43 = sor.u32 %s41, %s42
      %p44 = scmp.eq.s32.totalorder %s43, 0
      %s46 = sadd.s32 %s45, 1
      %s47 = scalar_select %p44, %s45, %s46
      %p50 = pneg %p44
      %p51 = scmp.eq.s32.totalorder %s14, 3
      %p52 = por %p50, %p51
      %p53 = scmp.ne.s32.totalorder %s45, %s48
      %p54 = scmp.eq.s32.totalorder %s14, 0
      %p55 = por %p53, %p54
      %p56 = scmp.ne.s32.totalorder %s45, %s48
      %p57 = scmp.eq.s32.totalorder %s19, 3
      %p58 = por %p56, %p57
      %p59 = scmp.ne.s32.totalorder %s48, %s49
      %p60 = scmp.eq.s32.totalorder %s19, 0
      %p61 = por %p59, %p60
      %p62 = scmp.ne.s32.totalorder %s48, %s49
      %p63 = scmp.eq.s32.totalorder %s20, 3
      %p64 = por %p62, %p63
      %p66 = scmp.ne.s32.totalorder %s49, %s65
      %p67 = scmp.eq.s32.totalorder %s20, 0
      %p68 = por %p66, %p67
      %s69 = ssub.s32 %s23, %s32
      %s70 = ssub.s32 %s22, %s36
      %s71 = sor.u32 %s69, %s70
      %p72 = scmp.eq.s32.totalorder %s71, 0
      %s74 = sadd.s32 %s73, 1
      %s75 = scalar_select %p72, %s73, %s74
      %p78 = pneg %p72
      %p79 = scmp.eq.s32.totalorder %s14, 3
      %p80 = por %p78, %p79
      %p81 = scmp.ne.s32.totalorder %s73, %s76
      %p82 = scmp.eq.s32.totalorder %s14, 0
      %p83 = por %p81, %p82
      %p84 = scmp.ne.s32.totalorder %s73, %s76
      %p85 = scmp.eq.s32.totalorder %s19, 3
      %p86 = por %p84, %p85
      %p87 = scmp.ne.s32.totalorder %s76, %s77
      %p88 = scmp.eq.s32.totalorder %s19, 0
      %p89 = por %p87, %p88
      %p90 = scmp.ne.s32.totalorder %s76, %s77
      %p91 = scmp.eq.s32.totalorder %s20, 3
      %p92 = por %p90, %p91
      %p94 = scmp.ne.s32.totalorder %s77, %s93
      %p95 = scmp.eq.s32.totalorder %s20, 0
      %p96 = por %p94, %p95
      %s97 = ssub.s32 %s21, %s40
      %s98 = ssub.s32 %s23, %s32
      %s99 = sor.u32 %s97, %s98
      %p100 = scmp.eq.s32.totalorder %s99, 0
      %s102 = sadd.s32 %s101, 1
      %s103 = scalar_select %p100, %s101, %s102
      %p106 = pneg %p100
      %p107 = scmp.eq.s32.totalorder %s14, 3
      %p108 = por %p106, %p107
      %p109 = scmp.ne.s32.totalorder %s101, %s104
      %p110 = scmp.eq.s32.totalorder %s14, 0
      %p111 = por %p109, %p110
      %p112 = scmp.ne.s32.totalorder %s101, %s104
      %p113 = scmp.eq.s32.totalorder %s19, 3
      %p114 = por %p112, %p113
      %p115 = scmp.ne.s32.totalorder %s104, %s105
      %p116 = scmp.eq.s32.totalorder %s19, 0
      %p117 = por %p115, %p116
      %p118 = scmp.ne.s32.totalorder %s104, %s105
      %p119 = scmp.eq.s32.totalorder %s20, 3
      %p120 = por %p118, %p119
      %p122 = scmp.ne.s32.totalorder %s105, %s121
      %p123 = scmp.eq.s32.totalorder %s20, 0
      %p124 = por %p122, %p123
      %s125 = ssub.s32 %s23, %s32
      %s126 = ssub.s32 %s22, %s36
      %s127 = sor.u32 %s125, %s126
      %p128 = scmp.eq.s32.totalorder %s127, 0
      %s130 = sadd.s32 %s129, 1
      %s131 = scalar_select %p128, %s129, %s130
      %p134 = pneg %p128
      %p135 = scmp.eq.s32.totalorder %s14, 3
      %p136 = por %p134, %p135
      %p137 = scmp.ne.s32.totalorder %s129, %s132
      %p138 = scmp.eq.s32.totalorder %s14, 0
      %p139 = por %p137, %p138
      %p140 = scmp.ne.s32.totalorder %s129, %s132
      %p141 = scmp.eq.s32.totalorder %s19, 3
      %p142 = por %p140, %p141
      %p143 = scmp.ne.s32.totalorder %s132, %s133
      %p144 = scmp.eq.s32.totalorder %s19, 0
      %p145 = por %p143, %p144
      %p146 = scmp.ne.s32.totalorder %s132, %s133
      %p147 = scmp.eq.s32.totalorder %s20, 3
      %p148 = por %p146, %p147
      %p150 = scmp.ne.s32.totalorder %s133, %s149
      %p151 = scmp.eq.s32.totalorder %s20, 0
      %p152 = por %p150, %p151
      %s153 = ssub.s32 %s21, %s40
      %p154 = scmp.eq.s32.totalorder %s153, 0
      %s156 = sadd.s32 %s155, 1
      %s157 = scalar_select %p154, %s155, %s156
      %p160 = pneg %p154
      %p161 = scmp.eq.s32.totalorder %s14, 3
      %p162 = por %p160, %p161
      %p163 = scmp.ne.s32.totalorder %s155, %s158
      %p164 = scmp.eq.s32.totalorder %s14, 0
      %p165 = por %p163, %p164
      %p166 = scmp.ne.s32.totalorder %s155, %s158
      %p167 = scmp.eq.s32.totalorder %s19, 3
      %p168 = por %p166, %p167
      %p169 = scmp.ne.s32.totalorder %s158, %s159
      %p170 = scmp.eq.s32.totalorder %s19, 0
      %p171 = por %p169, %p170
      %p172 = scmp.ne.s32.totalorder %s158, %s159
      %p173 = scmp.eq.s32.totalorder %s20, 3
      %p174 = por %p172, %p173
      %p176 = scmp.ne.s32.totalorder %s159, %s175
      %p177 = scmp.eq.s32.totalorder %s20, 0
      %p178 = por %p176, %p177
      %s179 = ssub.s32 %s21, %s40
      %p180 = scmp.eq.s32.totalorder %s179, 0
      %s182 = sadd.s32 %s181, 1
      %s183 = scalar_select %p180, %s181, %s182
      %p186 = pneg %p180
      %p187 = scmp.eq.s32.totalorder %s14, 3
      %p188 = por %p186, %p187
      %p189 = scmp.ne.s32.totalorder %s181, %s184
      %p190 = scmp.eq.s32.totalorder %s14, 0
      %p191 = por %p189, %p190
      %p192 = scmp.ne.s32.totalorder %s181, %s184
      %p193 = scmp.eq.s32.totalorder %s19, 3
      %p194 = por %p192, %p193
      %p195 = scmp.ne.s32.totalorder %s184, %s185
      %p196 = scmp.eq.s32.totalorder %s19, 0
      %p197 = por %p195, %p196
      %p198 = scmp.ne.s32.totalorder %s184, %s185
      %p199 = scmp.eq.s32.totalorder %s20, 3
      %p200 = por %p198, %p199
      %p202 = scmp.ne.s32.totalorder %s185, %s201
      %p203 = scmp.eq.s32.totalorder %s20, 0
      %p204 = por %p202, %p203
      %s205 = ssub.s32 %s22, %s36
      %p206 = scmp.eq.s32.totalorder %s205, 0
      %s208 = sadd.s32 %s207, 1
      %s209 = scalar_select %p206, %s207, %s208
      %p212 = pneg %p206
      %p213 = scmp.eq.s32.totalorder %s14, 3
      %p214 = por %p212, %p213
      %p215 = scmp.ne.s32.totalorder %s207, %s210
      %p216 = scmp.eq.s32.totalorder %s14, 0
      %p217 = por %p215, %p216
      %p218 = scmp.ne.s32.totalorder %s207, %s210
      %p219 = scmp.eq.s32.totalorder %s19, 3
      %p220 = por %p218, %p219
      %p221 = scmp.ne.s32.totalorder %s210, %s211
      %p222 = scmp.eq.s32.totalorder %s19, 0
      %p223 = por %p221, %p222
      %p224 = scmp.ne.s32.totalorder %s210, %s211
      %p225 = scmp.eq.s32.totalorder %s20, 3
      %p226 = por %p224, %p225
      %p228 = scmp.ne.s32.totalorder %s211, %s227
      %p229 = scmp.eq.s32.totalorder %s20, 0
      %p230 = por %p228, %p229
      %s231 = ssub.s32 %s22, %s36
      %p232 = scmp.eq.s32.totalorder %s231, 0
      %s234 = sadd.s32 %s233, 1
      %s235 = scalar_select %p232, %s233, %s234
      %p238 = pneg %p232
      %p239 = scmp.eq.s32.totalorder %s14, 3
      %p240 = por %p238, %p239
      %p241 = scmp.ne.s32.totalorder %s233, %s236
      %p242 = scmp.eq.s32.totalorder %s14, 0
      %p243 = por %p241, %p242
      %p244 = scmp.ne.s32.totalorder %s233, %s236
      %p245 = scmp.eq.s32.totalorder %s19, 3
      %p246 = por %p244, %p245
      %p247 = scmp.ne.s32.totalorder %s236, %s237
      %p248 = scmp.eq.s32.totalorder %s19, 0
      %p249 = por %p247, %p248
      %p250 = scmp.ne.s32.totalorder %s236, %s237
      %p251 = scmp.eq.s32.totalorder %s20, 3
      %p252 = por %p250, %p251
      %p254 = scmp.ne.s32.totalorder %s237, %s253
      %p255 = scmp.eq.s32.totalorder %s20, 0
      %p256 = por %p254, %p255
      %s257 = ssub.s32 %s21, %s40
      %p258 = scmp.eq.s32.totalorder %s257, 0
      %s260 = sadd.s32 %s259, 1
      %s261 = scalar_select %p258, %s259, %s260
      %p264 = pneg %p258
      %p265 = scmp.eq.s32.totalorder %s14, 3
      %p266 = por %p264, %p265
      %p267 = scmp.ne.s32.totalorder %s259, %s262
      %p268 = scmp.eq.s32.totalorder %s14, 0
      %p269 = por %p267, %p268
      %p270 = scmp.ne.s32.totalorder %s259, %s262
      %p271 = scmp.eq.s32.totalorder %s19, 3
      %p272 = por %p270, %p271
      %p273 = scmp.ne.s32.totalorder %s262, %s263
      %p274 = scmp.eq.s32.totalorder %s19, 0
      %p275 = por %p273, %p274
      %p276 = scmp.ne.s32.totalorder %s262, %s263
      %p277 = scmp.eq.s32.totalorder %s20, 3
      %p278 = por %p276, %p277
      %p280 = scmp.ne.s32.totalorder %s263, %s279
      %p281 = scmp.eq.s32.totalorder %s20, 0
      %p282 = por %p280, %p281
      %p283 = scmp.le.s32.totalorder 1, %s14
      %p284 = scmp.lt.s32.totalorder %s14, 5
      %p285 = pnand %p283, %p284
      %p286 = pneg %p285
      // Predicated region
      $region9: #{ssley_forward.17} parent=5 // pred_check
        _
      $region10: #{ssley_forward.17} parent=5 // pred_check_branch
        %288 = sbr.rel (%p285) target = $region12
      $region11: #{ssley_forward.17} parent=5 // pred_region
        %s289 = ssub.s32 %s14, 1
      $region12: #{ssley_forward.17} parent=5 // pred_fallthru
        _
      %p290 = scmp.lt.s32.totalorder %s14, 4
      // Predicated region
      $region13: #{ssley_forward.17} parent=5 // pred_check
        %p291 = pneg %p290
      $region14: #{ssley_forward.17} parent=5 // pred_check_branch
        %293 = sbr.rel (%p291) target = $region16
      $region15: #{ssley_forward.17} parent=5 // pred_region
        // Predicated region
        $region17: #{ssley_forward.17} parent=15 // pred_check
          %p294 = pneg %p55
        $region18: #{ssley_forward.17} parent=15 // pred_check_branch
          %296 = sbr.rel (%p294) target = $region20
        $region19: #{ssley_forward.17} parent=15 // pred_region
          %s297 = smul.u32 32, %s21
          %p298 = scmp.lt.s32.totalorder %s297, 63
          %s299 = scalar_select %p298, %s297, 63
          %p300 = scmp.lt.s32.totalorder %s23, 0
          %s301 = scalar_select %p300, %s23, 0
          %s302 = sadd.s32 %s301, %s299
          %s303 = smul.addr %s302, 4
          %s304 = scalar_lea.vmem %s0, %s303
          %s305 = smul.u32 32, %s21
        $region20: #{ssley_forward.17} parent=15 // pred_fallthru
          _
        // Predicated region
        $region21: #{ssley_forward.17} parent=15 // pred_check
          %p306 = pneg %p83
        $region22: #{ssley_forward.17} parent=15 // pred_check_branch
          %308 = sbr.rel (%p306) target = $region24
        $region23: #{ssley_forward.17} parent=15 // pred_region
          %s309 = sand.u32 %s73, 1
          %s310 = sand.u32 %s73, 1
          %s311 = smul.addr %s310, 16
          %s312 = scalar_lea.vmem [#allocation4], %s311
          %s313 = smul.u32 2, %s23
          %s314 = smul.u32 2, %s22
          %s315 = smul.addr %s313, 4
          %s316 = sadd.s32 %s314, %s315
          %s317 = smul.addr %s316, 4
          %s318 = scalar_lea.vmem %s1, %s317
          // Predicated region
          $region25: #{ssley_forward.17} parent=23 // pred_check
            _
          $region26: #{ssley_forward.17} parent=23 // pred_check_branch
            %320 = sbr.rel (0) target = $region28
          $region27: #{ssley_forward.17} parent=23 // pred_region
            // Predicated region
            $region29: #{ssley_forward.17} parent=27 // pred_check
              _
            $region30: #{ssley_forward.17} parent=27 // pred_check_branch
              %322 = sbr.rel (0) target = $region32
            $region31: #{ssley_forward.17} parent=27 // pred_region
              // Predicated region
              $region44: #{ssley_forward.17} parent=31 // pred_check
                _
              $region45: #{ssley_forward.17} parent=31 // pred_check_branch
                %339 = sbr.rel (0) target = $region47
              $region46: #{ssley_forward.17} parent=31 // pred_region
                loop: start=0, step=1, limit=1
                $region48: #{ssley_forward.17} parent=46 // loop_pre_header
                  _
                $region49: #{ssley_forward.17} parent=46 // loop_header
                  %s341 = sphi 0, %s345
                  %p342 = scmp.ge.s32.totalorder %s341, 1
                  %s346 = sphi %s318, %s318
                  %s347 = sphi %s312, %s312
                $region50: #{ssley_forward.17} parent=46 // loop_header_branch
                  %344 = sbr.rel (%p342) target = $region54
                $region51: #{ssley_forward.17} parent=46 // loop_body
                  %v348 = vld [vmem:[%s346] sm:$0xff]
                  %349 = vst [vmem:[%s347] sm:$0xff] %v348
                  %v350 = vld [vmem:[%s346 + $0x10] sm:$0xff]
                  %351 = vst [vmem:[%s347 + $0x8] sm:$0xff] %v350
                $region52: #{ssley_forward.17} parent=46 // loop_footer
                  %s345 = sadd.s32 1, %s341
                $region53: #{ssley_forward.17} parent=46 // loop_footer_branch
                  %340 = sbr.rel target = $region49
                $region54: #{ssley_forward.17} parent=46 // loop_exit
                  _
              $region47: #{ssley_forward.17} parent=31 // pred_fallthru
                _
              // Predicated region
              $region55: #{ssley_forward.17} parent=31 // pred_check
                _
              $region56: #{ssley_forward.17} parent=31 // pred_check_branch
                %353 = sbr.rel target = $region58
              $region57: #{ssley_forward.17} parent=31 // pred_region
                _
              $region58: #{ssley_forward.17} parent=31 // pred_fallthru
                _
            $region32: #{ssley_forward.17} parent=27 // pred_fallthru
              _
            // Predicated region
            $region33: #{ssley_forward.17} parent=27 // pred_check
              _
            $region34: #{ssley_forward.17} parent=27 // pred_check_branch
              %324 = sbr.rel target = $region36
            $region35: #{ssley_forward.17} parent=27 // pred_region
              loop: start=0, step=1, limit=1
              $region37: #{ssley_forward.17} parent=35 // loop_pre_header
                _
              $region38: #{ssley_forward.17} parent=35 // loop_header
                %s327 = sphi 0, %s331
                %p328 = scmp.ge.s32.totalorder %s327, 1
                %s332 = sphi %s318, %s318
                %s333 = sphi %s312, %s312
              $region39: #{ssley_forward.17} parent=35 // loop_header_branch
                %330 = sbr.rel (%p328) target = $region43
              $region40: #{ssley_forward.17} parent=35 // loop_body
                %v334 = vld [vmem:[%s332] sm:$0xff]
                %335 = vst [vmem:[%s333] sm:$0xff] %v334
                %v336 = vld [vmem:[%s332 + $0x10] sm:$0xff]
                %337 = vst [vmem:[%s333 + $0x8] sm:$0xff] %v336
              $region41: #{ssley_forward.17} parent=35 // loop_footer
                %s331 = sadd.s32 1, %s327
              $region42: #{ssley_forward.17} parent=35 // loop_footer_branch
                %326 = sbr.rel target = $region38
              $region43: #{ssley_forward.17} parent=35 // loop_exit
                _
            $region36: #{ssley_forward.17} parent=27 // pred_fallthru
              _
          $region28: #{ssley_forward.17} parent=23 // pred_fallthru
            _
          %354 = vnop
        $region24: #{ssley_forward.17} parent=15 // pred_fallthru
          _
        // Predicated region
        $region59: #{ssley_forward.17} parent=15 // pred_check
          %p355 = pneg %p111
        $region60: #{ssley_forward.17} parent=15 // pred_check_branch
          %357 = sbr.rel (%p355) target = $region62
        $region61: #{ssley_forward.17} parent=15 // pred_region
          %s358 = smul.u32 32, %s21
          %p359 = scmp.lt.s32.totalorder %s358, 63
          %s360 = scalar_select %p359, %s358, 63
          %p361 = scmp.lt.s32.totalorder %s23, 0
          %s362 = scalar_select %p361, %s23, 0
          %s363 = sadd.s32 %s362, %s360
          %s364 = smul.addr %s363, 4
          %s365 = scalar_lea.vmem %s2, %s364
          %s366 = smul.u32 32, %s21
        $region62: #{ssley_forward.17} parent=15 // pred_fallthru
          _
        // Predicated region
        $region63: #{ssley_forward.17} parent=15 // pred_check
          %p367 = pneg %p139
        $region64: #{ssley_forward.17} parent=15 // pred_check_branch
          %369 = sbr.rel (%p367) target = $region66
        $region65: #{ssley_forward.17} parent=15 // pred_region
          %s370 = sand.u32 %s129, 1
          %s371 = sand.u32 %s129, 1
          %s372 = smul.addr %s371, 16
          %s373 = scalar_lea.vmem [#allocation5], %s372
          %s374 = smul.u32 2, %s23
          %s375 = smul.u32 2, %s22
          %s376 = smul.addr %s374, 4
          %s377 = sadd.s32 %s375, %s376
          %s378 = smul.addr %s377, 4
          %s379 = scalar_lea.vmem %s3, %s378
          // Predicated region
          $region67: #{ssley_forward.17} parent=65 // pred_check
            _
          $region68: #{ssley_forward.17} parent=65 // pred_check_branch
            %381 = sbr.rel (0) target = $region70
          $region69: #{ssley_forward.17} parent=65 // pred_region
            // Predicated region
            $region71: #{ssley_forward.17} parent=69 // pred_check
              _
            $region72: #{ssley_forward.17} parent=69 // pred_check_branch
              %383 = sbr.rel (0) target = $region74
            $region73: #{ssley_forward.17} parent=69 // pred_region
              // Predicated region
              $region86: #{ssley_forward.17} parent=73 // pred_check
                _
              $region87: #{ssley_forward.17} parent=73 // pred_check_branch
                %400 = sbr.rel (0) target = $region89
              $region88: #{ssley_forward.17} parent=73 // pred_region
                loop: start=0, step=1, limit=1
                $region90: #{ssley_forward.17} parent=88 // loop_pre_header
                  _
                $region91: #{ssley_forward.17} parent=88 // loop_header
                  %s402 = sphi 0, %s406
                  %p403 = scmp.ge.s32.totalorder %s402, 1
                  %s407 = sphi %s379, %s379
                  %s408 = sphi %s373, %s373
                $region92: #{ssley_forward.17} parent=88 // loop_header_branch
                  %405 = sbr.rel (%p403) target = $region96
                $region93: #{ssley_forward.17} parent=88 // loop_body
                  %v409 = vld [vmem:[%s407] sm:$0xff]
                  %410 = vst [vmem:[%s408] sm:$0xff] %v409
                  %v411 = vld [vmem:[%s407 + $0x10] sm:$0xff]
                  %412 = vst [vmem:[%s408 + $0x8] sm:$0xff] %v411
                $region94: #{ssley_forward.17} parent=88 // loop_footer
                  %s406 = sadd.s32 1, %s402
                $region95: #{ssley_forward.17} parent=88 // loop_footer_branch
                  %401 = sbr.rel target = $region91
                $region96: #{ssley_forward.17} parent=88 // loop_exit
                  _
              $region89: #{ssley_forward.17} parent=73 // pred_fallthru
                _
              // Predicated region
              $region97: #{ssley_forward.17} parent=73 // pred_check
                _
              $region98: #{ssley_forward.17} parent=73 // pred_check_branch
                %414 = sbr.rel target = $region100
              $region99: #{ssley_forward.17} parent=73 // pred_region
                _
              $region100: #{ssley_forward.17} parent=73 // pred_fallthru
                _
            $region74: #{ssley_forward.17} parent=69 // pred_fallthru
              _
            // Predicated region
            $region75: #{ssley_forward.17} parent=69 // pred_check
              _
            $region76: #{ssley_forward.17} parent=69 // pred_check_branch
              %385 = sbr.rel target = $region78
            $region77: #{ssley_forward.17} parent=69 // pred_region
              loop: start=0, step=1, limit=1
              $region79: #{ssley_forward.17} parent=77 // loop_pre_header
                _
              $region80: #{ssley_forward.17} parent=77 // loop_header
                %s388 = sphi 0, %s392
                %p389 = scmp.ge.s32.totalorder %s388, 1
                %s393 = sphi %s379, %s379
                %s394 = sphi %s373, %s373
              $region81: #{ssley_forward.17} parent=77 // loop_header_branch
                %391 = sbr.rel (%p389) target = $region85
              $region82: #{ssley_forward.17} parent=77 // loop_body
                %v395 = vld [vmem:[%s393] sm:$0xff]
                %396 = vst [vmem:[%s394] sm:$0xff] %v395
                %v397 = vld [vmem:[%s393 + $0x10] sm:$0xff]
                %398 = vst [vmem:[%s394 + $0x8] sm:$0xff] %v397
              $region83: #{ssley_forward.17} parent=77 // loop_footer
                %s392 = sadd.s32 1, %s388
              $region84: #{ssley_forward.17} parent=77 // loop_footer_branch
                %387 = sbr.rel target = $region80
              $region85: #{ssley_forward.17} parent=77 // loop_exit
                _
            $region78: #{ssley_forward.17} parent=69 // pred_fallthru
              _
          $region70: #{ssley_forward.17} parent=65 // pred_fallthru
            _
          %415 = vnop
        $region66: #{ssley_forward.17} parent=15 // pred_fallthru
          _
        // Predicated region
        $region101: #{ssley_forward.17} parent=15 // pred_check
          %p416 = pneg %p165
        $region102: #{ssley_forward.17} parent=15 // pred_check_branch
          %418 = sbr.rel (%p416) target = $region104
        $region103: #{ssley_forward.17} parent=15 // pred_region
          %s419 = smul.u32 32, %s21
          %p420 = scmp.lt.s32.totalorder %s419, 63
          %s421 = scalar_select %p420, %s419, 63
          %s422 = smul.addr %s421, 8
          %s423 = scalar_lea.vmem %s4, %s422
          %s424 = smul.u32 32, %s21
        $region104: #{ssley_forward.17} parent=15 // pred_fallthru
          _
        // Predicated region
        $region105: #{ssley_forward.17} parent=15 // pred_check
          %p425 = pneg %p191
        $region106: #{ssley_forward.17} parent=15 // pred_check_branch
          %427 = sbr.rel (%p425) target = $region108
        $region107: #{ssley_forward.17} parent=15 // pred_region
          %s428 = smul.u32 32, %s21
          %p429 = scmp.lt.s32.totalorder %s428, 63
          %s430 = scalar_select %p429, %s428, 63
          %s431 = smul.addr %s430, 8
          %s432 = scalar_lea.vmem %s5, %s431
          %s433 = smul.u32 32, %s21
        $region108: #{ssley_forward.17} parent=15 // pred_fallthru
          _
        // Predicated region
        $region109: #{ssley_forward.17} parent=15 // pred_check
          %p434 = pneg %p217
        $region110: #{ssley_forward.17} parent=15 // pred_check_branch
          %436 = sbr.rel (%p434) target = $region112
        $region111: #{ssley_forward.17} parent=15 // pred_region
          %s437 = smul.u32 2, %s22
          %p438 = scmp.lt.s32.totalorder %s437, 3
          %s439 = scalar_select %p438, %s437, 3
          %s440 = scalar_lea.vmem %s6, %s439
          %s441 = smul.u32 2, %s22
        $region112: #{ssley_forward.17} parent=15 // pred_fallthru
          _
        // Predicated region
        $region113: #{ssley_forward.17} parent=15 // pred_check
          %p442 = pneg %p243
        $region114: #{ssley_forward.17} parent=15 // pred_check_branch
          %444 = sbr.rel (%p442) target = $region116
        $region115: #{ssley_forward.17} parent=15 // pred_region
          %s445 = smul.u32 2, %s22
          %p446 = scmp.lt.s32.totalorder %s445, 3
          %s447 = scalar_select %p446, %s445, 3
          %s448 = scalar_lea.vmem %s7, %s447
          %s449 = smul.u32 2, %s22
        $region116: #{ssley_forward.17} parent=15 // pred_fallthru
          _
      $region16: #{ssley_forward.17} parent=5 // pred_fallthru
        _
      %p450 = scmp.le.s32.totalorder 1, %s14
      %p451 = scmp.lt.s32.totalorder %s14, 5
      %p452 = pnand %p450, %p451
      %p453 = pneg %p452
      // Predicated region
      $region117: #{ssley_forward.17} parent=5 // pred_check
        _
      $region118: #{ssley_forward.17} parent=5 // pred_check_branch
        %455 = sbr.rel (%p452) target = $region120
      $region119: #{ssley_forward.17} parent=5 // pred_region
        %s456 = ssub.s32 %s14, 1
        %s457 = sand.u32 %s76, 1
        %s458 = sand.u32 %s76, 1
        %s459 = smul.addr %s458, 16
        %s460 = scalar_lea.vmem [#allocation4], %s459
        // Predicated region
        $region121: #{ssley_forward.17} parent=119 // pred_check
          %p461 = pneg %p89
        $region122: #{ssley_forward.17} parent=119 // pred_check_branch
          %463 = sbr.rel (%p461) target = $region124
        $region123: #{ssley_forward.17} parent=119 // pred_region
          _
        $region124: #{ssley_forward.17} parent=119 // pred_fallthru
          _
        %s464 = sand.u32 %s132, 1
        %s465 = sand.u32 %s132, 1
        %s466 = smul.addr %s465, 16
        %s467 = scalar_lea.vmem [#allocation5], %s466
        // Predicated region
        $region125: #{ssley_forward.17} parent=119 // pred_check
          %p468 = pneg %p145
        $region126: #{ssley_forward.17} parent=119 // pred_check_branch
          %470 = sbr.rel (%p468) target = $region128
        $region127: #{ssley_forward.17} parent=119 // pred_region
          _
        $region128: #{ssley_forward.17} parent=119 // pred_fallthru
          _
        %s471 = smul.u32 32, %s24
        %p472 = scmp.lt.s32.totalorder %s471, 63
        %s473 = scalar_select %p472, %s471, 63
        %p474 = scmp.lt.s32.totalorder %s26, 0
        %s475 = scalar_select %p474, %s26, 0
        %s476 = sadd.s32 %s475, %s473
        %s477 = smul.addr %s476, 4
        %s478 = scalar_lea.vmem %s0, %s477
        %p479 = pneg %p61
        %p480 = pneg %p58
        %s481 = sand.u32 %s76, 1
        %s482 = sand.u32 %s76, 1
        %s483 = smul.addr %s482, 16
        %s484 = scalar_lea.vmem [#allocation4], %s483
        %p485 = pneg %p89
        %p486 = pneg %p86
        %s487 = smul.u32 32, %s24
        %p488 = scmp.lt.s32.totalorder %s487, 63
        %s489 = scalar_select %p488, %s487, 63
        %p490 = scmp.lt.s32.totalorder %s26, 0
        %s491 = scalar_select %p490, %s26, 0
        %s492 = sadd.s32 %s491, %s489
        %s493 = smul.addr %s492, 4
        %s494 = scalar_lea.vmem %s2, %s493
        %p495 = pneg %p117
        %p496 = pneg %p114
        %s497 = sand.u32 %s132, 1
        %s498 = sand.u32 %s132, 1
        %s499 = smul.addr %s498, 16
        %s500 = scalar_lea.vmem [#allocation5], %s499
        %p501 = pneg %p145
        %p502 = pneg %p142
        %s503 = smul.u32 32, %s24
        %p504 = scmp.lt.s32.totalorder %s503, 63
        %s505 = scalar_select %p504, %s503, 63
        %s506 = smul.addr %s505, 8
        %s507 = scalar_lea.vmem %s4, %s506
        %p508 = pneg %p171
        %p509 = pneg %p168
        %s510 = smul.u32 32, %s24
        %p511 = scmp.lt.s32.totalorder %s510, 63
        %s512 = scalar_select %p511, %s510, 63
        %s513 = smul.addr %s512, 8
        %s514 = scalar_lea.vmem %s5, %s513
        %p515 = pneg %p197
        %p516 = pneg %p194
        %s517 = smul.u32 2, %s25
        %p518 = scmp.lt.s32.totalorder %s517, 3
        %s519 = scalar_select %p518, %s517, 3
        %s520 = scalar_lea.vmem %s6, %s519
        %p521 = pneg %p223
        %p522 = pneg %p220
        %s523 = smul.u32 2, %s25
        %p524 = scmp.lt.s32.totalorder %s523, 3
        %s525 = scalar_select %p524, %s523, 3
        %s526 = scalar_lea.vmem %s7, %s525
        %p527 = pneg %p249
        %p528 = pneg %p246
        %p529 = pneg %p275
        %p530 = pneg %p272
        %p531 = scmp.lt.s32.totalorder %s24, 1
        %s532 = scalar_select %p531, %s24, 1
        %s533 = smul.addr %s532, 8
        %s534 = scalar_lea.vmem %s8, %s533
        %s535 = smul.u32 32, %s24
        %p536 = scmp.lt.s32.totalorder %s535, 63
        %s537 = scalar_select %p536, %s535, 63
        %p538 = scmp.lt.s32.totalorder %s26, 0
        %s539 = scalar_select %p538, %s26, 0
        %s540 = sadd.s32 %s539, %s537
        %s541 = smul.addr %s540, 4
        %s542 = scalar_lea.vmem %s0, %s541
        %s543 = smul.u32 32, %s24
        %s544 = smul.u32 2, %s26
        %s545 = smul.u32 2, %s25
        %s546 = smul.u32 32, %s24
        %p547 = scmp.lt.s32.totalorder %s546, 63
        %s548 = scalar_select %p547, %s546, 63
        %p549 = scmp.lt.s32.totalorder %s26, 0
        %s550 = scalar_select %p549, %s26, 0
        %s551 = sadd.s32 %s550, %s548
        %s552 = smul.addr %s551, 4
        %s553 = scalar_lea.vmem %s2, %s552
        %s554 = smul.u32 32, %s24
        %s555 = smul.u32 2, %s26
        %s556 = smul.u32 2, %s25
        %s557 = smul.u32 32, %s24
        %p558 = scmp.lt.s32.totalorder %s557, 63
        %s559 = scalar_select %p558, %s557, 63
        %s560 = smul.addr %s559, 8
        %s561 = scalar_lea.vmem %s4, %s560
        %s562 = smul.u32 32, %s24
        %s563 = smul.u32 32, %s24
        %p564 = scmp.lt.s32.totalorder %s563, 63
        %s565 = scalar_select %p564, %s563, 63
        %s566 = smul.addr %s565, 8
        %s567 = scalar_lea.vmem %s5, %s566
        %s568 = smul.u32 32, %s24
        %s569 = smul.u32 2, %s25
        %p570 = scmp.lt.s32.totalorder %s569, 3
        %s571 = scalar_select %p570, %s569, 3
        %s572 = scalar_lea.vmem %s6, %s571
        %s573 = smul.u32 2, %s25
        %s574 = smul.u32 2, %s25
        %p575 = scmp.lt.s32.totalorder %s574, 3
        %s576 = scalar_select %p575, %s574, 3
        %s577 = scalar_lea.vmem %s7, %s576
        %s578 = smul.u32 2, %s25
        %p579 = scmp.lt.s32.totalorder %s24, 1
        %s580 = scalar_select %p579, %s24, 1
        %s581 = smul.addr %s580, 8
        %s582 = scalar_lea.vmem %s8, %s581
        %p584 = scmp.eq.s32.totalorder %s25, 0
        %p585 = scmp.eq.s32.totalorder %s26, 0
        %p586 = pnand %p584, %p585
        %p587 = pneg %p586
        // Predicated region
        $region129: #{ssley_forward.17} parent=119 // pred_check
          _
        $region130: #{ssley_forward.17} parent=119 // pred_check_branch
          %589 = sbr.rel (%p586) target = $region132
        $region131: #{ssley_forward.17} parent=119 // pred_region
          %vm590 = vcmask 0
          %591 = vst.msk [vmem:[#allocation3] sm:$0x1] %vm590, 0.0
        $region132: #{ssley_forward.17} parent=119 // pred_fallthru
          _
        // Predicated region
        $region133: #{ssley_forward.17} parent=119 // pred_check
          %p592 = pneg %p585
        $region134: #{ssley_forward.17} parent=119 // pred_check_branch
          %594 = sbr.rel (%p592) target = $region136
        $region135: #{ssley_forward.17} parent=119 // pred_region
          %595 = vst [vmem:[#allocation2] sm:$0xff] 0.0
          %596 = vst [vmem:[#allocation2 + $0x8] sm:$0xff] 0.0
          %597 = vst [vmem:[#allocation2 + $0x10] sm:$0xff] 0.0
          %598 = vst [vmem:[#allocation2 + $0x18] sm:$0xff] 0.0
          %599 = vst [vmem:[#allocation2 + $0x20] sm:$0xff] 0.0
          %600 = vst [vmem:[#allocation2 + $0x28] sm:$0xff] 0.0
          %601 = vst [vmem:[#allocation2 + $0x30] sm:$0xff] 0.0
          %602 = vst [vmem:[#allocation2 + $0x38] sm:$0xff] 0.0
          %603 = vst [vmem:[#allocation2 + $0x40] sm:$0xff] 0.0
          %604 = vst [vmem:[#allocation2 + $0x48] sm:$0xff] 0.0
          %605 = vst [vmem:[#allocation2 + $0x50] sm:$0xff] 0.0
          %606 = vst [vmem:[#allocation2 + $0x58] sm:$0xff] 0.0
          %607 = vst [vmem:[#allocation2 + $0x60] sm:$0xff] 0.0
          %608 = vst [vmem:[#allocation2 + $0x68] sm:$0xff] 0.0
          %609 = vst [vmem:[#allocation2 + $0x70] sm:$0xff] 0.0
          %610 = vst [vmem:[#allocation2 + $0x78] sm:$0xff] 0.0
          %611 = vst [vmem:[#allocation2 + $0x80] sm:$0xff] 0.0
          %612 = vst [vmem:[#allocation2 + $0x88] sm:$0xff] 0.0
          %613 = vst [vmem:[#allocation2 + $0x90] sm:$0xff] 0.0
          %614 = vst [vmem:[#allocation2 + $0x98] sm:$0xff] 0.0
          %615 = vst [vmem:[#allocation2 + $0xa0] sm:$0xff] 0.0
          %616 = vst [vmem:[#allocation2 + $0xa8] sm:$0xff] 0.0
          %617 = vst [vmem:[#allocation2 + $0xb0] sm:$0xff] 0.0
          %618 = vst [vmem:[#allocation2 + $0xb8] sm:$0xff] 0.0
          %619 = vst [vmem:[#allocation2 + $0xc0] sm:$0xff] 0.0
          %620 = vst [vmem:[#allocation2 + $0xc8] sm:$0xff] 0.0
          %621 = vst [vmem:[#allocation2 + $0xd0] sm:$0xff] 0.0
          %622 = vst [vmem:[#allocation2 + $0xd8] sm:$0xff] 0.0
          %623 = vst [vmem:[#allocation2 + $0xe0] sm:$0xff] 0.0
          %624 = vst [vmem:[#allocation2 + $0xe8] sm:$0xff] 0.0
          %625 = vst [vmem:[#allocation2 + $0xf0] sm:$0xff] 0.0
          %626 = vst [vmem:[#allocation2 + $0xf8] sm:$0xff] 0.0
          %627 = vst [vmem:[#allocation2 + $0x100] sm:$0xff] 0.0
          %628 = vst [vmem:[#allocation2 + $0x108] sm:$0xff] 0.0
          %629 = vst [vmem:[#allocation2 + $0x110] sm:$0xff] 0.0
          %630 = vst [vmem:[#allocation2 + $0x118] sm:$0xff] 0.0
          %631 = vst [vmem:[#allocation2 + $0x120] sm:$0xff] 0.0
          %632 = vst [vmem:[#allocation2 + $0x128] sm:$0xff] 0.0
          %633 = vst [vmem:[#allocation2 + $0x130] sm:$0xff] 0.0
          %634 = vst [vmem:[#allocation2 + $0x138] sm:$0xff] 0.0
          %635 = vst [vmem:[#allocation2 + $0x140] sm:$0xff] 0.0
          %636 = vst [vmem:[#allocation2 + $0x148] sm:$0xff] 0.0
          %637 = vst [vmem:[#allocation2 + $0x150] sm:$0xff] 0.0
          %638 = vst [vmem:[#allocation2 + $0x158] sm:$0xff] 0.0
          %639 = vst [vmem:[#allocation2 + $0x160] sm:$0xff] 0.0
          %640 = vst [vmem:[#allocation2 + $0x168] sm:$0xff] 0.0
          %641 = vst [vmem:[#allocation2 + $0x170] sm:$0xff] 0.0
          %642 = vst [vmem:[#allocation2 + $0x178] sm:$0xff] 0.0
          %643 = vst [vmem:[#allocation2 + $0x180] sm:$0xff] 0.0
          %644 = vst [vmem:[#allocation2 + $0x188] sm:$0xff] 0.0
          %645 = vst [vmem:[#allocation2 + $0x190] sm:$0xff] 0.0
          %646 = vst [vmem:[#allocation2 + $0x198] sm:$0xff] 0.0
          %647 = vst [vmem:[#allocation2 + $0x1a0] sm:$0xff] 0.0
          %648 = vst [vmem:[#allocation2 + $0x1a8] sm:$0xff] 0.0
          %649 = vst [vmem:[#allocation2 + $0x1b0] sm:$0xff] 0.0
          %650 = vst [vmem:[#allocation2 + $0x1b8] sm:$0xff] 0.0
          %651 = vst [vmem:[#allocation2 + $0x1c0] sm:$0xff] 0.0
          %652 = vst [vmem:[#allocation2 + $0x1c8] sm:$0xff] 0.0
          %653 = vst [vmem:[#allocation2 + $0x1d0] sm:$0xff] 0.0
          %654 = vst [vmem:[#allocation2 + $0x1d8] sm:$0xff] 0.0
          %655 = vst [vmem:[#allocation2 + $0x1e0] sm:$0xff] 0.0
          %656 = vst [vmem:[#allocation2 + $0x1e8] sm:$0xff] 0.0
          %657 = vst [vmem:[#allocation2 + $0x1f0] sm:$0xff] 0.0
          %658 = vst [vmem:[#allocation2 + $0x1f8] sm:$0xff] 0.0
        $region136: #{ssley_forward.17} parent=119 // pred_fallthru
          _
        %v659 = vld [vmem:[%s542] sm:$0xf]
        %v660 = vld [vmem:[%s542 + $0x4] sm:$0xf]
        %v661 = vld [vmem:[%s542 + $0x8] sm:$0xf]
        %v662 = vld [vmem:[%s542 + $0xc] sm:$0xf]
        %v663 = vld [vmem:[%s542 + $0x10] sm:$0xf]
        %v664 = vld [vmem:[%s542 + $0x14] sm:$0xf]
        %v665 = vld [vmem:[%s542 + $0x18] sm:$0xf]
        %v666 = vld [vmem:[%s542 + $0x1c] sm:$0xf]
        %v667 = vld [vmem:[%s542 + $0x20] sm:$0xf]
        %v668 = vld [vmem:[%s542 + $0x24] sm:$0xf]
        %v669 = vld [vmem:[%s542 + $0x28] sm:$0xf]
        %v670 = vld [vmem:[%s542 + $0x2c] sm:$0xf]
        %v671 = vld [vmem:[%s542 + $0x30] sm:$0xf]
        %v672 = vld [vmem:[%s542 + $0x34] sm:$0xf]
        %v673 = vld [vmem:[%s542 + $0x38] sm:$0xf]
        %v674 = vld [vmem:[%s542 + $0x3c] sm:$0xf]
        %v675 = vld [vmem:[%s542 + $0x40] sm:$0xf]
        %v676 = vld [vmem:[%s542 + $0x44] sm:$0xf]
        %v677 = vld [vmem:[%s542 + $0x48] sm:$0xf]
        %v678 = vld [vmem:[%s542 + $0x4c] sm:$0xf]
        %v679 = vld [vmem:[%s542 + $0x50] sm:$0xf]
        %v680 = vld [vmem:[%s542 + $0x54] sm:$0xf]
        %v681 = vld [vmem:[%s542 + $0x58] sm:$0xf]
        %v682 = vld [vmem:[%s542 + $0x5c] sm:$0xf]
        %v683 = vld [vmem:[%s542 + $0x60] sm:$0xf]
        %v684 = vld [vmem:[%s542 + $0x64] sm:$0xf]
        %v685 = vld [vmem:[%s542 + $0x68] sm:$0xf]
        %v686 = vld [vmem:[%s542 + $0x6c] sm:$0xf]
        %v687 = vld [vmem:[%s542 + $0x70] sm:$0xf]
        %v688 = vld [vmem:[%s542 + $0x74] sm:$0xf]
        %v689 = vld [vmem:[%s542 + $0x78] sm:$0xf]
        %v690 = vld [vmem:[%s542 + $0x7c] sm:$0xf]
        %v691 = vld [vmem:[%s460] sm:$0xff]
        %v692 = vld [vmem:[%s460 + $0x8] sm:$0xff]
        %v693 = vld [vmem:[%s553] sm:$0xf]
        %v694 = vld [vmem:[%s553 + $0x4] sm:$0xf]
        %v695 = vld [vmem:[%s553 + $0x8] sm:$0xf]
        %v696 = vld [vmem:[%s553 + $0xc] sm:$0xf]
        %v697 = vld [vmem:[%s553 + $0x10] sm:$0xf]
        %v698 = vld [vmem:[%s553 + $0x14] sm:$0xf]
        %v699 = vld [vmem:[%s553 + $0x18] sm:$0xf]
        %v700 = vld [vmem:[%s553 + $0x1c] sm:$0xf]
        %v701 = vld [vmem:[%s553 + $0x20] sm:$0xf]
        %v702 = vld [vmem:[%s553 + $0x24] sm:$0xf]
        %v703 = vld [vmem:[%s553 + $0x28] sm:$0xf]
        %v704 = vld [vmem:[%s553 + $0x2c] sm:$0xf]
        %v705 = vld [vmem:[%s553 + $0x30] sm:$0xf]
        %v706 = vld [vmem:[%s553 + $0x34] sm:$0xf]
        %v707 = vld [vmem:[%s553 + $0x38] sm:$0xf]
        %v708 = vld [vmem:[%s553 + $0x3c] sm:$0xf]
        %v709 = vld [vmem:[%s553 + $0x40] sm:$0xf]
        %v710 = vld [vmem:[%s553 + $0x44] sm:$0xf]
        %v711 = vld [vmem:[%s553 + $0x48] sm:$0xf]
        %v712 = vld [vmem:[%s553 + $0x4c] sm:$0xf]
        %v713 = vld [vmem:[%s553 + $0x50] sm:$0xf]
        %v714 = vld [vmem:[%s553 + $0x54] sm:$0xf]
        %v715 = vld [vmem:[%s553 + $0x58] sm:$0xf]
        %v716 = vld [vmem:[%s553 + $0x5c] sm:$0xf]
        %v717 = vld [vmem:[%s553 + $0x60] sm:$0xf]
        %v718 = vld [vmem:[%s553 + $0x64] sm:$0xf]
        %v719 = vld [vmem:[%s553 + $0x68] sm:$0xf]
        %v720 = vld [vmem:[%s553 + $0x6c] sm:$0xf]
        %v721 = vld [vmem:[%s553 + $0x70] sm:$0xf]
        %v722 = vld [vmem:[%s553 + $0x74] sm:$0xf]
        %v723 = vld [vmem:[%s553 + $0x78] sm:$0xf]
        %v724 = vld [vmem:[%s553 + $0x7c] sm:$0xf]
        %v725 = vld [vmem:[%s467] sm:$0xff]
        %v726 = vld [vmem:[%s467 + $0x8] sm:$0xff]
        %v727 = vld [vmem:[#allocation2] sm:$0xff]
        %v728 = vld [vmem:[#allocation2 + $0x8] sm:$0xff]
        %v729 = vld [vmem:[#allocation2 + $0x10] sm:$0xff]
        %v730 = vld [vmem:[#allocation2 + $0x18] sm:$0xff]
        %v731 = vld [vmem:[#allocation2 + $0x20] sm:$0xff]
        %v732 = vld [vmem:[#allocation2 + $0x28] sm:$0xff]
        %v733 = vld [vmem:[#allocation2 + $0x30] sm:$0xff]
        %v734 = vld [vmem:[#allocation2 + $0x38] sm:$0xff]
        %v735 = vld [vmem:[#allocation2 + $0x40] sm:$0xff]
        %v736 = vld [vmem:[#allocation2 + $0x48] sm:$0xff]
        %v737 = vld [vmem:[#allocation2 + $0x50] sm:$0xff]
        %v738 = vld [vmem:[#allocation2 + $0x58] sm:$0xff]
        %v739 = vld [vmem:[#allocation2 + $0x60] sm:$0xff]
        %v740 = vld [vmem:[#allocation2 + $0x68] sm:$0xff]
        %v741 = vld [vmem:[#allocation2 + $0x70] sm:$0xff]
        %v742 = vld [vmem:[#allocation2 + $0x78] sm:$0xff]
        %v743 = vld [vmem:[#allocation2 + $0x80] sm:$0xff]
        %v744 = vld [vmem:[#allocation2 + $0x88] sm:$0xff]
        %v745 = vld [vmem:[#allocation2 + $0x90] sm:$0xff]
        %v746 = vld [vmem:[#allocation2 + $0x98] sm:$0xff]
        %v747 = vld [vmem:[#allocation2 + $0xa0] sm:$0xff]
        %v748 = vld [vmem:[#allocation2 + $0xa8] sm:$0xff]
        %v749 = vld [vmem:[#allocation2 + $0xb0] sm:$0xff]
        %v750 = vld [vmem:[#allocation2 + $0xb8] sm:$0xff]
        %v751 = vld [vmem:[#allocation2 + $0xc0] sm:$0xff]
        %v752 = vld [vmem:[#allocation2 + $0xc8] sm:$0xff]
        %v753 = vld [vmem:[#allocation2 + $0xd0] sm:$0xff]
        %v754 = vld [vmem:[#allocation2 + $0xd8] sm:$0xff]
        %v755 = vld [vmem:[#allocation2 + $0xe0] sm:$0xff]
        %v756 = vld [vmem:[#allocation2 + $0xe8] sm:$0xff]
        %v757 = vld [vmem:[#allocation2 + $0xf0] sm:$0xff]
        %v758 = vld [vmem:[#allocation2 + $0xf8] sm:$0xff]
        %v759 = vld [vmem:[#allocation2 + $0x100] sm:$0xff]
        %v760 = vld [vmem:[#allocation2 + $0x108] sm:$0xff]
        %v761 = vld [vmem:[#allocation2 + $0x110] sm:$0xff]
        %v762 = vld [vmem:[#allocation2 + $0x118] sm:$0xff]
        %v763 = vld [vmem:[#allocation2 + $0x120] sm:$0xff]
        %v764 = vld [vmem:[#allocation2 + $0x128] sm:$0xff]
        %v765 = vld [vmem:[#allocation2 + $0x130] sm:$0xff]
        %v766 = vld [vmem:[#allocation2 + $0x138] sm:$0xff]
        %v767 = vld [vmem:[#allocation2 + $0x140] sm:$0xff]
        %v768 = vld [vmem:[#allocation2 + $0x148] sm:$0xff]
        %v769 = vld [vmem:[#allocation2 + $0x150] sm:$0xff]
        %v770 = vld [vmem:[#allocation2 + $0x158] sm:$0xff]
        %v771 = vld [vmem:[#allocation2 + $0x160] sm:$0xff]
        %v772 = vld [vmem:[#allocation2 + $0x168] sm:$0xff]
        %v773 = vld [vmem:[#allocation2 + $0x170] sm:$0xff]
        %v774 = vld [vmem:[#allocation2 + $0x178] sm:$0xff]
        %v775 = vld [vmem:[#allocation2 + $0x180] sm:$0xff]
        %v776 = vld [vmem:[#allocation2 + $0x188] sm:$0xff]
        %v777 = vld [vmem:[#allocation2 + $0x190] sm:$0xff]
        %v778 = vld [vmem:[#allocation2 + $0x198] sm:$0xff]
        %v779 = vld [vmem:[#allocation2 + $0x1a0] sm:$0xff]
        %v780 = vld [vmem:[#allocation2 + $0x1a8] sm:$0xff]
        %v781 = vld [vmem:[#allocation2 + $0x1b0] sm:$0xff]
        %v782 = vld [vmem:[#allocation2 + $0x1b8] sm:$0xff]
        %v783 = vld [vmem:[#allocation2 + $0x1c0] sm:$0xff]
        %v784 = vld [vmem:[#allocation2 + $0x1c8] sm:$0xff]
        %v785 = vld [vmem:[#allocation2 + $0x1d0] sm:$0xff]
        %v786 = vld [vmem:[#allocation2 + $0x1d8] sm:$0xff]
        %v787 = vld [vmem:[#allocation2 + $0x1e0] sm:$0xff]
        %v788 = vld [vmem:[#allocation2 + $0x1e8] sm:$0xff]
        %v789 = vld [vmem:[#allocation2 + $0x1f0] sm:$0xff]
        %v790 = vld [vmem:[#allocation2 + $0x1f8] sm:$0xff]
        %v823 = vunpack.c.l.b16 %v693
        %v824 = vunpack.c.l.b16 %v694
        %v825 = vunpack.c.l.b16 %v695
        %v826 = vunpack.c.l.b16 %v696
        %v827 = vunpack.c.l.b16 %v697
        %v828 = vunpack.c.l.b16 %v698
        %v829 = vunpack.c.l.b16 %v699
        %v830 = vunpack.c.l.b16 %v700
        %v831 = vunpack.c.l.b16 %v701
        %v832 = vunpack.c.l.b16 %v702
        %v833 = vunpack.c.l.b16 %v703
        %v834 = vunpack.c.l.b16 %v704
        %v835 = vunpack.c.l.b16 %v705
        %v836 = vunpack.c.l.b16 %v706
        %v837 = vunpack.c.l.b16 %v707
        %v838 = vunpack.c.l.b16 %v708
        %v839 = vunpack.c.l.b16 %v709
        %v840 = vunpack.c.l.b16 %v710
        %v841 = vunpack.c.l.b16 %v711
        %v842 = vunpack.c.l.b16 %v712
        %v843 = vunpack.c.l.b16 %v713
        %v844 = vunpack.c.l.b16 %v714
        %v845 = vunpack.c.l.b16 %v715
        %v846 = vunpack.c.l.b16 %v716
        %v847 = vunpack.c.l.b16 %v717
        %v848 = vunpack.c.l.b16 %v718
        %v849 = vunpack.c.l.b16 %v719
        %v850 = vunpack.c.l.b16 %v720
        %v851 = vunpack.c.l.b16 %v721
        %v852 = vunpack.c.l.b16 %v722
        %v853 = vunpack.c.l.b16 %v723
        %v854 = vunpack.c.l.b16 %v724
        %v855 = vpack.c.b16 %v824, %v823
        %v856 = vpack.c.b16 %v826, %v825
        %v857 = vpack.c.b16 %v828, %v827
        %v858 = vpack.c.b16 %v830, %v829
        %v859 = vpack.c.b16 %v832, %v831
        %v860 = vpack.c.b16 %v834, %v833
        %v861 = vpack.c.b16 %v836, %v835
        %v862 = vpack.c.b16 %v838, %v837
        %v863 = vpack.c.b16 %v840, %v839
        %v864 = vpack.c.b16 %v842, %v841
        %v865 = vpack.c.b16 %v844, %v843
        %v866 = vpack.c.b16 %v846, %v845
        %v867 = vpack.c.b16 %v848, %v847
        %v868 = vpack.c.b16 %v850, %v849
        %v869 = vpack.c.b16 %v852, %v851
        %v870 = vpack.c.b16 %v854, %v853
        %v873 = vunpack.c.l.b16 %v725
        %v874 = vunpack.c.h.b16 %v725
        %v875 = vunpack.c.l.b16 %v726
        %v876 = vunpack.c.h.b16 %v726
        %v877 = vpack.c.b16 %v875, %v873
        %v878 = vpack.c.b16 %v876, %v874
        %vm881 = vcmask 130048
        %v883 = vsel %vm881, %v855, 0
        %v886 = vsel %vm881, %v856, 0
        %v889 = vsel %vm881, %v857, 0
        %v892 = vsel %vm881, %v858, 0
        %v895 = vsel %vm881, %v859, 0
        %v898 = vsel %vm881, %v860, 0
        %v901 = vsel %vm881, %v861, 0
        %v904 = vsel %vm881, %v862, 0
        %v907 = vsel %vm881, %v863, 0
        %v910 = vsel %vm881, %v864, 0
        %v913 = vsel %vm881, %v865, 0
        %v916 = vsel %vm881, %v866, 0
        %v919 = vsel %vm881, %v867, 0
        %v922 = vsel %vm881, %v868, 0
        %v925 = vsel %vm881, %v869, 0
        %v928 = vsel %vm881, %v870, 0
        %930 = vmatprep.subr.bf16.mxu0 %v878
        %931 = vmatpush1.bf16.msra.mxu0 %v877
        %932 = vmatprep.subr.bf16.mxu0 0
        %933 = vmatpush1.bf16.msra.mxu0 0
        %934 = vmatprep.subr.bf16.mxu0 0
        %935 = vmatpush1.bf16.msra.mxu0 0
        %936 = vmatprep.subr.bf16.mxu0 0
        %937 = vmatpush1.bf16.msra.mxu0 0
        %938 = vmatprep.subr.bf16.mxu0 0
        %939 = vmatpush1.bf16.msra.mxu0 0
        %940 = vmatprep.subr.bf16.mxu0 0
        %941 = vmatpush1.bf16.msra.mxu0 0
        %942 = vmatprep.subr.bf16.mxu0 0
        %943 = vmatpush1.bf16.msra.mxu0 0
        %944 = vmatprep.subr.bf16.mxu0 0
        %945 = vmatpush1.bf16.msra.mxu0 0
        %946 = vmatprep.subr.bf16.mxu0 0
        %947 = vmatpush1.bf16.msra.mxu0 0
        %948 = vmatprep.subr.bf16.mxu0 0
        %949 = vmatpush1.bf16.msra.mxu0 0
        %950 = vmatprep.subr.bf16.mxu0 0
        %951 = vmatpush1.bf16.msra.mxu0 0
        %952 = vmatprep.subr.bf16.mxu0 0
        %953 = vmatpush1.bf16.msra.mxu0 0
        %954 = vmatprep.subr.bf16.mxu0 0
        %955 = vmatpush1.bf16.msra.mxu0 0
        %956 = vmatprep.subr.bf16.mxu0 0
        %957 = vmatpush1.bf16.msra.mxu0 0
        %958 = vmatprep.subr.bf16.mxu0 0
        %959 = vmatpush1.bf16.msra.mxu0 0
        %960 = vmatprep.subr.bf16.mxu0 0
        %961 = vmatpush1.bf16.msra.mxu0 0
        %962 = vmatprep.mubr.bf16.mxu0 0
        %963 = vmatmul.mubr.bf16.gmra.mrb[0].mxu0 %v883
        %v964 = vpop.f32.mrb[0].mxu0
        %v965 = vadd.f32 0.0, %v964
        %v966 = vpop.f32.mrb[0].mxu0
        %v967 = vadd.f32 0.0, %v966
        %v968 = vpop.f32.mrb[0].mxu0
        %v969 = vadd.f32 0.0, %v968
        %v970 = vpop.f32.mrb[0].mxu0
        %v971 = vadd.f32 0.0, %v970
        %972 = vmatprep.mubr.bf16.mxu0 0
        %973 = vmatmul.mubr.bf16.gmra.mrb[0].mxu0 %v886
        %v974 = vpop.f32.mrb[0].mxu0
        %v975 = vadd.f32 0.0, %v974
        %v976 = vpop.f32.mrb[0].mxu0
        %v977 = vadd.f32 0.0, %v976
        %v978 = vpop.f32.mrb[0].mxu0
        %v979 = vadd.f32 0.0, %v978
        %v980 = vpop.f32.mrb[0].mxu0
        %v981 = vadd.f32 0.0, %v980
        %982 = vmatprep.mubr.bf16.mxu0 0
        %983 = vmatmul.mubr.bf16.gmra.mrb[0].mxu0 %v889
        %v984 = vpop.f32.mrb[0].mxu0
        %v985 = vadd.f32 0.0, %v984
        %v986 = vpop.f32.mrb[0].mxu0
        %v987 = vadd.f32 0.0, %v986
        %v988 = vpop.f32.mrb[0].mxu0
        %v989 = vadd.f32 0.0, %v988
        %v990 = vpop.f32.mrb[0].mxu0
        %v991 = vadd.f32 0.0, %v990
        %992 = vmatprep.mubr.bf16.mxu0 0
        %993 = vmatmul.mubr.bf16.gmra.mrb[0].mxu0 %v892
        %v994 = vpop.f32.mrb[0].mxu0
        %v995 = vadd.f32 0.0, %v994
        %v996 = vpop.f32.mrb[0].mxu0
        %v997 = vadd.f32 0.0, %v996
        %v998 = vpop.f32.mrb[0].mxu0
        %v999 = vadd.f32 0.0, %v998
        %v1000 = vpop.f32.mrb[0].mxu0
        %v1001 = vadd.f32 0.0, %v1000
        %1002 = vmatprep.mubr.bf16.mxu0 0
        %1003 = vmatmul.mubr.bf16.gmra.mrb[0].mxu0 %v895
        %v1004 = vpop.f32.mrb[0].mxu0
        %v1005 = vadd.f32 0.0, %v1004
        %v1006 = vpop.f32.mrb[0].mxu0
        %v1007 = vadd.f32 0.0, %v1006
        %v1008 = vpop.f32.mrb[0].mxu0
        %v1009 = vadd.f32 0.0, %v1008
        %v1010 = vpop.f32.mrb[0].mxu0
        %v1011 = vadd.f32 0.0, %v1010
        %1012 = vmatprep.mubr.bf16.mxu0 0
        %1013 = vmatmul.mubr.bf16.gmra.mrb[0].mxu0 %v898
        %v1014 = vpop.f32.mrb[0].mxu0
        %v1015 = vadd.f32 0.0, %v1014
        %v1016 = vpop.f32.mrb[0].mxu0
        %v1017 = vadd.f32 0.0, %v1016
        %v1018 = vpop.f32.mrb[0].mxu0
        %v1019 = vadd.f32 0.0, %v1018
        %v1020 = vpop.f32.mrb[0].mxu0
        %v1021 = vadd.f32 0.0, %v1020
        %1022 = vmatprep.mubr.bf16.mxu0 0
        %1023 = vmatmul.mubr.bf16.gmra.mrb[0].mxu0 %v901
        %v1024 = vpop.f32.mrb[0].mxu0
        %v1025 = vadd.f32 0.0, %v1024
        %v1026 = vpop.f32.mrb[0].mxu0
        %v1027 = vadd.f32 0.0, %v1026
        %v1028 = vpop.f32.mrb[0].mxu0
        %v1029 = vadd.f32 0.0, %v1028
        %v1030 = vpop.f32.mrb[0].mxu0
        %v1031 = vadd.f32 0.0, %v1030
        %1032 = vmatprep.mubr.bf16.mxu0 0
        %1033 = vmatmul.mubr.bf16.gmra.mrb[0].mxu0 %v904
        %v1034 = vpop.f32.mrb[0].mxu0
        %v1035 = vadd.f32 0.0, %v1034
        %v1036 = vpop.f32.mrb[0].mxu0
        %v1037 = vadd.f32 0.0, %v1036
        %v1038 = vpop.f32.mrb[0].mxu0
        %v1039 = vadd.f32 0.0, %v1038
        %v1040 = vpop.f32.mrb[0].mxu0
        %v1041 = vadd.f32 0.0, %v1040
        %1042 = vmatprep.mubr.bf16.mxu0 0
        %1043 = vmatmul.mubr.bf16.gmra.mrb[0].mxu0 %v907
        %v1044 = vpop.f32.mrb[0].mxu0
        %v1045 = vadd.f32 0.0, %v1044
        %v1046 = vpop.f32.mrb[0].mxu0
        %v1047 = vadd.f32 0.0, %v1046
        %v1048 = vpop.f32.mrb[0].mxu0
        %v1049 = vadd.f32 0.0, %v1048
        %v1050 = vpop.f32.mrb[0].mxu0
        %v1051 = vadd.f32 0.0, %v1050
        %1052 = vmatprep.mubr.bf16.mxu0 0
        %1053 = vmatmul.mubr.bf16.gmra.mrb[0].mxu0 %v910
        %v1054 = vpop.f32.mrb[0].mxu0
        %v1055 = vadd.f32 0.0, %v1054
        %v1056 = vpop.f32.mrb[0].mxu0
        %v1057 = vadd.f32 0.0, %v1056
        %v1058 = vpop.f32.mrb[0].mxu0
        %v1059 = vadd.f32 0.0, %v1058
        %v1060 = vpop.f32.mrb[0].mxu0
        %v1061 = vadd.f32 0.0, %v1060
        %1062 = vmatprep.mubr.bf16.mxu0 0
        %1063 = vmatmul.mubr.bf16.gmra.mrb[0].mxu0 %v913
        %v1064 = vpop.f32.mrb[0].mxu0
        %v1065 = vadd.f32 0.0, %v1064
        %v1066 = vpop.f32.mrb[0].mxu0
        %v1067 = vadd.f32 0.0, %v1066
        %v1068 = vpop.f32.mrb[0].mxu0
        %v1069 = vadd.f32 0.0, %v1068
        %v1070 = vpop.f32.mrb[0].mxu0
        %v1071 = vadd.f32 0.0, %v1070
        %1072 = vmatprep.mubr.bf16.mxu0 0
        %1073 = vmatmul.mubr.bf16.gmra.mrb[0].mxu0 %v916
        %v1074 = vpop.f32.mrb[0].mxu0
        %v1075 = vadd.f32 0.0, %v1074
        %v1076 = vpop.f32.mrb[0].mxu0
        %v1077 = vadd.f32 0.0, %v1076
        %v1078 = vpop.f32.mrb[0].mxu0
        %v1079 = vadd.f32 0.0, %v1078
        %v1080 = vpop.f32.mrb[0].mxu0
        %v1081 = vadd.f32 0.0, %v1080
        %1082 = vmatprep.mubr.bf16.mxu0 0
        %1083 = vmatmul.mubr.bf16.gmra.mrb[0].mxu0 %v919
        %v1084 = vpop.f32.mrb[0].mxu0
        %v1085 = vadd.f32 0.0, %v1084
        %v1086 = vpop.f32.mrb[0].mxu0
        %v1087 = vadd.f32 0.0, %v1086
        %v1088 = vpop.f32.mrb[0].mxu0
        %v1089 = vadd.f32 0.0, %v1088
        %v1090 = vpop.f32.mrb[0].mxu0
        %v1091 = vadd.f32 0.0, %v1090
        %1092 = vmatprep.mubr.bf16.mxu0 0
        %1093 = vmatmul.mubr.bf16.gmra.mrb[0].mxu0 %v922
        %v1094 = vpop.f32.mrb[0].mxu0
        %v1095 = vadd.f32 0.0, %v1094
        %v1096 = vpop.f32.mrb[0].mxu0
        %v1097 = vadd.f32 0.0, %v1096
        %v1098 = vpop.f32.mrb[0].mxu0
        %v1099 = vadd.f32 0.0, %v1098
        %v1100 = vpop.f32.mrb[0].mxu0
        %v1101 = vadd.f32 0.0, %v1100
        %1102 = vmatprep.mubr.bf16.mxu0 0
        %1103 = vmatmul.mubr.bf16.gmra.mrb[0].mxu0 %v925
        %v1104 = vpop.f32.mrb[0].mxu0
        %v1105 = vadd.f32 0.0, %v1104
        %v1106 = vpop.f32.mrb[0].mxu0
        %v1107 = vadd.f32 0.0, %v1106
        %v1108 = vpop.f32.mrb[0].mxu0
        %v1109 = vadd.f32 0.0, %v1108
        %v1110 = vpop.f32.mrb[0].mxu0
        %v1111 = vadd.f32 0.0, %v1110
        %1112 = vmatprep.mubr.bf16.mxu0 0
        %1113 = vmatmul.mubr.bf16.gmra.mrb[0].mxu0 %v928
        %v1114 = vpop.f32.mrb[0].mxu0
        %v1115 = vadd.f32 0.0, %v1114
        %v1116 = vpop.f32.mrb[0].mxu0
        %v1117 = vadd.f32 0.0, %v1116
        %v1118 = vpop.f32.mrb[0].mxu0
        %v1119 = vadd.f32 0.0, %v1118
        %v1120 = vpop.f32.mrb[0].mxu0
        %v1121 = vadd.f32 0.0, %v1120
        %1122 = vdwg.mxu0
        %v1155 = vunpack.c.l.b16 %v659
        %v1156 = vunpack.c.l.b16 %v660
        %v1157 = vunpack.c.l.b16 %v661
        %v1158 = vunpack.c.l.b16 %v662
        %v1159 = vunpack.c.l.b16 %v663
        %v1160 = vunpack.c.l.b16 %v664
        %v1161 = vunpack.c.l.b16 %v665
        %v1162 = vunpack.c.l.b16 %v666
        %v1163 = vunpack.c.l.b16 %v667
        %v1164 = vunpack.c.l.b16 %v668
        %v1165 = vunpack.c.l.b16 %v669
        %v1166 = vunpack.c.l.b16 %v670
        %v1167 = vunpack.c.l.b16 %v671
        %v1168 = vunpack.c.l.b16 %v672
        %v1169 = vunpack.c.l.b16 %v673
        %v1170 = vunpack.c.l.b16 %v674
        %v1171 = vunpack.c.l.b16 %v675
        %v1172 = vunpack.c.l.b16 %v676
        %v1173 = vunpack.c.l.b16 %v677
        %v1174 = vunpack.c.l.b16 %v678
        %v1175 = vunpack.c.l.b16 %v679
        %v1176 = vunpack.c.l.b16 %v680
        %v1177 = vunpack.c.l.b16 %v681
        %v1178 = vunpack.c.l.b16 %v682
        %v1179 = vunpack.c.l.b16 %v683
        %v1180 = vunpack.c.l.b16 %v684
        %v1181 = vunpack.c.l.b16 %v685
        %v1182 = vunpack.c.l.b16 %v686
        %v1183 = vunpack.c.l.b16 %v687
        %v1184 = vunpack.c.l.b16 %v688
        %v1185 = vunpack.c.l.b16 %v689
        %v1186 = vunpack.c.l.b16 %v690
        %v1187 = vpack.c.b16 %v1156, %v1155
        %v1188 = vpack.c.b16 %v1158, %v1157
        %v1189 = vpack.c.b16 %v1160, %v1159
        %v1190 = vpack.c.b16 %v1162, %v1161
        %v1191 = vpack.c.b16 %v1164, %v1163
        %v1192 = vpack.c.b16 %v1166, %v1165
        %v1193 = vpack.c.b16 %v1168, %v1167
        %v1194 = vpack.c.b16 %v1170, %v1169
        %v1195 = vpack.c.b16 %v1172, %v1171
        %v1196 = vpack.c.b16 %v1174, %v1173
        %v1197 = vpack.c.b16 %v1176, %v1175
        %v1198 = vpack.c.b16 %v1178, %v1177
        %v1199 = vpack.c.b16 %v1180, %v1179
        %v1200 = vpack.c.b16 %v1182, %v1181
        %v1201 = vpack.c.b16 %v1184, %v1183
        %v1202 = vpack.c.b16 %v1186, %v1185
        %v1205 = vunpack.c.l.b16 %v691
        %v1206 = vunpack.c.h.b16 %v691
        %v1207 = vunpack.c.l.b16 %v692
        %v1208 = vunpack.c.h.b16 %v692
        %v1209 = vpack.c.b16 %v1207, %v1205
        %v1210 = vpack.c.b16 %v1208, %v1206
        %v1214 = vsel %vm881, %v1187, 0
        %v1217 = vsel %vm881, %v1188, 0
        %v1220 = vsel %vm881, %v1189, 0
        %v1223 = vsel %vm881, %v1190, 0
        %v1226 = vsel %vm881, %v1191, 0
        %v1229 = vsel %vm881, %v1192, 0
        %v1232 = vsel %vm881, %v1193, 0
        %v1235 = vsel %vm881, %v1194, 0
        %v1238 = vsel %vm881, %v1195, 0
        %v1241 = vsel %vm881, %v1196, 0
        %v1244 = vsel %vm881, %v1197, 0
        %v1247 = vsel %vm881, %v1198, 0
        %v1250 = vsel %vm881, %v1199, 0
        %v1253 = vsel %vm881, %v1200, 0
        %v1256 = vsel %vm881, %v1201, 0
        %v1259 = vsel %vm881, %v1202, 0
        %1261 = vmatprep.subr.bf16.mxu0 %v1210
        %1262 = vmatpush1.bf16.msra.mxu0 %v1209
        %1263 = vmatprep.subr.bf16.mxu0 0
        %1264 = vmatpush1.bf16.msra.mxu0 0
        %1265 = vmatprep.subr.bf16.mxu0 0
        %1266 = vmatpush1.bf16.msra.mxu0 0
        %1267 = vmatprep.subr.bf16.mxu0 0
        %1268 = vmatpush1.bf16.msra.mxu0 0
        %1269 = vmatprep.subr.bf16.mxu0 0
        %1270 = vmatpush1.bf16.msra.mxu0 0
        %1271 = vmatprep.subr.bf16.mxu0 0
        %1272 = vmatpush1.bf16.msra.mxu0 0
        %1273 = vmatprep.subr.bf16.mxu0 0
        %1274 = vmatpush1.bf16.msra.mxu0 0
        %1275 = vmatprep.subr.bf16.mxu0 0
        %1276 = vmatpush1.bf16.msra.mxu0 0
        %1277 = vmatprep.subr.bf16.mxu0 0
        %1278 = vmatpush1.bf16.msra.mxu0 0
        %1279 = vmatprep.subr.bf16.mxu0 0
        %1280 = vmatpush1.bf16.msra.mxu0 0
        %1281 = vmatprep.subr.bf16.mxu0 0
        %1282 = vmatpush1.bf16.msra.mxu0 0
        %1283 = vmatprep.subr.bf16.mxu0 0
        %1284 = vmatpush1.bf16.msra.mxu0 0
        %1285 = vmatprep.subr.bf16.mxu0 0
        %1286 = vmatpush1.bf16.msra.mxu0 0
        %1287 = vmatprep.subr.bf16.mxu0 0
        %1288 = vmatpush1.bf16.msra.mxu0 0
        %1289 = vmatprep.subr.bf16.mxu0 0
        %1290 = vmatpush1.bf16.msra.mxu0 0
        %1291 = vmatprep.subr.bf16.mxu0 0
        %1292 = vmatpush1.bf16.msra.mxu0 0
        %1293 = vmatprep.mubr.bf16.mxu0 0
        %1294 = vmatmul.mubr.bf16.gmra.mrb[0].mxu0 %v1214
        %v1295 = vpop.f32.mrb[0].mxu0
        %v1296 = vadd.f32 %v965, %v1295
        %v1297 = vpop.f32.mrb[0].mxu0
        %v1298 = vadd.f32 %v967, %v1297
        %v1299 = vpop.f32.mrb[0].mxu0
        %v1300 = vadd.f32 %v969, %v1299
        %v1301 = vpop.f32.mrb[0].mxu0
        %v1302 = vadd.f32 %v971, %v1301
        %1303 = vmatprep.mubr.bf16.mxu0 0
        %1304 = vmatmul.mubr.bf16.gmra.mrb[0].mxu0 %v1217
        %v1305 = vpop.f32.mrb[0].mxu0
        %v1306 = vadd.f32 %v975, %v1305
        %v1307 = vpop.f32.mrb[0].mxu0
        %v1308 = vadd.f32 %v977, %v1307
        %v1309 = vpop.f32.mrb[0].mxu0
        %v1310 = vadd.f32 %v979, %v1309
        %v1311 = vpop.f32.mrb[0].mxu0
        %v1312 = vadd.f32 %v981, %v1311
        %1313 = vmatprep.mubr.bf16.mxu0 0
        %1314 = vmatmul.mubr.bf16.gmra.mrb[0].mxu0 %v1220
        %v1315 = vpop.f32.mrb[0].mxu0
        %v1316 = vadd.f32 %v985, %v1315
        %v1317 = vpop.f32.mrb[0].mxu0
        %v1318 = vadd.f32 %v987, %v1317
        %v1319 = vpop.f32.mrb[0].mxu0
        %v1320 = vadd.f32 %v989, %v1319
        %v1321 = vpop.f32.mrb[0].mxu0
        %v1322 = vadd.f32 %v991, %v1321
        %1323 = vmatprep.mubr.bf16.mxu0 0
        %1324 = vmatmul.mubr.bf16.gmra.mrb[0].mxu0 %v1223
        %v1325 = vpop.f32.mrb[0].mxu0
        %v1326 = vadd.f32 %v995, %v1325
        %v1327 = vpop.f32.mrb[0].mxu0
        %v1328 = vadd.f32 %v997, %v1327
        %v1329 = vpop.f32.mrb[0].mxu0
        %v1330 = vadd.f32 %v999, %v1329
        %v1331 = vpop.f32.mrb[0].mxu0
        %v1332 = vadd.f32 %v1001, %v1331
        %1333 = vmatprep.mubr.bf16.mxu0 0
        %1334 = vmatmul.mubr.bf16.gmra.mrb[0].mxu0 %v1226
        %v1335 = vpop.f32.mrb[0].mxu0
        %v1336 = vadd.f32 %v1005, %v1335
        %v1337 = vpop.f32.mrb[0].mxu0
        %v1338 = vadd.f32 %v1007, %v1337
        %v1339 = vpop.f32.mrb[0].mxu0
        %v1340 = vadd.f32 %v1009, %v1339
        %v1341 = vpop.f32.mrb[0].mxu0
        %v1342 = vadd.f32 %v1011, %v1341
        %1343 = vmatprep.mubr.bf16.mxu0 0
        %1344 = vmatmul.mubr.bf16.gmra.mrb[0].mxu0 %v1229
        %v1345 = vpop.f32.mrb[0].mxu0
        %v1346 = vadd.f32 %v1015, %v1345
        %v1347 = vpop.f32.mrb[0].mxu0
        %v1348 = vadd.f32 %v1017, %v1347
        %v1349 = vpop.f32.mrb[0].mxu0
        %v1350 = vadd.f32 %v1019, %v1349
        %v1351 = vpop.f32.mrb[0].mxu0
        %v1352 = vadd.f32 %v1021, %v1351
        %1353 = vmatprep.mubr.bf16.mxu0 0
        %1354 = vmatmul.mubr.bf16.gmra.mrb[0].mxu0 %v1232
        %v1355 = vpop.f32.mrb[0].mxu0
        %v1356 = vadd.f32 %v1025, %v1355
        %v1357 = vpop.f32.mrb[0].mxu0
        %v1358 = vadd.f32 %v1027, %v1357
        %v1359 = vpop.f32.mrb[0].mxu0
        %v1360 = vadd.f32 %v1029, %v1359
        %v1361 = vpop.f32.mrb[0].mxu0
        %v1362 = vadd.f32 %v1031, %v1361
        %1363 = vmatprep.mubr.bf16.mxu0 0
        %1364 = vmatmul.mubr.bf16.gmra.mrb[0].mxu0 %v1235
        %v1365 = vpop.f32.mrb[0].mxu0
        %v1366 = vadd.f32 %v1035, %v1365
        %v1367 = vpop.f32.mrb[0].mxu0
        %v1368 = vadd.f32 %v1037, %v1367
        %v1369 = vpop.f32.mrb[0].mxu0
        %v1370 = vadd.f32 %v1039, %v1369
        %v1371 = vpop.f32.mrb[0].mxu0
        %v1372 = vadd.f32 %v1041, %v1371
        %1373 = vmatprep.mubr.bf16.mxu0 0
        %1374 = vmatmul.mubr.bf16.gmra.mrb[0].mxu0 %v1238
        %v1375 = vpop.f32.mrb[0].mxu0
        %v1376 = vadd.f32 %v1045, %v1375
        %v1377 = vpop.f32.mrb[0].mxu0
        %v1378 = vadd.f32 %v1047, %v1377
        %v1379 = vpop.f32.mrb[0].mxu0
        %v1380 = vadd.f32 %v1049, %v1379
        %v1381 = vpop.f32.mrb[0].mxu0
        %v1382 = vadd.f32 %v1051, %v1381
        %1383 = vmatprep.mubr.bf16.mxu0 0
        %1384 = vmatmul.mubr.bf16.gmra.mrb[0].mxu0 %v1241
        %v1385 = vpop.f32.mrb[0].mxu0
        %v1386 = vadd.f32 %v1055, %v1385
        %v1387 = vpop.f32.mrb[0].mxu0
        %v1388 = vadd.f32 %v1057, %v1387
        %v1389 = vpop.f32.mrb[0].mxu0
        %v1390 = vadd.f32 %v1059, %v1389
        %v1391 = vpop.f32.mrb[0].mxu0
        %v1392 = vadd.f32 %v1061, %v1391
        %1393 = vmatprep.mubr.bf16.mxu0 0
        %1394 = vmatmul.mubr.bf16.gmra.mrb[0].mxu0 %v1244
        %v1395 = vpop.f32.mrb[0].mxu0
        %v1396 = vadd.f32 %v1065, %v1395
        %v1397 = vpop.f32.mrb[0].mxu0
        %v1398 = vadd.f32 %v1067, %v1397
        %v1399 = vpop.f32.mrb[0].mxu0
        %v1400 = vadd.f32 %v1069, %v1399
        %v1401 = vpop.f32.mrb[0].mxu0
        %v1402 = vadd.f32 %v1071, %v1401
        %1403 = vmatprep.mubr.bf16.mxu0 0
        %1404 = vmatmul.mubr.bf16.gmra.mrb[0].mxu0 %v1247
        %v1405 = vpop.f32.mrb[0].mxu0
        %v1406 = vadd.f32 %v1075, %v1405
        %v1407 = vpop.f32.mrb[0].mxu0
        %v1408 = vadd.f32 %v1077, %v1407
        %v1409 = vpop.f32.mrb[0].mxu0
        %v1410 = vadd.f32 %v1079, %v1409
        %v1411 = vpop.f32.mrb[0].mxu0
        %v1412 = vadd.f32 %v1081, %v1411
        %1413 = vmatprep.mubr.bf16.mxu0 0
        %1414 = vmatmul.mubr.bf16.gmra.mrb[0].mxu0 %v1250
        %v1415 = vpop.f32.mrb[0].mxu0
        %v1416 = vadd.f32 %v1085, %v1415
        %v1417 = vpop.f32.mrb[0].mxu0
        %v1418 = vadd.f32 %v1087, %v1417
        %v1419 = vpop.f32.mrb[0].mxu0
        %v1420 = vadd.f32 %v1089, %v1419
        %v1421 = vpop.f32.mrb[0].mxu0
        %v1422 = vadd.f32 %v1091, %v1421
        %1423 = vmatprep.mubr.bf16.mxu0 0
        %1424 = vmatmul.mubr.bf16.gmra.mrb[0].mxu0 %v1253
        %v1425 = vpop.f32.mrb[0].mxu0
        %v1426 = vadd.f32 %v1095, %v1425
        %v1427 = vpop.f32.mrb[0].mxu0
        %v1428 = vadd.f32 %v1097, %v1427
        %v1429 = vpop.f32.mrb[0].mxu0
        %v1430 = vadd.f32 %v1099, %v1429
        %v1431 = vpop.f32.mrb[0].mxu0
        %v1432 = vadd.f32 %v1101, %v1431
        %1433 = vmatprep.mubr.bf16.mxu0 0
        %1434 = vmatmul.mubr.bf16.gmra.mrb[0].mxu0 %v1256
        %v1435 = vpop.f32.mrb[0].mxu0
        %v1436 = vadd.f32 %v1105, %v1435
        %v1437 = vpop.f32.mrb[0].mxu0
        %v1438 = vadd.f32 %v1107, %v1437
        %v1439 = vpop.f32.mrb[0].mxu0
        %v1440 = vadd.f32 %v1109, %v1439
        %v1441 = vpop.f32.mrb[0].mxu0
        %v1442 = vadd.f32 %v1111, %v1441
        %1443 = vmatprep.mubr.bf16.mxu0 0
        %1444 = vmatmul.mubr.bf16.gmra.mrb[0].mxu0 %v1259
        %v1445 = vpop.f32.mrb[0].mxu0
        %v1446 = vadd.f32 %v1115, %v1445
        %v1447 = vpop.f32.mrb[0].mxu0
        %v1448 = vadd.f32 %v1117, %v1447
        %v1449 = vpop.f32.mrb[0].mxu0
        %v1450 = vadd.f32 %v1119, %v1449
        %v1451 = vpop.f32.mrb[0].mxu0
        %v1452 = vadd.f32 %v1121, %v1451
        %1453 = vdwg.mxu0
        %v1454 = vadd.f32 %v727, %v1296
        %v1455 = vadd.f32 %v728, %v1298
        %v1456 = vadd.f32 %v729, %v1300
        %v1457 = vadd.f32 %v730, %v1302
        %v1458 = vadd.f32 %v731, %v1306
        %v1459 = vadd.f32 %v732, %v1308
        %v1460 = vadd.f32 %v733, %v1310
        %v1461 = vadd.f32 %v734, %v1312
        %v1462 = vadd.f32 %v735, %v1316
        %v1463 = vadd.f32 %v736, %v1318
        %v1464 = vadd.f32 %v737, %v1320
        %v1465 = vadd.f32 %v738, %v1322
        %v1466 = vadd.f32 %v739, %v1326
        %v1467 = vadd.f32 %v740, %v1328
        %v1468 = vadd.f32 %v741, %v1330
        %v1469 = vadd.f32 %v742, %v1332
        %v1470 = vadd.f32 %v743, %v1336
        %v1471 = vadd.f32 %v744, %v1338
        %v1472 = vadd.f32 %v745, %v1340
        %v1473 = vadd.f32 %v746, %v1342
        %v1474 = vadd.f32 %v747, %v1346
        %v1475 = vadd.f32 %v748, %v1348
        %v1476 = vadd.f32 %v749, %v1350
        %v1477 = vadd.f32 %v750, %v1352
        %v1478 = vadd.f32 %v751, %v1356
        %v1479 = vadd.f32 %v752, %v1358
        %v1480 = vadd.f32 %v753, %v1360
        %v1481 = vadd.f32 %v754, %v1362
        %v1482 = vadd.f32 %v755, %v1366
        %v1483 = vadd.f32 %v756, %v1368
        %v1484 = vadd.f32 %v757, %v1370
        %v1485 = vadd.f32 %v758, %v1372
        %v1486 = vadd.f32 %v759, %v1376
        %v1487 = vadd.f32 %v760, %v1378
        %v1488 = vadd.f32 %v761, %v1380
        %v1489 = vadd.f32 %v762, %v1382
        %v1490 = vadd.f32 %v763, %v1386
        %v1491 = vadd.f32 %v764, %v1388
        %v1492 = vadd.f32 %v765, %v1390
        %v1493 = vadd.f32 %v766, %v1392
        %v1494 = vadd.f32 %v767, %v1396
        %v1495 = vadd.f32 %v768, %v1398
        %v1496 = vadd.f32 %v769, %v1400
        %v1497 = vadd.f32 %v770, %v1402
        %v1498 = vadd.f32 %v771, %v1406
        %v1499 = vadd.f32 %v772, %v1408
        %v1500 = vadd.f32 %v773, %v1410
        %v1501 = vadd.f32 %v774, %v1412
        %v1502 = vadd.f32 %v775, %v1416
        %v1503 = vadd.f32 %v776, %v1418
        %v1504 = vadd.f32 %v777, %v1420
        %v1505 = vadd.f32 %v778, %v1422
        %v1506 = vadd.f32 %v779, %v1426
        %v1507 = vadd.f32 %v780, %v1428
        %v1508 = vadd.f32 %v781, %v1430
        %v1509 = vadd.f32 %v782, %v1432
        %v1510 = vadd.f32 %v783, %v1436
        %v1511 = vadd.f32 %v784, %v1438
        %v1512 = vadd.f32 %v785, %v1440
        %v1513 = vadd.f32 %v786, %v1442
        %v1514 = vadd.f32 %v787, %v1446
        %v1515 = vadd.f32 %v788, %v1448
        %v1516 = vadd.f32 %v789, %v1450
        %v1517 = vadd.f32 %v790, %v1452
        %1518 = vst [vmem:[#allocation2] sm:$0xff] %v1454
        %1519 = vst [vmem:[#allocation2 + $0x8] sm:$0xff] %v1455
        %1520 = vst [vmem:[#allocation2 + $0x10] sm:$0xff] %v1456
        %1521 = vst [vmem:[#allocation2 + $0x18] sm:$0xff] %v1457
        %1522 = vst [vmem:[#allocation2 + $0x20] sm:$0xff] %v1458
        %1523 = vst [vmem:[#allocation2 + $0x28] sm:$0xff] %v1459
        %1524 = vst [vmem:[#allocation2 + $0x30] sm:$0xff] %v1460
        %1525 = vst [vmem:[#allocation2 + $0x38] sm:$0xff] %v1461
        %1526 = vst [vmem:[#allocation2 + $0x40] sm:$0xff] %v1462
        %1527 = vst [vmem:[#allocation2 + $0x48] sm:$0xff] %v1463
        %1528 = vst [vmem:[#allocation2 + $0x50] sm:$0xff] %v1464
        %1529 = vst [vmem:[#allocation2 + $0x58] sm:$0xff] %v1465
        %1530 = vst [vmem:[#allocation2 + $0x60] sm:$0xff] %v1466
        %1531 = vst [vmem:[#allocation2 + $0x68] sm:$0xff] %v1467
        %1532 = vst [vmem:[#allocation2 + $0x70] sm:$0xff] %v1468
        %1533 = vst [vmem:[#allocation2 + $0x78] sm:$0xff] %v1469
        %1534 = vst [vmem:[#allocation2 + $0x80] sm:$0xff] %v1470
        %1535 = vst [vmem:[#allocation2 + $0x88] sm:$0xff] %v1471
        %1536 = vst [vmem:[#allocation2 + $0x90] sm:$0xff] %v1472
        %1537 = vst [vmem:[#allocation2 + $0x98] sm:$0xff] %v1473
        %1538 = vst [vmem:[#allocation2 + $0xa0] sm:$0xff] %v1474
        %1539 = vst [vmem:[#allocation2 + $0xa8] sm:$0xff] %v1475
        %1540 = vst [vmem:[#allocation2 + $0xb0] sm:$0xff] %v1476
        %1541 = vst [vmem:[#allocation2 + $0xb8] sm:$0xff] %v1477
        %1542 = vst [vmem:[#allocation2 + $0xc0] sm:$0xff] %v1478
        %1543 = vst [vmem:[#allocation2 + $0xc8] sm:$0xff] %v1479
        %1544 = vst [vmem:[#allocation2 + $0xd0] sm:$0xff] %v1480
        %1545 = vst [vmem:[#allocation2 + $0xd8] sm:$0xff] %v1481
        %1546 = vst [vmem:[#allocation2 + $0xe0] sm:$0xff] %v1482
        %1547 = vst [vmem:[#allocation2 + $0xe8] sm:$0xff] %v1483
        %1548 = vst [vmem:[#allocation2 + $0xf0] sm:$0xff] %v1484
        %1549 = vst [vmem:[#allocation2 + $0xf8] sm:$0xff] %v1485
        %1550 = vst [vmem:[#allocation2 + $0x100] sm:$0xff] %v1486
        %1551 = vst [vmem:[#allocation2 + $0x108] sm:$0xff] %v1487
        %1552 = vst [vmem:[#allocation2 + $0x110] sm:$0xff] %v1488
        %1553 = vst [vmem:[#allocation2 + $0x118] sm:$0xff] %v1489
        %1554 = vst [vmem:[#allocation2 + $0x120] sm:$0xff] %v1490
        %1555 = vst [vmem:[#allocation2 + $0x128] sm:$0xff] %v1491
        %1556 = vst [vmem:[#allocation2 + $0x130] sm:$0xff] %v1492
        %1557 = vst [vmem:[#allocation2 + $0x138] sm:$0xff] %v1493
        %1558 = vst [vmem:[#allocation2 + $0x140] sm:$0xff] %v1494
        %1559 = vst [vmem:[#allocation2 + $0x148] sm:$0xff] %v1495
        %1560 = vst [vmem:[#allocation2 + $0x150] sm:$0xff] %v1496
        %1561 = vst [vmem:[#allocation2 + $0x158] sm:$0xff] %v1497
        %1562 = vst [vmem:[#allocation2 + $0x160] sm:$0xff] %v1498
        %1563 = vst [vmem:[#allocation2 + $0x168] sm:$0xff] %v1499
        %1564 = vst [vmem:[#allocation2 + $0x170] sm:$0xff] %v1500
        %1565 = vst [vmem:[#allocation2 + $0x178] sm:$0xff] %v1501
        %1566 = vst [vmem:[#allocation2 + $0x180] sm:$0xff] %v1502
        %1567 = vst [vmem:[#allocation2 + $0x188] sm:$0xff] %v1503
        %1568 = vst [vmem:[#allocation2 + $0x190] sm:$0xff] %v1504
        %1569 = vst [vmem:[#allocation2 + $0x198] sm:$0xff] %v1505
        %1570 = vst [vmem:[#allocation2 + $0x1a0] sm:$0xff] %v1506
        %1571 = vst [vmem:[#allocation2 + $0x1a8] sm:$0xff] %v1507
        %1572 = vst [vmem:[#allocation2 + $0x1b0] sm:$0xff] %v1508
        %1573 = vst [vmem:[#allocation2 + $0x1b8] sm:$0xff] %v1509
        %1574 = vst [vmem:[#allocation2 + $0x1c0] sm:$0xff] %v1510
        %1575 = vst [vmem:[#allocation2 + $0x1c8] sm:$0xff] %v1511
        %1576 = vst [vmem:[#allocation2 + $0x1d0] sm:$0xff] %v1512
        %1577 = vst [vmem:[#allocation2 + $0x1d8] sm:$0xff] %v1513
        %1578 = vst [vmem:[#allocation2 + $0x1e0] sm:$0xff] %v1514
        %1579 = vst [vmem:[#allocation2 + $0x1e8] sm:$0xff] %v1515
        %1580 = vst [vmem:[#allocation2 + $0x1f0] sm:$0xff] %v1516
        %1581 = vst [vmem:[#allocation2 + $0x1f8] sm:$0xff] %v1517
        // Predicated region
        $region137: #{ssley_forward.17} parent=119 // pred_check
          %p1582 = pneg %p584
        $region138: #{ssley_forward.17} parent=119 // pred_check_branch
          %1584 = sbr.rel (%p1582) target = $region140
        $region139: #{ssley_forward.17} parent=119 // pred_region
          %v1585 = vld [vmem:[#allocation3] sm:$0x1]
          %v1586 = vunpack.c.l.bf16 %v659
          %v1587 = vunpack.c.l.bf16 %v660
          %v1588 = vunpack.c.l.bf16 %v661
          %v1589 = vunpack.c.l.bf16 %v662
          %v1590 = vunpack.c.l.bf16 %v663
          %v1591 = vunpack.c.l.bf16 %v664
          %v1592 = vunpack.c.l.bf16 %v665
          %v1593 = vunpack.c.l.bf16 %v666
          %v1594 = vunpack.c.l.bf16 %v667
          %v1595 = vunpack.c.l.bf16 %v668
          %v1596 = vunpack.c.l.bf16 %v669
          %v1597 = vunpack.c.l.bf16 %v670
          %v1598 = vunpack.c.l.bf16 %v671
          %v1599 = vunpack.c.l.bf16 %v672
          %v1600 = vunpack.c.l.bf16 %v673
          %v1601 = vunpack.c.l.bf16 %v674
          %v1602 = vunpack.c.l.bf16 %v675
          %v1603 = vunpack.c.l.bf16 %v676
          %v1604 = vunpack.c.l.bf16 %v677
          %v1605 = vunpack.c.l.bf16 %v678
          %v1606 = vunpack.c.l.bf16 %v679
          %v1607 = vunpack.c.l.bf16 %v680
          %v1608 = vunpack.c.l.bf16 %v681
          %v1609 = vunpack.c.l.bf16 %v682
          %v1610 = vunpack.c.l.bf16 %v683
          %v1611 = vunpack.c.l.bf16 %v684
          %v1612 = vunpack.c.l.bf16 %v685
          %v1613 = vunpack.c.l.bf16 %v686
          %v1614 = vunpack.c.l.bf16 %v687
          %v1615 = vunpack.c.l.bf16 %v688
          %v1616 = vunpack.c.l.bf16 %v689
          %v1617 = vunpack.c.l.bf16 %v690
          %v1618 = vunpack.c.l.bf16 %v693
          %v1619 = vunpack.c.l.bf16 %v694
          %v1620 = vunpack.c.l.bf16 %v695
          %v1621 = vunpack.c.l.bf16 %v696
          %v1622 = vunpack.c.l.bf16 %v697
          %v1623 = vunpack.c.l.bf16 %v698
          %v1624 = vunpack.c.l.bf16 %v699
          %v1625 = vunpack.c.l.bf16 %v700
          %v1626 = vunpack.c.l.bf16 %v701
          %v1627 = vunpack.c.l.bf16 %v702
          %v1628 = vunpack.c.l.bf16 %v703
          %v1629 = vunpack.c.l.bf16 %v704
          %v1630 = vunpack.c.l.bf16 %v705
          %v1631 = vunpack.c.l.bf16 %v706
          %v1632 = vunpack.c.l.bf16 %v707
          %v1633 = vunpack.c.l.bf16 %v708
          %v1634 = vunpack.c.l.bf16 %v709
          %v1635 = vunpack.c.l.bf16 %v710
          %v1636 = vunpack.c.l.bf16 %v711
          %v1637 = vunpack.c.l.bf16 %v712
          %v1638 = vunpack.c.l.bf16 %v713
          %v1639 = vunpack.c.l.bf16 %v714
          %v1640 = vunpack.c.l.bf16 %v715
          %v1641 = vunpack.c.l.bf16 %v716
          %v1642 = vunpack.c.l.bf16 %v717
          %v1643 = vunpack.c.l.bf16 %v718
          %v1644 = vunpack.c.l.bf16 %v719
          %v1645 = vunpack.c.l.bf16 %v720
          %v1646 = vunpack.c.l.bf16 %v721
          %v1647 = vunpack.c.l.bf16 %v722
          %v1648 = vunpack.c.l.bf16 %v723
          %v1649 = vunpack.c.l.bf16 %v724
          %v1650 = vmul.f32 %v1586, %v1618
          %v1651 = vmul.f32 %v1587, %v1619
          %v1652 = vmul.f32 %v1588, %v1620
          %v1653 = vmul.f32 %v1589, %v1621
          %v1654 = vmul.f32 %v1590, %v1622
          %v1655 = vmul.f32 %v1591, %v1623
          %v1656 = vmul.f32 %v1592, %v1624
          %v1657 = vmul.f32 %v1593, %v1625
          %v1658 = vmul.f32 %v1594, %v1626
          %v1659 = vmul.f32 %v1595, %v1627
          %v1660 = vmul.f32 %v1596, %v1628
          %v1661 = vmul.f32 %v1597, %v1629
          %v1662 = vmul.f32 %v1598, %v1630
          %v1663 = vmul.f32 %v1599, %v1631
          %v1664 = vmul.f32 %v1600, %v1632
          %v1665 = vmul.f32 %v1601, %v1633
          %v1666 = vmul.f32 %v1602, %v1634
          %v1667 = vmul.f32 %v1603, %v1635
          %v1668 = vmul.f32 %v1604, %v1636
          %v1669 = vmul.f32 %v1605, %v1637
          %v1670 = vmul.f32 %v1606, %v1638
          %v1671 = vmul.f32 %v1607, %v1639
          %v1672 = vmul.f32 %v1608, %v1640
          %v1673 = vmul.f32 %v1609, %v1641
          %v1674 = vmul.f32 %v1610, %v1642
          %v1675 = vmul.f32 %v1611, %v1643
          %v1676 = vmul.f32 %v1612, %v1644
          %v1677 = vmul.f32 %v1613, %v1645
          %v1678 = vmul.f32 %v1614, %v1646
          %v1679 = vmul.f32 %v1615, %v1647
          %v1680 = vmul.f32 %v1616, %v1648
          %v1681 = vmul.f32 %v1617, %v1649
          %v1682 = vsel %vm881, %v1650, 0.0
          %v1683 = vsel %vm881, %v1651, 0.0
          %v1684 = vadd.f32 %v1682, %v1683
          %v1685 = vsel %vm881, %v1652, 0.0
          %v1686 = vadd.f32 %v1684, %v1685
          %v1687 = vsel %vm881, %v1653, 0.0
          %v1688 = vadd.f32 %v1686, %v1687
          %v1689 = vsel %vm881, %v1654, 0.0
          %v1690 = vadd.f32 %v1688, %v1689
          %v1691 = vsel %vm881, %v1655, 0.0
          %v1692 = vadd.f32 %v1690, %v1691
          %v1693 = vsel %vm881, %v1656, 0.0
          %v1694 = vadd.f32 %v1692, %v1693
          %v1695 = vsel %vm881, %v1657, 0.0
          %v1696 = vadd.f32 %v1694, %v1695
          %v1697 = vsel %vm881, %v1658, 0.0
          %v1698 = vadd.f32 %v1696, %v1697
          %v1699 = vsel %vm881, %v1659, 0.0
          %v1700 = vadd.f32 %v1698, %v1699
          %v1701 = vsel %vm881, %v1660, 0.0
          %v1702 = vadd.f32 %v1700, %v1701
          %v1703 = vsel %vm881, %v1661, 0.0
          %v1704 = vadd.f32 %v1702, %v1703
          %v1705 = vsel %vm881, %v1662, 0.0
          %v1706 = vadd.f32 %v1704, %v1705
          %v1707 = vsel %vm881, %v1663, 0.0
          %v1708 = vadd.f32 %v1706, %v1707
          %v1709 = vsel %vm881, %v1664, 0.0
          %v1710 = vadd.f32 %v1708, %v1709
          %v1711 = vsel %vm881, %v1665, 0.0
          %v1712 = vadd.f32 %v1710, %v1711
          %v1713 = vsel %vm881, %v1666, 0.0
          %v1714 = vadd.f32 %v1712, %v1713
          %v1715 = vsel %vm881, %v1667, 0.0
          %v1716 = vadd.f32 %v1714, %v1715
          %v1717 = vsel %vm881, %v1668, 0.0
          %v1718 = vadd.f32 %v1716, %v1717
          %v1719 = vsel %vm881, %v1669, 0.0
          %v1720 = vadd.f32 %v1718, %v1719
          %v1721 = vsel %vm881, %v1670, 0.0
          %v1722 = vadd.f32 %v1720, %v1721
          %v1723 = vsel %vm881, %v1671, 0.0
          %v1724 = vadd.f32 %v1722, %v1723
          %v1725 = vsel %vm881, %v1672, 0.0
          %v1726 = vadd.f32 %v1724, %v1725
          %v1727 = vsel %vm881, %v1673, 0.0
          %v1728 = vadd.f32 %v1726, %v1727
          %v1729 = vsel %vm881, %v1674, 0.0
          %v1730 = vadd.f32 %v1728, %v1729
          %v1731 = vsel %vm881, %v1675, 0.0
          %v1732 = vadd.f32 %v1730, %v1731
          %v1733 = vsel %vm881, %v1676, 0.0
          %v1734 = vadd.f32 %v1732, %v1733
          %v1735 = vsel %vm881, %v1677, 0.0
          %v1736 = vadd.f32 %v1734, %v1735
          %v1737 = vsel %vm881, %v1678, 0.0
          %v1738 = vadd.f32 %v1736, %v1737
          %v1739 = vsel %vm881, %v1679, 0.0
          %v1740 = vadd.f32 %v1738, %v1739
          %v1741 = vsel %vm881, %v1680, 0.0
          %v1742 = vadd.f32 %v1740, %v1741
          %v1743 = vsel %vm881, %v1681, 0.0
          %v1744 = vadd.f32 %v1742, %v1743
          %1745 = vadd.xlane.f32.xlu0 %v1744
          %v1746 = vpop.xlane.xlu0 %1745
          %v1747 = vrot.slane %v1746, 4
          %v1748 = vadd.f32 %v1746, %v1747
          %v1749 = vrot.slane %v1748, 2
          %v1750 = vadd.f32 %v1748, %v1749
          %v1751 = vrot.slane %v1750, 1
          %v1752 = vadd.f32 %v1750, %v1751
          %s1753 = vtos %v1752
          %v1754 = vstv %s1753
          %v1755 = vmul.f32 %v1754, -0.26666668
          %v1756 = vadd.f32 %v1585, %v1755
          %vm1757 = vcmask 0
          %1758 = vst.msk [vmem:[#allocation3] sm:$0x1] %vm1757, %v1756
        $region140: #{ssley_forward.17} parent=119 // pred_fallthru
          _
        // Predicated region
        $region141: #{ssley_forward.17} parent=119 // pred_check
          %p1759 = pneg %p585
        $region142: #{ssley_forward.17} parent=119 // pred_check_branch
          %1761 = sbr.rel (%p1759) target = $region144
        $region143: #{ssley_forward.17} parent=119 // pred_region
          %v1762 = vld [vmem:[%s561] sm:$0xff]
          %v1763 = vld [vmem:[%s561 + $0x8] sm:$0xff]
          %v1764 = vld [vmem:[%s561 + $0x10] sm:$0xff]
          %v1765 = vld [vmem:[%s561 + $0x18] sm:$0xff]
          %v1766 = vld [vmem:[%s561 + $0x20] sm:$0xff]
          %v1767 = vld [vmem:[%s561 + $0x28] sm:$0xff]
          %v1768 = vld [vmem:[%s561 + $0x30] sm:$0xff]
          %v1769 = vld [vmem:[%s561 + $0x38] sm:$0xff]
          %v1770 = vld [vmem:[%s561 + $0x40] sm:$0xff]
          %v1771 = vld [vmem:[%s561 + $0x48] sm:$0xff]
          %v1772 = vld [vmem:[%s561 + $0x50] sm:$0xff]
          %v1773 = vld [vmem:[%s561 + $0x58] sm:$0xff]
          %v1774 = vld [vmem:[%s561 + $0x60] sm:$0xff]
          %v1775 = vld [vmem:[%s561 + $0x68] sm:$0xff]
          %v1776 = vld [vmem:[%s561 + $0x70] sm:$0xff]
          %v1777 = vld [vmem:[%s561 + $0x78] sm:$0xff]
          %v1778 = vld [vmem:[%s561 + $0x80] sm:$0xff]
          %v1779 = vld [vmem:[%s561 + $0x88] sm:$0xff]
          %v1780 = vld [vmem:[%s561 + $0x90] sm:$0xff]
          %v1781 = vld [vmem:[%s561 + $0x98] sm:$0xff]
          %v1782 = vld [vmem:[%s561 + $0xa0] sm:$0xff]
          %v1783 = vld [vmem:[%s561 + $0xa8] sm:$0xff]
          %v1784 = vld [vmem:[%s561 + $0xb0] sm:$0xff]
          %v1785 = vld [vmem:[%s561 + $0xb8] sm:$0xff]
          %v1786 = vld [vmem:[%s561 + $0xc0] sm:$0xff]
          %v1787 = vld [vmem:[%s561 + $0xc8] sm:$0xff]
          %v1788 = vld [vmem:[%s561 + $0xd0] sm:$0xff]
          %v1789 = vld [vmem:[%s561 + $0xd8] sm:$0xff]
          %v1790 = vld [vmem:[%s561 + $0xe0] sm:$0xff]
          %v1791 = vld [vmem:[%s561 + $0xe8] sm:$0xff]
          %v1792 = vld [vmem:[%s561 + $0xf0] sm:$0xff]
          %v1793 = vld [vmem:[%s561 + $0xf8] sm:$0xff]
          %v1794 = vld [vmem:[%s567] sm:$0xff]
          %v1795 = vld [vmem:[%s567 + $0x8] sm:$0xff]
          %v1796 = vld [vmem:[%s567 + $0x10] sm:$0xff]
          %v1797 = vld [vmem:[%s567 + $0x18] sm:$0xff]
          %v1798 = vld [vmem:[%s567 + $0x20] sm:$0xff]
          %v1799 = vld [vmem:[%s567 + $0x28] sm:$0xff]
          %v1800 = vld [vmem:[%s567 + $0x30] sm:$0xff]
          %v1801 = vld [vmem:[%s567 + $0x38] sm:$0xff]
          %v1802 = vld [vmem:[%s567 + $0x40] sm:$0xff]
          %v1803 = vld [vmem:[%s567 + $0x48] sm:$0xff]
          %v1804 = vld [vmem:[%s567 + $0x50] sm:$0xff]
          %v1805 = vld [vmem:[%s567 + $0x58] sm:$0xff]
          %v1806 = vld [vmem:[%s567 + $0x60] sm:$0xff]
          %v1807 = vld [vmem:[%s567 + $0x68] sm:$0xff]
          %v1808 = vld [vmem:[%s567 + $0x70] sm:$0xff]
          %v1809 = vld [vmem:[%s567 + $0x78] sm:$0xff]
          %v1810 = vld [vmem:[%s567 + $0x80] sm:$0xff]
          %v1811 = vld [vmem:[%s567 + $0x88] sm:$0xff]
          %v1812 = vld [vmem:[%s567 + $0x90] sm:$0xff]
          %v1813 = vld [vmem:[%s567 + $0x98] sm:$0xff]
          %v1814 = vld [vmem:[%s567 + $0xa0] sm:$0xff]
          %v1815 = vld [vmem:[%s567 + $0xa8] sm:$0xff]
          %v1816 = vld [vmem:[%s567 + $0xb0] sm:$0xff]
          %v1817 = vld [vmem:[%s567 + $0xb8] sm:$0xff]
          %v1818 = vld [vmem:[%s567 + $0xc0] sm:$0xff]
          %v1819 = vld [vmem:[%s567 + $0xc8] sm:$0xff]
          %v1820 = vld [vmem:[%s567 + $0xd0] sm:$0xff]
          %v1821 = vld [vmem:[%s567 + $0xd8] sm:$0xff]
          %v1822 = vld [vmem:[%s567 + $0xe0] sm:$0xff]
          %v1823 = vld [vmem:[%s567 + $0xe8] sm:$0xff]
          %v1824 = vld [vmem:[%s567 + $0xf0] sm:$0xff]
          %v1825 = vld [vmem:[%s567 + $0xf8] sm:$0xff]
          %v1826 = vld [vmem:[%s572] sm:$0x3]
          %v1827 = vld [vmem:[%s577] sm:$0x3]
          %1829 = vset.pattern.permute.xlu0 0
          %1830 = vperm.xlu0 %1829, %v1762
          %v1831 = vpop.permute.xlu0 %1830
          %1834 = vset.pattern.permute.xlu0 0
          %1835 = vperm.xlu0 %1834, %v1763
          %v1836 = vpop.permute.xlu0 %1835
          %1839 = vset.pattern.permute.xlu0 0
          %1840 = vperm.xlu0 %1839, %v1764
          %v1841 = vpop.permute.xlu0 %1840
          %1844 = vset.pattern.permute.xlu0 0
          %1845 = vperm.xlu0 %1844, %v1765
          %v1846 = vpop.permute.xlu0 %1845
          %1849 = vset.pattern.permute.xlu0 0
          %1850 = vperm.xlu0 %1849, %v1766
          %v1851 = vpop.permute.xlu0 %1850
          %1854 = vset.pattern.permute.xlu0 0
          %1855 = vperm.xlu0 %1854, %v1767
          %v1856 = vpop.permute.xlu0 %1855
          %1859 = vset.pattern.permute.xlu0 0
          %1860 = vperm.xlu0 %1859, %v1768
          %v1861 = vpop.permute.xlu0 %1860
          %1864 = vset.pattern.permute.xlu0 0
          %1865 = vperm.xlu0 %1864, %v1769
          %v1866 = vpop.permute.xlu0 %1865
          %1869 = vset.pattern.permute.xlu0 0
          %1870 = vperm.xlu0 %1869, %v1770
          %v1871 = vpop.permute.xlu0 %1870
          %1874 = vset.pattern.permute.xlu0 0
          %1875 = vperm.xlu0 %1874, %v1771
          %v1876 = vpop.permute.xlu0 %1875
          %1879 = vset.pattern.permute.xlu0 0
          %1880 = vperm.xlu0 %1879, %v1772
          %v1881 = vpop.permute.xlu0 %1880
          %1884 = vset.pattern.permute.xlu0 0
          %1885 = vperm.xlu0 %1884, %v1773
          %v1886 = vpop.permute.xlu0 %1885
          %1889 = vset.pattern.permute.xlu0 0
          %1890 = vperm.xlu0 %1889, %v1774
          %v1891 = vpop.permute.xlu0 %1890
          %1894 = vset.pattern.permute.xlu0 0
          %1895 = vperm.xlu0 %1894, %v1775
          %v1896 = vpop.permute.xlu0 %1895
          %1899 = vset.pattern.permute.xlu0 0
          %1900 = vperm.xlu0 %1899, %v1776
          %v1901 = vpop.permute.xlu0 %1900
          %1904 = vset.pattern.permute.xlu0 0
          %1905 = vperm.xlu0 %1904, %v1777
          %v1906 = vpop.permute.xlu0 %1905
          %1909 = vset.pattern.permute.xlu0 0
          %1910 = vperm.xlu0 %1909, %v1778
          %v1911 = vpop.permute.xlu0 %1910
          %1914 = vset.pattern.permute.xlu0 0
          %1915 = vperm.xlu0 %1914, %v1779
          %v1916 = vpop.permute.xlu0 %1915
          %1919 = vset.pattern.permute.xlu0 0
          %1920 = vperm.xlu0 %1919, %v1780
          %v1921 = vpop.permute.xlu0 %1920
          %1924 = vset.pattern.permute.xlu0 0
          %1925 = vperm.xlu0 %1924, %v1781
          %v1926 = vpop.permute.xlu0 %1925
          %1929 = vset.pattern.permute.xlu0 0
          %1930 = vperm.xlu0 %1929, %v1782
          %v1931 = vpop.permute.xlu0 %1930
          %1934 = vset.pattern.permute.xlu0 0
          %1935 = vperm.xlu0 %1934, %v1783
          %v1936 = vpop.permute.xlu0 %1935
          %1939 = vset.pattern.permute.xlu0 0
          %1940 = vperm.xlu0 %1939, %v1784
          %v1941 = vpop.permute.xlu0 %1940
          %1944 = vset.pattern.permute.xlu0 0
          %1945 = vperm.xlu0 %1944, %v1785
          %v1946 = vpop.permute.xlu0 %1945
          %1949 = vset.pattern.permute.xlu0 0
          %1950 = vperm.xlu0 %1949, %v1786
          %v1951 = vpop.permute.xlu0 %1950
          %1954 = vset.pattern.permute.xlu0 0
          %1955 = vperm.xlu0 %1954, %v1787
          %v1956 = vpop.permute.xlu0 %1955
          %1959 = vset.pattern.permute.xlu0 0
          %1960 = vperm.xlu0 %1959, %v1788
          %v1961 = vpop.permute.xlu0 %1960
          %1964 = vset.pattern.permute.xlu0 0
          %1965 = vperm.xlu0 %1964, %v1789
          %v1966 = vpop.permute.xlu0 %1965
          %1969 = vset.pattern.permute.xlu0 0
          %1970 = vperm.xlu0 %1969, %v1790
          %v1971 = vpop.permute.xlu0 %1970
          %1974 = vset.pattern.permute.xlu0 0
          %1975 = vperm.xlu0 %1974, %v1791
          %v1976 = vpop.permute.xlu0 %1975
          %1979 = vset.pattern.permute.xlu0 0
          %1980 = vperm.xlu0 %1979, %v1792
          %v1981 = vpop.permute.xlu0 %1980
          %1984 = vset.pattern.permute.xlu0 0
          %1985 = vperm.xlu0 %1984, %v1793
          %v1986 = vpop.permute.xlu0 %1985
          %v1989 = vlaneseq
          %v1990 = vshrl.u32 %v1989, 7
          %v1991 = vsub.s32 0, %v1990
          %v1992 = vrot.slane %v1826, %v1991
          %v1993 = vlaneseq
          %v1994 = vshrl.u32 %v1993, 7
          %v1995 = vsub.s32 1, %v1994
          %v1996 = vrot.slane %v1826, %v1995
          %v1999 = vmul.f32 %v1831, %v1992
          %v2000 = vmul.f32 %v1831, %v1996
          %v2001 = vmul.f32 %v1836, %v1992
          %v2002 = vmul.f32 %v1836, %v1996
          %v2003 = vmul.f32 %v1841, %v1992
          %v2004 = vmul.f32 %v1841, %v1996
          %v2005 = vmul.f32 %v1846, %v1992
          %v2006 = vmul.f32 %v1846, %v1996
          %v2007 = vmul.f32 %v1851, %v1992
          %v2008 = vmul.f32 %v1851, %v1996
          %v2009 = vmul.f32 %v1856, %v1992
          %v2010 = vmul.f32 %v1856, %v1996
          %v2011 = vmul.f32 %v1861, %v1992
          %v2012 = vmul.f32 %v1861, %v1996
          %v2013 = vmul.f32 %v1866, %v1992
          %v2014 = vmul.f32 %v1866, %v1996
          %v2015 = vmul.f32 %v1871, %v1992
          %v2016 = vmul.f32 %v1871, %v1996
          %v2017 = vmul.f32 %v1876, %v1992
          %v2018 = vmul.f32 %v1876, %v1996
          %v2019 = vmul.f32 %v1881, %v1992
          %v2020 = vmul.f32 %v1881, %v1996
          %v2021 = vmul.f32 %v1886, %v1992
          %v2022 = vmul.f32 %v1886, %v1996
          %v2023 = vmul.f32 %v1891, %v1992
          %v2024 = vmul.f32 %v1891, %v1996
          %v2025 = vmul.f32 %v1896, %v1992
          %v2026 = vmul.f32 %v1896, %v1996
          %v2027 = vmul.f32 %v1901, %v1992
          %v2028 = vmul.f32 %v1901, %v1996
          %v2029 = vmul.f32 %v1906, %v1992
          %v2030 = vmul.f32 %v1906, %v1996
          %v2031 = vmul.f32 %v1911, %v1992
          %v2032 = vmul.f32 %v1911, %v1996
          %v2033 = vmul.f32 %v1916, %v1992
          %v2034 = vmul.f32 %v1916, %v1996
          %v2035 = vmul.f32 %v1921, %v1992
          %v2036 = vmul.f32 %v1921, %v1996
          %v2037 = vmul.f32 %v1926, %v1992
          %v2038 = vmul.f32 %v1926, %v1996
          %v2039 = vmul.f32 %v1931, %v1992
          %v2040 = vmul.f32 %v1931, %v1996
          %v2041 = vmul.f32 %v1936, %v1992
          %v2042 = vmul.f32 %v1936, %v1996
          %v2043 = vmul.f32 %v1941, %v1992
          %v2044 = vmul.f32 %v1941, %v1996
          %v2045 = vmul.f32 %v1946, %v1992
          %v2046 = vmul.f32 %v1946, %v1996
          %v2047 = vmul.f32 %v1951, %v1992
          %v2048 = vmul.f32 %v1951, %v1996
          %v2049 = vmul.f32 %v1956, %v1992
          %v2050 = vmul.f32 %v1956, %v1996
          %v2051 = vmul.f32 %v1961, %v1992
          %v2052 = vmul.f32 %v1961, %v1996
          %v2053 = vmul.f32 %v1966, %v1992
          %v2054 = vmul.f32 %v1966, %v1996
          %v2055 = vmul.f32 %v1971, %v1992
          %v2056 = vmul.f32 %v1971, %v1996
          %v2057 = vmul.f32 %v1976, %v1992
          %v2058 = vmul.f32 %v1976, %v1996
          %v2059 = vmul.f32 %v1981, %v1992
          %v2060 = vmul.f32 %v1981, %v1996
          %v2061 = vmul.f32 %v1986, %v1992
          %v2062 = vmul.f32 %v1986, %v1996
          %2064 = vset.pattern.permute.xlu0 0
          %2065 = vperm.xlu0 %2064, %v1794
          %v2066 = vpop.permute.xlu0 %2065
          %2069 = vset.pattern.permute.xlu0 0
          %2070 = vperm.xlu0 %2069, %v1795
          %v2071 = vpop.permute.xlu0 %2070
          %2074 = vset.pattern.permute.xlu0 0
          %2075 = vperm.xlu0 %2074, %v1796
          %v2076 = vpop.permute.xlu0 %2075
          %2079 = vset.pattern.permute.xlu0 0
          %2080 = vperm.xlu0 %2079, %v1797
          %v2081 = vpop.permute.xlu0 %2080
          %2084 = vset.pattern.permute.xlu0 0
          %2085 = vperm.xlu0 %2084, %v1798
          %v2086 = vpop.permute.xlu0 %2085
          %2089 = vset.pattern.permute.xlu0 0
          %2090 = vperm.xlu0 %2089, %v1799
          %v2091 = vpop.permute.xlu0 %2090
          %2094 = vset.pattern.permute.xlu0 0
          %2095 = vperm.xlu0 %2094, %v1800
          %v2096 = vpop.permute.xlu0 %2095
          %2099 = vset.pattern.permute.xlu0 0
          %2100 = vperm.xlu0 %2099, %v1801
          %v2101 = vpop.permute.xlu0 %2100
          %2104 = vset.pattern.permute.xlu0 0
          %2105 = vperm.xlu0 %2104, %v1802
          %v2106 = vpop.permute.xlu0 %2105
          %2109 = vset.pattern.permute.xlu0 0
          %2110 = vperm.xlu0 %2109, %v1803
          %v2111 = vpop.permute.xlu0 %2110
          %2114 = vset.pattern.permute.xlu0 0
          %2115 = vperm.xlu0 %2114, %v1804
          %v2116 = vpop.permute.xlu0 %2115
          %2119 = vset.pattern.permute.xlu0 0
          %2120 = vperm.xlu0 %2119, %v1805
          %v2121 = vpop.permute.xlu0 %2120
          %2124 = vset.pattern.permute.xlu0 0
          %2125 = vperm.xlu0 %2124, %v1806
          %v2126 = vpop.permute.xlu0 %2125
          %2129 = vset.pattern.permute.xlu0 0
          %2130 = vperm.xlu0 %2129, %v1807
          %v2131 = vpop.permute.xlu0 %2130
          %2134 = vset.pattern.permute.xlu0 0
          %2135 = vperm.xlu0 %2134, %v1808
          %v2136 = vpop.permute.xlu0 %2135
          %2139 = vset.pattern.permute.xlu0 0
          %2140 = vperm.xlu0 %2139, %v1809
          %v2141 = vpop.permute.xlu0 %2140
          %2144 = vset.pattern.permute.xlu0 0
          %2145 = vperm.xlu0 %2144, %v1810
          %v2146 = vpop.permute.xlu0 %2145
          %2149 = vset.pattern.permute.xlu0 0
          %2150 = vperm.xlu0 %2149, %v1811
          %v2151 = vpop.permute.xlu0 %2150
          %2154 = vset.pattern.permute.xlu0 0
          %2155 = vperm.xlu0 %2154, %v1812
          %v2156 = vpop.permute.xlu0 %2155
          %2159 = vset.pattern.permute.xlu0 0
          %2160 = vperm.xlu0 %2159, %v1813
          %v2161 = vpop.permute.xlu0 %2160
          %2164 = vset.pattern.permute.xlu0 0
          %2165 = vperm.xlu0 %2164, %v1814
          %v2166 = vpop.permute.xlu0 %2165
          %2169 = vset.pattern.permute.xlu0 0
          %2170 = vperm.xlu0 %2169, %v1815
          %v2171 = vpop.permute.xlu0 %2170
          %2174 = vset.pattern.permute.xlu0 0
          %2175 = vperm.xlu0 %2174, %v1816
          %v2176 = vpop.permute.xlu0 %2175
          %2179 = vset.pattern.permute.xlu0 0
          %2180 = vperm.xlu0 %2179, %v1817
          %v2181 = vpop.permute.xlu0 %2180
          %2184 = vset.pattern.permute.xlu0 0
          %2185 = vperm.xlu0 %2184, %v1818
          %v2186 = vpop.permute.xlu0 %2185
          %2189 = vset.pattern.permute.xlu0 0
          %2190 = vperm.xlu0 %2189, %v1819
          %v2191 = vpop.permute.xlu0 %2190
          %2194 = vset.pattern.permute.xlu0 0
          %2195 = vperm.xlu0 %2194, %v1820
          %v2196 = vpop.permute.xlu0 %2195
          %2199 = vset.pattern.permute.xlu0 0
          %2200 = vperm.xlu0 %2199, %v1821
          %v2201 = vpop.permute.xlu0 %2200
          %2204 = vset.pattern.permute.xlu0 0
          %2205 = vperm.xlu0 %2204, %v1822
          %v2206 = vpop.permute.xlu0 %2205
          %2209 = vset.pattern.permute.xlu0 0
          %2210 = vperm.xlu0 %2209, %v1823
          %v2211 = vpop.permute.xlu0 %2210
          %2214 = vset.pattern.permute.xlu0 0
          %2215 = vperm.xlu0 %2214, %v1824
          %v2216 = vpop.permute.xlu0 %2215
          %2219 = vset.pattern.permute.xlu0 0
          %2220 = vperm.xlu0 %2219, %v1825
          %v2221 = vpop.permute.xlu0 %2220
          %v2224 = vlaneseq
          %v2225 = vshrl.u32 %v2224, 7
          %v2226 = vsub.s32 0, %v2225
          %v2227 = vrot.slane %v1827, %v2226
          %v2228 = vlaneseq
          %v2229 = vshrl.u32 %v2228, 7
          %v2230 = vsub.s32 1, %v2229
          %v2231 = vrot.slane %v1827, %v2230
          %v2234 = vmul.f32 %v2066, %v2227
          %v2235 = vmul.f32 %v2066, %v2231
          %v2236 = vmul.f32 %v2071, %v2227
          %v2237 = vmul.f32 %v2071, %v2231
          %v2238 = vmul.f32 %v2076, %v2227
          %v2239 = vmul.f32 %v2076, %v2231
          %v2240 = vmul.f32 %v2081, %v2227
          %v2241 = vmul.f32 %v2081, %v2231
          %v2242 = vmul.f32 %v2086, %v2227
          %v2243 = vmul.f32 %v2086, %v2231
          %v2244 = vmul.f32 %v2091, %v2227
          %v2245 = vmul.f32 %v2091, %v2231
          %v2246 = vmul.f32 %v2096, %v2227
          %v2247 = vmul.f32 %v2096, %v2231
          %v2248 = vmul.f32 %v2101, %v2227
          %v2249 = vmul.f32 %v2101, %v2231
          %v2250 = vmul.f32 %v2106, %v2227
          %v2251 = vmul.f32 %v2106, %v2231
          %v2252 = vmul.f32 %v2111, %v2227
          %v2253 = vmul.f32 %v2111, %v2231
          %v2254 = vmul.f32 %v2116, %v2227
          %v2255 = vmul.f32 %v2116, %v2231
          %v2256 = vmul.f32 %v2121, %v2227
          %v2257 = vmul.f32 %v2121, %v2231
          %v2258 = vmul.f32 %v2126, %v2227
          %v2259 = vmul.f32 %v2126, %v2231
          %v2260 = vmul.f32 %v2131, %v2227
          %v2261 = vmul.f32 %v2131, %v2231
          %v2262 = vmul.f32 %v2136, %v2227
          %v2263 = vmul.f32 %v2136, %v2231
          %v2264 = vmul.f32 %v2141, %v2227
          %v2265 = vmul.f32 %v2141, %v2231
          %v2266 = vmul.f32 %v2146, %v2227
          %v2267 = vmul.f32 %v2146, %v2231
          %v2268 = vmul.f32 %v2151, %v2227
          %v2269 = vmul.f32 %v2151, %v2231
          %v2270 = vmul.f32 %v2156, %v2227
          %v2271 = vmul.f32 %v2156, %v2231
          %v2272 = vmul.f32 %v2161, %v2227
          %v2273 = vmul.f32 %v2161, %v2231
          %v2274 = vmul.f32 %v2166, %v2227
          %v2275 = vmul.f32 %v2166, %v2231
          %v2276 = vmul.f32 %v2171, %v2227
          %v2277 = vmul.f32 %v2171, %v2231
          %v2278 = vmul.f32 %v2176, %v2227
          %v2279 = vmul.f32 %v2176, %v2231
          %v2280 = vmul.f32 %v2181, %v2227
          %v2281 = vmul.f32 %v2181, %v2231
          %v2282 = vmul.f32 %v2186, %v2227
          %v2283 = vmul.f32 %v2186, %v2231
          %v2284 = vmul.f32 %v2191, %v2227
          %v2285 = vmul.f32 %v2191, %v2231
          %v2286 = vmul.f32 %v2196, %v2227
          %v2287 = vmul.f32 %v2196, %v2231
          %v2288 = vmul.f32 %v2201, %v2227
          %v2289 = vmul.f32 %v2201, %v2231
          %v2290 = vmul.f32 %v2206, %v2227
          %v2291 = vmul.f32 %v2206, %v2231
          %v2292 = vmul.f32 %v2211, %v2227
          %v2293 = vmul.f32 %v2211, %v2231
          %v2294 = vmul.f32 %v2216, %v2227
          %v2295 = vmul.f32 %v2216, %v2231
          %v2296 = vmul.f32 %v2221, %v2227
          %v2297 = vmul.f32 %v2221, %v2231
          %v2298 = vadd.f32 %v1999, %v2234
          %v2299 = vadd.f32 %v2000, %v2235
          %v2300 = vadd.f32 %v2001, %v2236
          %v2301 = vadd.f32 %v2002, %v2237
          %v2302 = vadd.f32 %v2003, %v2238
          %v2303 = vadd.f32 %v2004, %v2239
          %v2304 = vadd.f32 %v2005, %v2240
          %v2305 = vadd.f32 %v2006, %v2241
          %v2306 = vadd.f32 %v2007, %v2242
          %v2307 = vadd.f32 %v2008, %v2243
          %v2308 = vadd.f32 %v2009, %v2244
          %v2309 = vadd.f32 %v2010, %v2245
          %v2310 = vadd.f32 %v2011, %v2246
          %v2311 = vadd.f32 %v2012, %v2247
          %v2312 = vadd.f32 %v2013, %v2248
          %v2313 = vadd.f32 %v2014, %v2249
          %v2314 = vadd.f32 %v2015, %v2250
          %v2315 = vadd.f32 %v2016, %v2251
          %v2316 = vadd.f32 %v2017, %v2252
          %v2317 = vadd.f32 %v2018, %v2253
          %v2318 = vadd.f32 %v2019, %v2254
          %v2319 = vadd.f32 %v2020, %v2255
          %v2320 = vadd.f32 %v2021, %v2256
          %v2321 = vadd.f32 %v2022, %v2257
          %v2322 = vadd.f32 %v2023, %v2258
          %v2323 = vadd.f32 %v2024, %v2259
          %v2324 = vadd.f32 %v2025, %v2260
          %v2325 = vadd.f32 %v2026, %v2261
          %v2326 = vadd.f32 %v2027, %v2262
          %v2327 = vadd.f32 %v2028, %v2263
          %v2328 = vadd.f32 %v2029, %v2264
          %v2329 = vadd.f32 %v2030, %v2265
          %v2330 = vadd.f32 %v2031, %v2266
          %v2331 = vadd.f32 %v2032, %v2267
          %v2332 = vadd.f32 %v2033, %v2268
          %v2333 = vadd.f32 %v2034, %v2269
          %v2334 = vadd.f32 %v2035, %v2270
          %v2335 = vadd.f32 %v2036, %v2271
          %v2336 = vadd.f32 %v2037, %v2272
          %v2337 = vadd.f32 %v2038, %v2273
          %v2338 = vadd.f32 %v2039, %v2274
          %v2339 = vadd.f32 %v2040, %v2275
          %v2340 = vadd.f32 %v2041, %v2276
          %v2341 = vadd.f32 %v2042, %v2277
          %v2342 = vadd.f32 %v2043, %v2278
          %v2343 = vadd.f32 %v2044, %v2279
          %v2344 = vadd.f32 %v2045, %v2280
          %v2345 = vadd.f32 %v2046, %v2281
          %v2346 = vadd.f32 %v2047, %v2282
          %v2347 = vadd.f32 %v2048, %v2283
          %v2348 = vadd.f32 %v2049, %v2284
          %v2349 = vadd.f32 %v2050, %v2285
          %v2350 = vadd.f32 %v2051, %v2286
          %v2351 = vadd.f32 %v2052, %v2287
          %v2352 = vadd.f32 %v2053, %v2288
          %v2353 = vadd.f32 %v2054, %v2289
          %v2354 = vadd.f32 %v2055, %v2290
          %v2355 = vadd.f32 %v2056, %v2291
          %v2356 = vadd.f32 %v2057, %v2292
          %v2357 = vadd.f32 %v2058, %v2293
          %v2358 = vadd.f32 %v2059, %v2294
          %v2359 = vadd.f32 %v2060, %v2295
          %v2360 = vadd.f32 %v2061, %v2296
          %v2361 = vadd.f32 %v2062, %v2297
          %v2362 = vld [vmem:[#allocation2] sm:$0xff]
          %v2363 = vld [vmem:[#allocation2 + $0x8] sm:$0xff]
          %v2364 = vld [vmem:[#allocation2 + $0x10] sm:$0xff]
          %v2365 = vld [vmem:[#allocation2 + $0x18] sm:$0xff]
          %v2366 = vld [vmem:[#allocation2 + $0x20] sm:$0xff]
          %v2367 = vld [vmem:[#allocation2 + $0x28] sm:$0xff]
          %v2368 = vld [vmem:[#allocation2 + $0x30] sm:$0xff]
          %v2369 = vld [vmem:[#allocation2 + $0x38] sm:$0xff]
          %v2370 = vld [vmem:[#allocation2 + $0x40] sm:$0xff]
          %v2371 = vld [vmem:[#allocation2 + $0x48] sm:$0xff]
          %v2372 = vld [vmem:[#allocation2 + $0x50] sm:$0xff]
          %v2373 = vld [vmem:[#allocation2 + $0x58] sm:$0xff]
          %v2374 = vld [vmem:[#allocation2 + $0x60] sm:$0xff]
          %v2375 = vld [vmem:[#allocation2 + $0x68] sm:$0xff]
          %v2376 = vld [vmem:[#allocation2 + $0x70] sm:$0xff]
          %v2377 = vld [vmem:[#allocation2 + $0x78] sm:$0xff]
          %v2378 = vld [vmem:[#allocation2 + $0x80] sm:$0xff]
          %v2379 = vld [vmem:[#allocation2 + $0x88] sm:$0xff]
          %v2380 = vld [vmem:[#allocation2 + $0x90] sm:$0xff]
          %v2381 = vld [vmem:[#allocation2 + $0x98] sm:$0xff]
          %v2382 = vld [vmem:[#allocation2 + $0xa0] sm:$0xff]
          %v2383 = vld [vmem:[#allocation2 + $0xa8] sm:$0xff]
          %v2384 = vld [vmem:[#allocation2 + $0xb0] sm:$0xff]
          %v2385 = vld [vmem:[#allocation2 + $0xb8] sm:$0xff]
          %v2386 = vld [vmem:[#allocation2 + $0xc0] sm:$0xff]
          %v2387 = vld [vmem:[#allocation2 + $0xc8] sm:$0xff]
          %v2388 = vld [vmem:[#allocation2 + $0xd0] sm:$0xff]
          %v2389 = vld [vmem:[#allocation2 + $0xd8] sm:$0xff]
          %v2390 = vld [vmem:[#allocation2 + $0xe0] sm:$0xff]
          %v2391 = vld [vmem:[#allocation2 + $0xe8] sm:$0xff]
          %v2392 = vld [vmem:[#allocation2 + $0xf0] sm:$0xff]
          %v2393 = vld [vmem:[#allocation2 + $0xf8] sm:$0xff]
          %v2394 = vld [vmem:[#allocation2 + $0x100] sm:$0xff]
          %v2395 = vld [vmem:[#allocation2 + $0x108] sm:$0xff]
          %v2396 = vld [vmem:[#allocation2 + $0x110] sm:$0xff]
          %v2397 = vld [vmem:[#allocation2 + $0x118] sm:$0xff]
          %v2398 = vld [vmem:[#allocation2 + $0x120] sm:$0xff]
          %v2399 = vld [vmem:[#allocation2 + $0x128] sm:$0xff]
          %v2400 = vld [vmem:[#allocation2 + $0x130] sm:$0xff]
          %v2401 = vld [vmem:[#allocation2 + $0x138] sm:$0xff]
          %v2402 = vld [vmem:[#allocation2 + $0x140] sm:$0xff]
          %v2403 = vld [vmem:[#allocation2 + $0x148] sm:$0xff]
          %v2404 = vld [vmem:[#allocation2 + $0x150] sm:$0xff]
          %v2405 = vld [vmem:[#allocation2 + $0x158] sm:$0xff]
          %v2406 = vld [vmem:[#allocation2 + $0x160] sm:$0xff]
          %v2407 = vld [vmem:[#allocation2 + $0x168] sm:$0xff]
          %v2408 = vld [vmem:[#allocation2 + $0x170] sm:$0xff]
          %v2409 = vld [vmem:[#allocation2 + $0x178] sm:$0xff]
          %v2410 = vld [vmem:[#allocation2 + $0x180] sm:$0xff]
          %v2411 = vld [vmem:[#allocation2 + $0x188] sm:$0xff]
          %v2412 = vld [vmem:[#allocation2 + $0x190] sm:$0xff]
          %v2413 = vld [vmem:[#allocation2 + $0x198] sm:$0xff]
          %v2414 = vld [vmem:[#allocation2 + $0x1a0] sm:$0xff]
          %v2415 = vld [vmem:[#allocation2 + $0x1a8] sm:$0xff]
          %v2416 = vld [vmem:[#allocation2 + $0x1b0] sm:$0xff]
          %v2417 = vld [vmem:[#allocation2 + $0x1b8] sm:$0xff]
          %v2418 = vld [vmem:[#allocation2 + $0x1c0] sm:$0xff]
          %v2419 = vld [vmem:[#allocation2 + $0x1c8] sm:$0xff]
          %v2420 = vld [vmem:[#allocation2 + $0x1d0] sm:$0xff]
          %v2421 = vld [vmem:[#allocation2 + $0x1d8] sm:$0xff]
          %v2422 = vld [vmem:[#allocation2 + $0x1e0] sm:$0xff]
          %v2423 = vld [vmem:[#allocation2 + $0x1e8] sm:$0xff]
          %v2424 = vld [vmem:[#allocation2 + $0x1f0] sm:$0xff]
          %v2425 = vld [vmem:[#allocation2 + $0x1f8] sm:$0xff]
          %v2426 = vmul.f32 %v2298, 16.0
          %v2427 = vmul.f32 %v2299, 16.0
          %v2428 = vmul.f32 %v2300, 16.0
          %v2429 = vmul.f32 %v2301, 16.0
          %v2430 = vmul.f32 %v2302, 16.0
          %v2431 = vmul.f32 %v2303, 16.0
          %v2432 = vmul.f32 %v2304, 16.0
          %v2433 = vmul.f32 %v2305, 16.0
          %v2434 = vmul.f32 %v2306, 16.0
          %v2435 = vmul.f32 %v2307, 16.0
          %v2436 = vmul.f32 %v2308, 16.0
          %v2437 = vmul.f32 %v2309, 16.0
          %v2438 = vmul.f32 %v2310, 16.0
          %v2439 = vmul.f32 %v2311, 16.0
          %v2440 = vmul.f32 %v2312, 16.0
          %v2441 = vmul.f32 %v2313, 16.0
          %v2442 = vmul.f32 %v2314, 16.0
          %v2443 = vmul.f32 %v2315, 16.0
          %v2444 = vmul.f32 %v2316, 16.0
          %v2445 = vmul.f32 %v2317, 16.0
          %v2446 = vmul.f32 %v2318, 16.0
          %v2447 = vmul.f32 %v2319, 16.0
          %v2448 = vmul.f32 %v2320, 16.0
          %v2449 = vmul.f32 %v2321, 16.0
          %v2450 = vmul.f32 %v2322, 16.0
          %v2451 = vmul.f32 %v2323, 16.0
          %v2452 = vmul.f32 %v2324, 16.0
          %v2453 = vmul.f32 %v2325, 16.0
          %v2454 = vmul.f32 %v2326, 16.0
          %v2455 = vmul.f32 %v2327, 16.0
          %v2456 = vmul.f32 %v2328, 16.0
          %v2457 = vmul.f32 %v2329, 16.0
          %v2458 = vmul.f32 %v2330, 16.0
          %v2459 = vmul.f32 %v2331, 16.0
          %v2460 = vmul.f32 %v2332, 16.0
          %v2461 = vmul.f32 %v2333, 16.0
          %v2462 = vmul.f32 %v2334, 16.0
          %v2463 = vmul.f32 %v2335, 16.0
          %v2464 = vmul.f32 %v2336, 16.0
          %v2465 = vmul.f32 %v2337, 16.0
          %v2466 = vmul.f32 %v2338, 16.0
          %v2467 = vmul.f32 %v2339, 16.0
          %v2468 = vmul.f32 %v2340, 16.0
          %v2469 = vmul.f32 %v2341, 16.0
          %v2470 = vmul.f32 %v2342, 16.0
          %v2471 = vmul.f32 %v2343, 16.0
          %v2472 = vmul.f32 %v2344, 16.0
          %v2473 = vmul.f32 %v2345, 16.0
          %v2474 = vmul.f32 %v2346, 16.0
          %v2475 = vmul.f32 %v2347, 16.0
          %v2476 = vmul.f32 %v2348, 16.0
          %v2477 = vmul.f32 %v2349, 16.0
          %v2478 = vmul.f32 %v2350, 16.0
          %v2479 = vmul.f32 %v2351, 16.0
          %v2480 = vmul.f32 %v2352, 16.0
          %v2481 = vmul.f32 %v2353, 16.0
          %v2482 = vmul.f32 %v2354, 16.0
          %v2483 = vmul.f32 %v2355, 16.0
          %v2484 = vmul.f32 %v2356, 16.0
          %v2485 = vmul.f32 %v2357, 16.0
          %v2486 = vmul.f32 %v2358, 16.0
          %v2487 = vmul.f32 %v2359, 16.0
          %v2488 = vmul.f32 %v2360, 16.0
          %v2489 = vmul.f32 %v2361, 16.0
          %v2490 = vsub.f32 %v2362, %v2426
          %v2491 = vsub.f32 %v2363, %v2427
          %v2492 = vsub.f32 %v2364, %v2428
          %v2493 = vsub.f32 %v2365, %v2429
          %v2494 = vsub.f32 %v2366, %v2430
          %v2495 = vsub.f32 %v2367, %v2431
          %v2496 = vsub.f32 %v2368, %v2432
          %v2497 = vsub.f32 %v2369, %v2433
          %v2498 = vsub.f32 %v2370, %v2434
          %v2499 = vsub.f32 %v2371, %v2435
          %v2500 = vsub.f32 %v2372, %v2436
          %v2501 = vsub.f32 %v2373, %v2437
          %v2502 = vsub.f32 %v2374, %v2438
          %v2503 = vsub.f32 %v2375, %v2439
          %v2504 = vsub.f32 %v2376, %v2440
          %v2505 = vsub.f32 %v2377, %v2441
          %v2506 = vsub.f32 %v2378, %v2442
          %v2507 = vsub.f32 %v2379, %v2443
          %v2508 = vsub.f32 %v2380, %v2444
          %v2509 = vsub.f32 %v2381, %v2445
          %v2510 = vsub.f32 %v2382, %v2446
          %v2511 = vsub.f32 %v2383, %v2447
          %v2512 = vsub.f32 %v2384, %v2448
          %v2513 = vsub.f32 %v2385, %v2449
          %v2514 = vsub.f32 %v2386, %v2450
          %v2515 = vsub.f32 %v2387, %v2451
          %v2516 = vsub.f32 %v2388, %v2452
          %v2517 = vsub.f32 %v2389, %v2453
          %v2518 = vsub.f32 %v2390, %v2454
          %v2519 = vsub.f32 %v2391, %v2455
          %v2520 = vsub.f32 %v2392, %v2456
          %v2521 = vsub.f32 %v2393, %v2457
          %v2522 = vsub.f32 %v2394, %v2458
          %v2523 = vsub.f32 %v2395, %v2459
          %v2524 = vsub.f32 %v2396, %v2460
          %v2525 = vsub.f32 %v2397, %v2461
          %v2526 = vsub.f32 %v2398, %v2462
          %v2527 = vsub.f32 %v2399, %v2463
          %v2528 = vsub.f32 %v2400, %v2464
          %v2529 = vsub.f32 %v2401, %v2465
          %v2530 = vsub.f32 %v2402, %v2466
          %v2531 = vsub.f32 %v2403, %v2467
          %v2532 = vsub.f32 %v2404, %v2468
          %v2533 = vsub.f32 %v2405, %v2469
          %v2534 = vsub.f32 %v2406, %v2470
          %v2535 = vsub.f32 %v2407, %v2471
          %v2536 = vsub.f32 %v2408, %v2472
          %v2537 = vsub.f32 %v2409, %v2473
          %v2538 = vsub.f32 %v2410, %v2474
          %v2539 = vsub.f32 %v2411, %v2475
          %v2540 = vsub.f32 %v2412, %v2476
          %v2541 = vsub.f32 %v2413, %v2477
          %v2542 = vsub.f32 %v2414, %v2478
          %v2543 = vsub.f32 %v2415, %v2479
          %v2544 = vsub.f32 %v2416, %v2480
          %v2545 = vsub.f32 %v2417, %v2481
          %v2546 = vsub.f32 %v2418, %v2482
          %v2547 = vsub.f32 %v2419, %v2483
          %v2548 = vsub.f32 %v2420, %v2484
          %v2549 = vsub.f32 %v2421, %v2485
          %v2550 = vsub.f32 %v2422, %v2486
          %v2551 = vsub.f32 %v2423, %v2487
          %v2552 = vsub.f32 %v2424, %v2488
          %v2553 = vsub.f32 %v2425, %v2489
          %v2554 = vmul.f32 %v2490, 0.06666667
          %v2555 = vmul.f32 %v2491, 0.06666667
          %v2556 = vmul.f32 %v2492, 0.06666667
          %v2557 = vmul.f32 %v2493, 0.06666667
          %v2558 = vmul.f32 %v2494, 0.06666667
          %v2559 = vmul.f32 %v2495, 0.06666667
          %v2560 = vmul.f32 %v2496, 0.06666667
          %v2561 = vmul.f32 %v2497, 0.06666667
          %v2562 = vmul.f32 %v2498, 0.06666667
          %v2563 = vmul.f32 %v2499, 0.06666667
          %v2564 = vmul.f32 %v2500, 0.06666667
          %v2565 = vmul.f32 %v2501, 0.06666667
          %v2566 = vmul.f32 %v2502, 0.06666667
          %v2567 = vmul.f32 %v2503, 0.06666667
          %v2568 = vmul.f32 %v2504, 0.06666667
          %v2569 = vmul.f32 %v2505, 0.06666667
          %v2570 = vmul.f32 %v2506, 0.06666667
          %v2571 = vmul.f32 %v2507, 0.06666667
          %v2572 = vmul.f32 %v2508, 0.06666667
          %v2573 = vmul.f32 %v2509, 0.06666667
          %v2574 = vmul.f32 %v2510, 0.06666667
          %v2575 = vmul.f32 %v2511, 0.06666667
          %v2576 = vmul.f32 %v2512, 0.06666667
          %v2577 = vmul.f32 %v2513, 0.06666667
          %v2578 = vmul.f32 %v2514, 0.06666667
          %v2579 = vmul.f32 %v2515, 0.06666667
          %v2580 = vmul.f32 %v2516, 0.06666667
          %v2581 = vmul.f32 %v2517, 0.06666667
          %v2582 = vmul.f32 %v2518, 0.06666667
          %v2583 = vmul.f32 %v2519, 0.06666667
          %v2584 = vmul.f32 %v2520, 0.06666667
          %v2585 = vmul.f32 %v2521, 0.06666667
          %v2586 = vmul.f32 %v2522, 0.06666667
          %v2587 = vmul.f32 %v2523, 0.06666667
          %v2588 = vmul.f32 %v2524, 0.06666667
          %v2589 = vmul.f32 %v2525, 0.06666667
          %v2590 = vmul.f32 %v2526, 0.06666667
          %v2591 = vmul.f32 %v2527, 0.06666667
          %v2592 = vmul.f32 %v2528, 0.06666667
          %v2593 = vmul.f32 %v2529, 0.06666667
          %v2594 = vmul.f32 %v2530, 0.06666667
          %v2595 = vmul.f32 %v2531, 0.06666667
          %v2596 = vmul.f32 %v2532, 0.06666667
          %v2597 = vmul.f32 %v2533, 0.06666667
          %v2598 = vmul.f32 %v2534, 0.06666667
          %v2599 = vmul.f32 %v2535, 0.06666667
          %v2600 = vmul.f32 %v2536, 0.06666667
          %v2601 = vmul.f32 %v2537, 0.06666667
          %v2602 = vmul.f32 %v2538, 0.06666667
          %v2603 = vmul.f32 %v2539, 0.06666667
          %v2604 = vmul.f32 %v2540, 0.06666667
          %v2605 = vmul.f32 %v2541, 0.06666667
          %v2606 = vmul.f32 %v2542, 0.06666667
          %v2607 = vmul.f32 %v2543, 0.06666667
          %v2608 = vmul.f32 %v2544, 0.06666667
          %v2609 = vmul.f32 %v2545, 0.06666667
          %v2610 = vmul.f32 %v2546, 0.06666667
          %v2611 = vmul.f32 %v2547, 0.06666667
          %v2612 = vmul.f32 %v2548, 0.06666667
          %v2613 = vmul.f32 %v2549, 0.06666667
          %v2614 = vmul.f32 %v2550, 0.06666667
          %v2615 = vmul.f32 %v2551, 0.06666667
          %v2616 = vmul.f32 %v2552, 0.06666667
          %v2617 = vmul.f32 %v2553, 0.06666667
          %v2618 = vld [vmem:[#allocation3] sm:$0x1]
          %v2619 = vmul.f32 %v2554, %v2554
          %v2620 = vmul.f32 %v2555, %v2555
          %v2621 = vmul.f32 %v2556, %v2556
          %v2622 = vmul.f32 %v2557, %v2557
          %v2623 = vmul.f32 %v2558, %v2558
          %v2624 = vmul.f32 %v2559, %v2559
          %v2625 = vmul.f32 %v2560, %v2560
          %v2626 = vmul.f32 %v2561, %v2561
          %v2627 = vmul.f32 %v2562, %v2562
          %v2628 = vmul.f32 %v2563, %v2563
          %v2629 = vmul.f32 %v2564, %v2564
          %v2630 = vmul.f32 %v2565, %v2565
          %v2631 = vmul.f32 %v2566, %v2566
          %v2632 = vmul.f32 %v2567, %v2567
          %v2633 = vmul.f32 %v2568, %v2568
          %v2634 = vmul.f32 %v2569, %v2569
          %v2635 = vmul.f32 %v2570, %v2570
          %v2636 = vmul.f32 %v2571, %v2571
          %v2637 = vmul.f32 %v2572, %v2572
          %v2638 = vmul.f32 %v2573, %v2573
          %v2639 = vmul.f32 %v2574, %v2574
          %v2640 = vmul.f32 %v2575, %v2575
          %v2641 = vmul.f32 %v2576, %v2576
          %v2642 = vmul.f32 %v2577, %v2577
          %v2643 = vmul.f32 %v2578, %v2578
          %v2644 = vmul.f32 %v2579, %v2579
          %v2645 = vmul.f32 %v2580, %v2580
          %v2646 = vmul.f32 %v2581, %v2581
          %v2647 = vmul.f32 %v2582, %v2582
          %v2648 = vmul.f32 %v2583, %v2583
          %v2649 = vmul.f32 %v2584, %v2584
          %v2650 = vmul.f32 %v2585, %v2585
          %v2651 = vmul.f32 %v2586, %v2586
          %v2652 = vmul.f32 %v2587, %v2587
          %v2653 = vmul.f32 %v2588, %v2588
          %v2654 = vmul.f32 %v2589, %v2589
          %v2655 = vmul.f32 %v2590, %v2590
          %v2656 = vmul.f32 %v2591, %v2591
          %v2657 = vmul.f32 %v2592, %v2592
          %v2658 = vmul.f32 %v2593, %v2593
          %v2659 = vmul.f32 %v2594, %v2594
          %v2660 = vmul.f32 %v2595, %v2595
          %v2661 = vmul.f32 %v2596, %v2596
          %v2662 = vmul.f32 %v2597, %v2597
          %v2663 = vmul.f32 %v2598, %v2598
          %v2664 = vmul.f32 %v2599, %v2599
          %v2665 = vmul.f32 %v2600, %v2600
          %v2666 = vmul.f32 %v2601, %v2601
          %v2667 = vmul.f32 %v2602, %v2602
          %v2668 = vmul.f32 %v2603, %v2603
          %v2669 = vmul.f32 %v2604, %v2604
          %v2670 = vmul.f32 %v2605, %v2605
          %v2671 = vmul.f32 %v2606, %v2606
          %v2672 = vmul.f32 %v2607, %v2607
          %v2673 = vmul.f32 %v2608, %v2608
          %v2674 = vmul.f32 %v2609, %v2609
          %v2675 = vmul.f32 %v2610, %v2610
          %v2676 = vmul.f32 %v2611, %v2611
          %v2677 = vmul.f32 %v2612, %v2612
          %v2678 = vmul.f32 %v2613, %v2613
          %v2679 = vmul.f32 %v2614, %v2614
          %v2680 = vmul.f32 %v2615, %v2615
          %v2681 = vmul.f32 %v2616, %v2616
          %v2682 = vmul.f32 %v2617, %v2617
          %v2683 = vadd.f32 %v2619, %v2620
          %v2684 = vadd.f32 %v2683, %v2621
          %v2685 = vadd.f32 %v2684, %v2622
          %v2686 = vadd.f32 %v2685, %v2623
          %v2687 = vadd.f32 %v2686, %v2624
          %v2688 = vadd.f32 %v2687, %v2625
          %v2689 = vadd.f32 %v2688, %v2626
          %v2690 = vadd.f32 %v2689, %v2627
          %v2691 = vadd.f32 %v2690, %v2628
          %v2692 = vadd.f32 %v2691, %v2629
          %v2693 = vadd.f32 %v2692, %v2630
          %v2694 = vadd.f32 %v2693, %v2631
          %v2695 = vadd.f32 %v2694, %v2632
          %v2696 = vadd.f32 %v2695, %v2633
          %v2697 = vadd.f32 %v2696, %v2634
          %v2698 = vadd.f32 %v2697, %v2635
          %v2699 = vadd.f32 %v2698, %v2636
          %v2700 = vadd.f32 %v2699, %v2637
          %v2701 = vadd.f32 %v2700, %v2638
          %v2702 = vadd.f32 %v2701, %v2639
          %v2703 = vadd.f32 %v2702, %v2640
          %v2704 = vadd.f32 %v2703, %v2641
          %v2705 = vadd.f32 %v2704, %v2642
          %v2706 = vadd.f32 %v2705, %v2643
          %v2707 = vadd.f32 %v2706, %v2644
          %v2708 = vadd.f32 %v2707, %v2645
          %v2709 = vadd.f32 %v2708, %v2646
          %v2710 = vadd.f32 %v2709, %v2647
          %v2711 = vadd.f32 %v2710, %v2648
          %v2712 = vadd.f32 %v2711, %v2649
          %v2713 = vadd.f32 %v2712, %v2650
          %v2714 = vadd.f32 %v2713, %v2651
          %v2715 = vadd.f32 %v2714, %v2652
          %v2716 = vadd.f32 %v2715, %v2653
          %v2717 = vadd.f32 %v2716, %v2654
          %v2718 = vadd.f32 %v2717, %v2655
          %v2719 = vadd.f32 %v2718, %v2656
          %v2720 = vadd.f32 %v2719, %v2657
          %v2721 = vadd.f32 %v2720, %v2658
          %v2722 = vadd.f32 %v2721, %v2659
          %v2723 = vadd.f32 %v2722, %v2660
          %v2724 = vadd.f32 %v2723, %v2661
          %v2725 = vadd.f32 %v2724, %v2662
          %v2726 = vadd.f32 %v2725, %v2663
          %v2727 = vadd.f32 %v2726, %v2664
          %v2728 = vadd.f32 %v2727, %v2665
          %v2729 = vadd.f32 %v2728, %v2666
          %v2730 = vadd.f32 %v2729, %v2667
          %v2731 = vadd.f32 %v2730, %v2668
          %v2732 = vadd.f32 %v2731, %v2669
          %v2733 = vadd.f32 %v2732, %v2670
          %v2734 = vadd.f32 %v2733, %v2671
          %v2735 = vadd.f32 %v2734, %v2672
          %v2736 = vadd.f32 %v2735, %v2673
          %v2737 = vadd.f32 %v2736, %v2674
          %v2738 = vadd.f32 %v2737, %v2675
          %v2739 = vadd.f32 %v2738, %v2676
          %v2740 = vadd.f32 %v2739, %v2677
          %v2741 = vadd.f32 %v2740, %v2678
          %v2742 = vadd.f32 %v2741, %v2679
          %v2743 = vadd.f32 %v2742, %v2680
          %v2744 = vadd.f32 %v2743, %v2681
          %v2745 = vadd.f32 %v2744, %v2682
          %2746 = vadd.xlane.f32.xlu0 %v2745
          %v2747 = vpop.xlane.xlu0 %2746
          %v2748 = vrot.slane %v2747, 4
          %v2749 = vadd.f32 %v2747, %v2748
          %v2750 = vrot.slane %v2749, 2
          %v2751 = vadd.f32 %v2749, %v2750
          %v2752 = vrot.slane %v2751, 1
          %v2753 = vadd.f32 %v2751, %v2752
          %s2754 = vtos %v2753
          %v2755 = vstv %s2754
          %v2756 = vadd.f32 %v2618, %v2755
          %vm2757 = vcmask 0
          %2758 = vst.msk [vmem:[#allocation3] sm:$0x1] %vm2757, %v2756
        $region144: #{ssley_forward.17} parent=119 // pred_fallthru
          _
        // Predicated region
        $region145: #{ssley_forward.17} parent=119 // pred_check
          _
        $region146: #{ssley_forward.17} parent=119 // pred_check_branch
          %2760 = sbr.rel (%p586) target = $region148
        $region147: #{ssley_forward.17} parent=119 // pred_region
          %v2761 = vld [vmem:[#allocation3] sm:$0x1]
          %v2762 = vld [vmem:[%s561] sm:$0xff]
          %v2763 = vld [vmem:[%s561 + $0x8] sm:$0xff]
          %v2764 = vld [vmem:[%s561 + $0x10] sm:$0xff]
          %v2765 = vld [vmem:[%s561 + $0x18] sm:$0xff]
          %v2766 = vld [vmem:[%s561 + $0x20] sm:$0xff]
          %v2767 = vld [vmem:[%s561 + $0x28] sm:$0xff]
          %v2768 = vld [vmem:[%s561 + $0x30] sm:$0xff]
          %v2769 = vld [vmem:[%s561 + $0x38] sm:$0xff]
          %v2770 = vld [vmem:[%s561 + $0x40] sm:$0xff]
          %v2771 = vld [vmem:[%s561 + $0x48] sm:$0xff]
          %v2772 = vld [vmem:[%s561 + $0x50] sm:$0xff]
          %v2773 = vld [vmem:[%s561 + $0x58] sm:$0xff]
          %v2774 = vld [vmem:[%s561 + $0x60] sm:$0xff]
          %v2775 = vld [vmem:[%s561 + $0x68] sm:$0xff]
          %v2776 = vld [vmem:[%s561 + $0x70] sm:$0xff]
          %v2777 = vld [vmem:[%s561 + $0x78] sm:$0xff]
          %v2778 = vld [vmem:[%s561 + $0x80] sm:$0xff]
          %v2779 = vld [vmem:[%s561 + $0x88] sm:$0xff]
          %v2780 = vld [vmem:[%s561 + $0x90] sm:$0xff]
          %v2781 = vld [vmem:[%s561 + $0x98] sm:$0xff]
          %v2782 = vld [vmem:[%s561 + $0xa0] sm:$0xff]
          %v2783 = vld [vmem:[%s561 + $0xa8] sm:$0xff]
          %v2784 = vld [vmem:[%s561 + $0xb0] sm:$0xff]
          %v2785 = vld [vmem:[%s561 + $0xb8] sm:$0xff]
          %v2786 = vld [vmem:[%s561 + $0xc0] sm:$0xff]
          %v2787 = vld [vmem:[%s561 + $0xc8] sm:$0xff]
          %v2788 = vld [vmem:[%s561 + $0xd0] sm:$0xff]
          %v2789 = vld [vmem:[%s561 + $0xd8] sm:$0xff]
          %v2790 = vld [vmem:[%s561 + $0xe0] sm:$0xff]
          %v2791 = vld [vmem:[%s561 + $0xe8] sm:$0xff]
          %v2792 = vld [vmem:[%s561 + $0xf0] sm:$0xff]
          %v2793 = vld [vmem:[%s561 + $0xf8] sm:$0xff]
          %v2794 = vld [vmem:[%s567] sm:$0xff]
          %v2795 = vld [vmem:[%s567 + $0x8] sm:$0xff]
          %v2796 = vld [vmem:[%s567 + $0x10] sm:$0xff]
          %v2797 = vld [vmem:[%s567 + $0x18] sm:$0xff]
          %v2798 = vld [vmem:[%s567 + $0x20] sm:$0xff]
          %v2799 = vld [vmem:[%s567 + $0x28] sm:$0xff]
          %v2800 = vld [vmem:[%s567 + $0x30] sm:$0xff]
          %v2801 = vld [vmem:[%s567 + $0x38] sm:$0xff]
          %v2802 = vld [vmem:[%s567 + $0x40] sm:$0xff]
          %v2803 = vld [vmem:[%s567 + $0x48] sm:$0xff]
          %v2804 = vld [vmem:[%s567 + $0x50] sm:$0xff]
          %v2805 = vld [vmem:[%s567 + $0x58] sm:$0xff]
          %v2806 = vld [vmem:[%s567 + $0x60] sm:$0xff]
          %v2807 = vld [vmem:[%s567 + $0x68] sm:$0xff]
          %v2808 = vld [vmem:[%s567 + $0x70] sm:$0xff]
          %v2809 = vld [vmem:[%s567 + $0x78] sm:$0xff]
          %v2810 = vld [vmem:[%s567 + $0x80] sm:$0xff]
          %v2811 = vld [vmem:[%s567 + $0x88] sm:$0xff]
          %v2812 = vld [vmem:[%s567 + $0x90] sm:$0xff]
          %v2813 = vld [vmem:[%s567 + $0x98] sm:$0xff]
          %v2814 = vld [vmem:[%s567 + $0xa0] sm:$0xff]
          %v2815 = vld [vmem:[%s567 + $0xa8] sm:$0xff]
          %v2816 = vld [vmem:[%s567 + $0xb0] sm:$0xff]
          %v2817 = vld [vmem:[%s567 + $0xb8] sm:$0xff]
          %v2818 = vld [vmem:[%s567 + $0xc0] sm:$0xff]
          %v2819 = vld [vmem:[%s567 + $0xc8] sm:$0xff]
          %v2820 = vld [vmem:[%s567 + $0xd0] sm:$0xff]
          %v2821 = vld [vmem:[%s567 + $0xd8] sm:$0xff]
          %v2822 = vld [vmem:[%s567 + $0xe0] sm:$0xff]
          %v2823 = vld [vmem:[%s567 + $0xe8] sm:$0xff]
          %v2824 = vld [vmem:[%s567 + $0xf0] sm:$0xff]
          %v2825 = vld [vmem:[%s567 + $0xf8] sm:$0xff]
          %v2826 = vmul.f32 %v2762, %v2794
          %v2827 = vmul.f32 %v2763, %v2795
          %v2828 = vmul.f32 %v2764, %v2796
          %v2829 = vmul.f32 %v2765, %v2797
          %v2830 = vmul.f32 %v2766, %v2798
          %v2831 = vmul.f32 %v2767, %v2799
          %v2832 = vmul.f32 %v2768, %v2800
          %v2833 = vmul.f32 %v2769, %v2801
          %v2834 = vmul.f32 %v2770, %v2802
          %v2835 = vmul.f32 %v2771, %v2803
          %v2836 = vmul.f32 %v2772, %v2804
          %v2837 = vmul.f32 %v2773, %v2805
          %v2838 = vmul.f32 %v2774, %v2806
          %v2839 = vmul.f32 %v2775, %v2807
          %v2840 = vmul.f32 %v2776, %v2808
          %v2841 = vmul.f32 %v2777, %v2809
          %v2842 = vmul.f32 %v2778, %v2810
          %v2843 = vmul.f32 %v2779, %v2811
          %v2844 = vmul.f32 %v2780, %v2812
          %v2845 = vmul.f32 %v2781, %v2813
          %v2846 = vmul.f32 %v2782, %v2814
          %v2847 = vmul.f32 %v2783, %v2815
          %v2848 = vmul.f32 %v2784, %v2816
          %v2849 = vmul.f32 %v2785, %v2817
          %v2850 = vmul.f32 %v2786, %v2818
          %v2851 = vmul.f32 %v2787, %v2819
          %v2852 = vmul.f32 %v2788, %v2820
          %v2853 = vmul.f32 %v2789, %v2821
          %v2854 = vmul.f32 %v2790, %v2822
          %v2855 = vmul.f32 %v2791, %v2823
          %v2856 = vmul.f32 %v2792, %v2824
          %v2857 = vmul.f32 %v2793, %v2825
          %vm2858 = vcmask 7168
          %v2859 = vsel %vm2858, %v2826, 0.0
          %v2860 = vsel %vm2858, %v2827, 0.0
          %v2861 = vadd.f32 %v2859, %v2860
          %v2862 = vsel %vm2858, %v2828, 0.0
          %v2863 = vadd.f32 %v2861, %v2862
          %v2864 = vsel %vm2858, %v2829, 0.0
          %v2865 = vadd.f32 %v2863, %v2864
          %v2866 = vsel %vm2858, %v2830, 0.0
          %v2867 = vadd.f32 %v2865, %v2866
          %v2868 = vsel %vm2858, %v2831, 0.0
          %v2869 = vadd.f32 %v2867, %v2868
          %v2870 = vsel %vm2858, %v2832, 0.0
          %v2871 = vadd.f32 %v2869, %v2870
          %v2872 = vsel %vm2858, %v2833, 0.0
          %v2873 = vadd.f32 %v2871, %v2872
          %v2874 = vsel %vm2858, %v2834, 0.0
          %v2875 = vadd.f32 %v2873, %v2874
          %v2876 = vsel %vm2858, %v2835, 0.0
          %v2877 = vadd.f32 %v2875, %v2876
          %v2878 = vsel %vm2858, %v2836, 0.0
          %v2879 = vadd.f32 %v2877, %v2878
          %v2880 = vsel %vm2858, %v2837, 0.0
          %v2881 = vadd.f32 %v2879, %v2880
          %v2882 = vsel %vm2858, %v2838, 0.0
          %v2883 = vadd.f32 %v2881, %v2882
          %v2884 = vsel %vm2858, %v2839, 0.0
          %v2885 = vadd.f32 %v2883, %v2884
          %v2886 = vsel %vm2858, %v2840, 0.0
          %v2887 = vadd.f32 %v2885, %v2886
          %v2888 = vsel %vm2858, %v2841, 0.0
          %v2889 = vadd.f32 %v2887, %v2888
          %v2890 = vsel %vm2858, %v2842, 0.0
          %v2891 = vadd.f32 %v2889, %v2890
          %v2892 = vsel %vm2858, %v2843, 0.0
          %v2893 = vadd.f32 %v2891, %v2892
          %v2894 = vsel %vm2858, %v2844, 0.0
          %v2895 = vadd.f32 %v2893, %v2894
          %v2896 = vsel %vm2858, %v2845, 0.0
          %v2897 = vadd.f32 %v2895, %v2896
          %v2898 = vsel %vm2858, %v2846, 0.0
          %v2899 = vadd.f32 %v2897, %v2898
          %v2900 = vsel %vm2858, %v2847, 0.0
          %v2901 = vadd.f32 %v2899, %v2900
          %v2902 = vsel %vm2858, %v2848, 0.0
          %v2903 = vadd.f32 %v2901, %v2902
          %v2904 = vsel %vm2858, %v2849, 0.0
          %v2905 = vadd.f32 %v2903, %v2904
          %v2906 = vsel %vm2858, %v2850, 0.0
          %v2907 = vadd.f32 %v2905, %v2906
          %v2908 = vsel %vm2858, %v2851, 0.0
          %v2909 = vadd.f32 %v2907, %v2908
          %v2910 = vsel %vm2858, %v2852, 0.0
          %v2911 = vadd.f32 %v2909, %v2910
          %v2912 = vsel %vm2858, %v2853, 0.0
          %v2913 = vadd.f32 %v2911, %v2912
          %v2914 = vsel %vm2858, %v2854, 0.0
          %v2915 = vadd.f32 %v2913, %v2914
          %v2916 = vsel %vm2858, %v2855, 0.0
          %v2917 = vadd.f32 %v2915, %v2916
          %v2918 = vsel %vm2858, %v2856, 0.0
          %v2919 = vadd.f32 %v2917, %v2918
          %v2920 = vsel %vm2858, %v2857, 0.0
          %v2921 = vadd.f32 %v2919, %v2920
          %2922 = vadd.xlane.f32.xlu0 %v2921
          %v2923 = vpop.xlane.xlu0 %2922
          %v2924 = vrot.slane %v2923, 4
          %v2925 = vadd.f32 %v2923, %v2924
          %v2926 = vrot.slane %v2925, 2
          %v2927 = vadd.f32 %v2925, %v2926
          %v2928 = vrot.slane %v2927, 1
          %v2929 = vadd.f32 %v2927, %v2928
          %s2930 = vtos %v2929
          %v2931 = vstv %s2930
          %v2932 = vmul.f32 %v2931, 4.266667
          %v2933 = vadd.f32 %v2761, %v2932
          %vm2934 = vcmask 0
          %2935 = vst.msk [vmem:[#allocation3] sm:$0x1] %vm2934, %v2933
        $region148: #{ssley_forward.17} parent=119 // pred_fallthru
          _
        %p2936 = scmp.eq.s32.totalorder %s25, 1
        %p2937 = pnand %p2936, %p585
        %p2938 = pneg %p2937
        // Predicated region
        $region149: #{ssley_forward.17} parent=119 // pred_check
          _
        $region150: #{ssley_forward.17} parent=119 // pred_check_branch
          %2940 = sbr.rel (%p2937) target = $region152
        $region151: #{ssley_forward.17} parent=119 // pred_region
          %v2941 = vld [vmem:[#allocation3] sm:$0x1]
          %v2943 = vlaneseq
          %v2944 = vshrl.u32 %v2943, 7
          %v2945 = vsub.s32 0, %v2944
          %v2946 = vrot.slane %v2941, %v2945
          %2947 = vset.pattern.permute.xlu0 0
          %2948 = vperm.xlu0 %2947, %v2946
          %v2949 = vpop.permute.xlu0 %2948
          %2951 = vst [vmem:[%s582] sm:$0xff] %v2949
        $region152: #{ssley_forward.17} parent=119 // pred_fallthru
          _
        %p2952 = scmp.lt.s32.totalorder %s24, 1
        %s2953 = scalar_select %p2952, %s24, 1
        %s2954 = smul.addr %s2953, 8
        %s2955 = scalar_lea.vmem %s8, %s2954
        // Predicated region
        $region153: #{ssley_forward.17} parent=119 // pred_check
          %p2956 = pneg %p272
        $region154: #{ssley_forward.17} parent=119 // pred_check_branch
          %2958 = sbr.rel (%p2956) target = $region156
        $region155: #{ssley_forward.17} parent=119 // pred_region
          _
        $region156: #{ssley_forward.17} parent=119 // pred_fallthru
          _
      $region120: #{ssley_forward.17} parent=5 // pred_fallthru
        _
      %p2959 = scmp.le.s32.totalorder 2, %s14
      // Predicated region
      $region157: #{ssley_forward.17} parent=5 // pred_check
        %p2960 = pneg %p2959
      $region158: #{ssley_forward.17} parent=5 // pred_check_branch
        %2962 = sbr.rel (%p2960) target = $region160
      $region159: #{ssley_forward.17} parent=5 // pred_region
        %s2963 = ssub.s32 %s14, 2
        // Predicated region
        $region161: #{ssley_forward.17} parent=159 // pred_check
          %p2964 = pneg %p278
        $region162: #{ssley_forward.17} parent=159 // pred_check_branch
          %2966 = sbr.rel (%p2964) target = $region164
        $region163: #{ssley_forward.17} parent=159 // pred_region
          %p2967 = scmp.lt.s32.totalorder %s27, 1
          %s2968 = scalar_select %p2967, %s27, 1
          %s2969 = smul.addr %s2968, 8
          %s2970 = scalar_lea.vmem %s8, %s2969
        $region164: #{ssley_forward.17} parent=159 // pred_fallthru
          _
      $region160: #{ssley_forward.17} parent=5 // pred_fallthru
        _
    $region6: #{ssley_forward.17} parent=1 // loop_footer
      %s18 = sadd.s32 1, %s14
    $region7: #{ssley_forward.17} parent=1 // loop_footer_branch
      %13 = sbr.rel target = $region3
    $region8: #{ssley_forward.17} parent=1 // loop_exit
      _

</llo_original>
